<compile_context>
chip_gen: v6e
topology: v6e:2x2x1
jax: 0.10.0
libtpu: 0.0.40
codegen_flags: <defaults>
</compile_context>

<pallas_src>
import math
import jax
import jax.numpy as jnp
from jax import lax
from jax.experimental import pallas as pl
from jax.experimental.pallas import tpu as pltpu


# ----------------------------- elementwise helpers -----------------------------
def _gelu_exact(x):
    # nn.GELU() default = exact erf form (f32 math).
    return 0.5 * x * (1.0 + lax.erf(x * (1.0 / math.sqrt(2.0))))


def _gelu_tanh(x):
    # Optional tanh approximation (EUP path) when exact PyTorch parity is not needed.
    c = math.sqrt(2.0 / math.pi)
    return 0.5 * x * (1.0 + jnp.tanh(c * (x + 0.044715 * x * x * x)))


def _layer_norm(x, gamma, beta, eps=1e-5):
    # PyTorch LayerNorm over last dim, biased variance (f32 math).
    mu = jnp.mean(x, axis=-1, keepdims=True)
    xc = x - mu
    var = jnp.mean(xc * xc, axis=-1, keepdims=True)
    inv = lax.rsqrt(var + eps)
    return xc * inv * gamma + beta


# --------------------------------- kernel body ---------------------------------
def make_kernel(hidden_size, compute_dtype, use_tanh_gelu=False):
    inv_scale = 1.0 / math.sqrt(float(hidden_size))
    gelu = _gelu_tanh if use_tanh_gelu else _gelu_exact

    def cast(a):
        return a.astype(compute_dtype)

    def mm(a_c, w_ref):
        # MXU matmul: operand already in compute dtype, accumulate in f32.
        return jnp.dot(a_c, w_ref[...], preferred_element_type=jnp.float32)

    def kernel(hs_ref, bcl_ref,
               wq_ref, bq_ref, wk_ref, bk_ref, wv_ref, bv_ref,
               ln1g_ref, ln1b_ref,
               wpr_ref, bpr_ref,
               wca_ref, wcb_ref, bcomb_ref,
               ln2g_ref, ln2b_ref,
               wfc_ref, bfc_ref,
               ln3g_ref, ln3b_ref,
               wcls_ref, bcls_ref,
               out_ref):
        x3 = hs_ref[...]                                # (Bt, S, H), f32
        bt, s, h = x3.shape
        xf = x3.reshape(bt * s, h)                      # flattened token rows
        xf_c = cast(xf)                                 # single cast, reused x3 for Q/K/V

        # ---- AttentionModule: token-wise Q/K/V on flattened rows ----
        q = (mm(xf_c, wq_ref) + bq_ref[...]) * inv_scale   # fold 1/sqrt(H) into q
        k = mm(xf_c, wk_ref) + bk_ref[...]
        v = mm(xf_c, wv_ref) + bv_ref[...]
        q3 = cast(q.reshape(bt, s, h))
        k3 = cast(k.reshape(bt, s, h))
        v3 = cast(v.reshape(bt, s, h))

        # scores: contract last (H) dim of both operands -> no explicit k.T
        scores = lax.dot_general(
            q3, k3,
            dimension_numbers=(((2,), (2,)), ((0,), (0,))),
            preferred_element_type=jnp.float32)         # (Bt, S, S)
        scores = scores - jnp.max(scores, axis=-1, keepdims=True)
        e = jnp.exp(scores)
        attn = e / jnp.sum(e, axis=-1, keepdims=True)   # exact softmax (rows sum to 1)

        ctx = lax.dot_general(
            cast(attn), v3,
            dimension_numbers=(((2,), (1,)), ((0,), (0,))),
            preferred_element_type=jnp.float32)         # (Bt, S, H)

        # residual + layer_norm1 (f32 inputs all the way)
        attended = (x3 + ctx).reshape(bt * s, h)
        attended = _layer_norm(attended, ln1g_ref[...], ln1b_ref[...])

        # ---- base char projection ----
        bcl_c = cast(bcl_ref[...]).reshape(bt * s, -1)  # single cast
        base_feat = mm(bcl_c, wpr_ref) + bpr_ref[...]   # (Bt*S, H/2)

        # ---- combined layer: two matmuls summed instead of concat ----
        y = mm(cast(attended), wca_ref) + mm(cast(base_feat), wcb_ref) + bcomb_ref[...]
        y = gelu(y)
        # dropout1: identity (inference)
        y = _layer_norm(y, ln2g_ref[...], ln2b_ref[...])

        # ---- fc ----
        z = mm(cast(y), wfc_ref) + bfc_ref[...]         # (Bt*S, H/2)
        z = gelu(z)
        # dropout2: identity (inference)
        z = _layer_norm(z, ln3g_ref[...], ln3b_ref[...])

        # ---- classifier: true-V output (no padded writeback, no wrapper slice) ----
        logits = mm(cast(z), wcls_ref) + bcls_ref[...]  # (Bt*S, V)
        out_ref[...] = logits.reshape(bt, s, -1).astype(out_ref.dtype)

    return kernel


# ------------------------------ wrapper utilities ------------------------------
def prepare_params(params, matmul_dtype=jnp.bfloat16):
    """Preprocess weights once (casts, combined-layer split). Reuse across calls."""
    f32 = jnp.float32
    H = params["w_q"].shape[0]
    mmcast = lambda w: jnp.asarray(w, f32).astype(matmul_dtype)

    # Pre-split the combined-layer weight -> two matmuls, no in-kernel concat.
    w_comb_a = mmcast(params["w_comb"][:H])
    w_comb_b = mmcast(params["w_comb"][H:])

    weights = [
        mmcast(params["w_q"]), jnp.asarray(params["b_q"], f32),
        mmcast(params["w_k"]), jnp.asarray(params["b_k"], f32),
        mmcast(params["w_v"]), jnp.asarray(params["b_v"], f32),
        jnp.asarray(params["ln1_g"], f32), jnp.asarray(params["ln1_b"], f32),
        mmcast(params["w_proj"]), jnp.asarray(params["b_proj"], f32),
        w_comb_a, w_comb_b, jnp.asarray(params["b_comb"], f32),
        jnp.asarray(params["ln2_g"], f32), jnp.asarray(params["ln2_b"], f32),
        mmcast(params["w_fc"]), jnp.asarray(params["b_fc"], f32),
        jnp.asarray(params["ln3_g"], f32), jnp.asarray(params["ln3_b"], f32),
        mmcast(params["w_cls"]), jnp.asarray(params["b_cls"], f32),
    ]
    return {"weights": weights, "dtype": matmul_dtype,
            "hidden_size": H, "vocab": int(params["w_cls"].shape[1])}


def _weight_specs(weight_args, single_buffer):
    specs = []
    for w in weight_args:
        if single_buffer:
            # Constant index_map across the grid -> double-buffering only wastes VMEM.
            specs.append(pl.BlockSpec(w.shape, lambda b: (0, 0),
                                      pipeline_mode=pl.Buffered(1)))
        else:
            specs.append(pl.BlockSpec(w.shape, lambda b: (0, 0)))
    return specs


def _vmem_budget_bytes():
    """Per-chip VMEM budget for the scoped limit (conservative on v7x's 64 MiB)."""
    try:
        kind = jax.devices()[0].device_kind.lower()
    except Exception:
        kind = ""
    if "v7" in kind:
        return 48 * 1024 * 1024
    if "v5" in kind or "v6" in kind:
        return 96 * 1024 * 1024
    return 48 * 1024 * 1024


def _per_step_vmem_bytes(Bt, S, H, C, V, weight_bytes):
    """Conservative per-grid-step VMEM estimate (lane-padded, f32 temporaries)."""
    lane = 128
    rows = Bt * S
    h_p, c_p, v_p, s_p = max(H, lane), max(C, lane), max(V, lane), max(S, lane)
    in_slab = 2 * rows * (h_p + c_p) * 4           # double-buffered f32 inputs
    out_slab = 2 * rows * v_p * 4                  # double-buffered f32 output
    scores = 3 * Bt * S * s_p * 4                  # scores / e / attn
    inter = 12 * rows * h_p * 4                    # q,k,v,ctx,attended,y,z + casts
    return in_slab + out_slab + scores + inter + 2 * weight_bytes


def _choose_batch_tile(B, S, H, C, V, weight_bytes, vmem_budget, target_rows=1024):
    divisors = [d for d in range(1, B + 1) if B % d == 0]
    fits = lambda d: _per_step_vmem_bytes(d, S, H, C, V, weight_bytes) <= 0.8 * vmem_budget
    cands = [d for d in divisors if d * S <= target_rows and fits(d)]
    bt = max(cands) if cands else 1
    # Keep >= 2 grid steps whenever B >= 2 so both v7x TensorCores get work.
    if B >= 2 and B // bt < 2:
        halves = [d for d in divisors if d <= B // 2]
        if halves:
            bt = max(halves)
    return bt


# ----------------------------------- wrapper -----------------------------------
def diacritic_aware_head(hidden_states, base_char_logits, params=None, *,
                         prepared=None, matmul_dtype=jnp.bfloat16,
                         batch_tile=None, use_tanh_gelu=False):
    if prepared is None:
        prepared = prepare_params(params, matmul_dtype)
    weight_args = prepared["weights"]
    compute_dtype = prepared["dtype"]

    B, S, H = hidden_states.shape
    C = base_char_logits.shape[-1]
    H2 = H // 2
    V = prepared["vocab"]

    # Activations stay f32 in HBM so residual + all LayerNorms see full precision;
    # matmul operands are cast (once each) inside the kernel.
    hs_in = jnp.asarray(hidden_states, jnp.float32)
    bcl_in = jnp.asarray(base_char_logits, jnp.float32)

    weight_bytes = sum(int(w.nbytes) for w in weight_args)
    vmem_budget = _vmem_budget_bytes()
    Bt = batch_tile if batch_tile is not None else _choose_batch_tile(
        B, S, H, C, V, weight_bytes, vmem_budget)
    assert B % Bt == 0, "batch must be divisible by the batch tile"
    grid = (B // Bt,)

    kernel = make_kernel(H, compute_dtype, use_tanh_gelu)

    flops = 2 * B * S * (3 * H * H + 2 * S * H + C * H2 + H * H + H2 * H
                         + H * H2 + H2 * V)
    transcendentals = B * S * (S + H + H2)         # softmax exp + two GELU passes
    bytes_accessed = (hs_in.nbytes + bcl_in.nbytes + weight_bytes + B * S * V * 4)
    cost = pl.CostEstimate(flops=int(flops),
                           transcendentals=int(transcendentals),
                           bytes_accessed=int(bytes_accessed))

    def run(single_buffer_weights):
        weight_specs = _weight_specs(weight_args, single_buffer_weights)
        return pl.pallas_call(
            kernel,
            out_shape=jax.ShapeDtypeStruct((B, S, V), jnp.float32),
            grid_spec=pltpu.PrefetchScalarGridSpec(
                num_scalar_prefetch=0,
                grid=grid,
                in_specs=[
                    pl.BlockSpec((Bt, S, H), lambda b: (b, 0, 0)),
                    pl.BlockSpec((Bt, S, C), lambda b: (b, 0, 0)),
                    *weight_specs,
                ],
                out_specs=pl.BlockSpec((Bt, S, V), lambda b: (b, 0, 0)),
            ),
            compiler_params=pltpu.CompilerParams(
                dimension_semantics=("parallel",),
                vmem_limit_bytes=int(vmem_budget)),
            cost_estimate=cost,
        )(hs_in, bcl_in, *weight_args)

    try:
        return run(True)
    except Exception:
        # pipeline_mode=pl.Buffered(1) not supported on this jax version:
        # fall back to default (double-buffered) weight specs.
        return run(False)


# ----------------------- pure-JAX reference (for sanity) -----------------------
def reference(hidden_states, base_char_logits, params):
    H = hidden_states.shape[-1]
    x = hidden_states
    q = x @ params["w_q"] + params["b_q"]
    k = x @ params["w_k"] + params["b_k"]
    v = x @ params["w_v"] + params["b_v"]
    scores = jnp.einsum("bqh,bkh->bqk", q, k) / math.sqrt(float(H))
    attn = jax.nn.softmax(scores, axis=-1)
    ctx = jnp.einsum("bqk,bkh->bqh", attn, v)
    attended = x + ctx

    def ln(t, g, b):
        mu = t.mean(-1, keepdims=True)
        var = ((t - mu) ** 2).mean(-1, keepdims=True)
        return (t - mu) / jnp.sqrt(var + 1e-5) * g + b

    attended = ln(attended, params["ln1_g"], params["ln1_b"])
    base = base_char_logits @ params["w_proj"] + params["b_proj"]
    comb = jnp.concatenate([attended, base], axis=-1)
    y = comb @ params["w_comb"] + params["b_comb"]
    y = jax.nn.gelu(y, approximate=False)
    y = ln(y, params["ln2_g"], params["ln2_b"])
    z = y @ params["w_fc"] + params["b_fc"]
    z = jax.nn.gelu(z, approximate=False)
    z = ln(z, params["ln3_g"], params["ln3_b"])
    return z @ params["w_cls"] + params["b_cls"]


if __name__ == "__main__":
    # Small shapes consistent with the module.
    B, S, H = 2, 8, 32            # batch, seq_len, hidden_size
    C = 16                        # base_char_size
    V = 16                        # diacritic_vocab_size
    H2 = H // 2

    key = jax.random.PRNGKey(0)
    keys = jax.random.split(key, 32)
    ki = iter(keys)

    def w(shape, scale=0.05):
        return jax.random.normal(next(ki), shape, jnp.float32) * scale

    params = {
        # Linear weights stored already transposed: y = x @ W + b
        "w_q": w((H, H)), "b_q": w((1, H)),
        "w_k": w((H, H)), "b_k": w((1, H)),
        "w_v": w((H, H)), "b_v": w((1, H)),
        "ln1_g": jnp.ones((1, H), jnp.float32), "ln1_b": jnp.zeros((1, H), jnp.float32),
        "w_proj": w((C, H2)), "b_proj": w((1, H2)),
        "w_comb": w((H + H2, H)), "b_comb": w((1, H)),
        "ln2_g": jnp.ones((1, H), jnp.float32), "ln2_b": jnp.zeros((1, H), jnp.float32),
        "w_fc": w((H, H2)), "b_fc": w((1, H2)),
        "ln3_g": jnp.ones((1, H2), jnp.float32), "ln3_b": jnp.zeros((1, H2), jnp.float32),
        "w_cls": w((H2, V)), "b_cls": w((1, V)),
    }

    hidden_states = jax.random.normal(next(ki), (B, S, H), jnp.float32)
    base_char_logits = jax.random.normal(next(ki), (B, S, C), jnp.float32)

    ref = reference(hidden_states, base_char_logits, params)

    # f32 matmuls: tight parity with the PyTorch-equivalent reference.
    prep_f32 = prepare_params(params, matmul_dtype=jnp.float32)
    out_f32 = diacritic_aware_head(hidden_states, base_char_logits, prepared=prep_f32)
    out_f32 = jax.block_until_ready(out_f32)
    assert out_f32.shape == (B, S, V)
    assert jnp.allclose(out_f32, ref, atol=2e-3, rtol=2e-3), "f32 mismatch vs reference"

    # Default bf16 matmul inputs (f32 accumulate, f32 LN/GELU/softmax): looser tolerance.
    prep_bf16 = prepare_params(params)   # preprocessing cached once, reused per call
    out_bf16 = diacritic_aware_head(hidden_states, base_char_logits, prepared=prep_bf16)
    out_bf16 = jax.block_until_ready(out_bf16)
    assert out_bf16.shape == (B, S, V)
    assert jnp.allclose(out_bf16, ref, atol=5e-2, rtol=5e-2), "bf16 mismatch vs reference"

    print("KERNEL_OK")
</pallas_src>

<mosaic_0001>
module attributes {stable_mosaic.version = 11 : i64} {
  func.func @kernel(%arg0: i32, %arg1: memref<1x8x32xf32, #tpu.memory_space<vmem>>, %arg2: memref<1x8x16xf32, #tpu.memory_space<vmem>>, %arg3: memref<32x32xf32, #tpu.memory_space<vmem>>, %arg4: memref<1x32xf32, #tpu.memory_space<vmem>>, %arg5: memref<32x32xf32, #tpu.memory_space<vmem>>, %arg6: memref<1x32xf32, #tpu.memory_space<vmem>>, %arg7: memref<32x32xf32, #tpu.memory_space<vmem>>, %arg8: memref<1x32xf32, #tpu.memory_space<vmem>>, %arg9: memref<1x32xf32, #tpu.memory_space<vmem>>, %arg10: memref<1x32xf32, #tpu.memory_space<vmem>>, %arg11: memref<16x16xf32, #tpu.memory_space<vmem>>, %arg12: memref<1x16xf32, #tpu.memory_space<vmem>>, %arg13: memref<32x32xf32, #tpu.memory_space<vmem>>, %arg14: memref<16x32xf32, #tpu.memory_space<vmem>>, %arg15: memref<1x32xf32, #tpu.memory_space<vmem>>, %arg16: memref<1x32xf32, #tpu.memory_space<vmem>>, %arg17: memref<1x32xf32, #tpu.memory_space<vmem>>, %arg18: memref<32x16xf32, #tpu.memory_space<vmem>>, %arg19: memref<1x16xf32, #tpu.memory_space<vmem>>, %arg20: memref<1x16xf32, #tpu.memory_space<vmem>>, %arg21: memref<1x16xf32, #tpu.memory_space<vmem>>, %arg22: memref<16x16xf32, #tpu.memory_space<vmem>>, %arg23: memref<1x16xf32, #tpu.memory_space<vmem>>, %arg24: memref<1x8x16xf32, #tpu.memory_space<vmem>>) attributes {dimension_semantics = [#tpu.dimension_semantics<parallel>], iteration_bounds = array<i64: 2>, scalar_prefetch = 0 : i64, scratch_operands = 0 : i64, tpu.core_type = #tpu.core_type<tc>, window_params = [{transform_indices = @transform_0, window_bounds = array<i64: 1, 8, 32>}, {transform_indices = @transform_1, window_bounds = array<i64: 1, 8, 16>}, {pipeline_mode = #tpu.pipeline_mode<synchronous>, transform_indices = @transform_2, window_bounds = array<i64: 32, 32>}, {pipeline_mode = #tpu.pipeline_mode<synchronous>, transform_indices = @transform_3, window_bounds = array<i64: 1, 32>}, {pipeline_mode = #tpu.pipeline_mode<synchronous>, transform_indices = @transform_4, window_bounds = array<i64: 32, 32>}, {pipeline_mode = #tpu.pipeline_mode<synchronous>, transform_indices = @transform_5, window_bounds = array<i64: 1, 32>}, {pipeline_mode = #tpu.pipeline_mode<synchronous>, transform_indices = @transform_6, window_bounds = array<i64: 32, 32>}, {pipeline_mode = #tpu.pipeline_mode<synchronous>, transform_indices = @transform_7, window_bounds = array<i64: 1, 32>}, {pipeline_mode = #tpu.pipeline_mode<synchronous>, transform_indices = @transform_8, window_bounds = array<i64: 1, 32>}, {pipeline_mode = #tpu.pipeline_mode<synchronous>, transform_indices = @transform_9, window_bounds = array<i64: 1, 32>}, {pipeline_mode = #tpu.pipeline_mode<synchronous>, transform_indices = @transform_10, window_bounds = array<i64: 16, 16>}, {pipeline_mode = #tpu.pipeline_mode<synchronous>, transform_indices = @transform_11, window_bounds = array<i64: 1, 16>}, {pipeline_mode = #tpu.pipeline_mode<synchronous>, transform_indices = @transform_12, window_bounds = array<i64: 32, 32>}, {pipeline_mode = #tpu.pipeline_mode<synchronous>, transform_indices = @transform_13, window_bounds = array<i64: 16, 32>}, {pipeline_mode = #tpu.pipeline_mode<synchronous>, transform_indices = @transform_14, window_bounds = array<i64: 1, 32>}, {pipeline_mode = #tpu.pipeline_mode<synchronous>, transform_indices = @transform_15, window_bounds = array<i64: 1, 32>}, {pipeline_mode = #tpu.pipeline_mode<synchronous>, transform_indices = @transform_16, window_bounds = array<i64: 1, 32>}, {pipeline_mode = #tpu.pipeline_mode<synchronous>, transform_indices = @transform_17, window_bounds = array<i64: 32, 16>}, {pipeline_mode = #tpu.pipeline_mode<synchronous>, transform_indices = @transform_18, window_bounds = array<i64: 1, 16>}, {pipeline_mode = #tpu.pipeline_mode<synchronous>, transform_indices = @transform_19, window_bounds = array<i64: 1, 16>}, {pipeline_mode = #tpu.pipeline_mode<synchronous>, transform_indices = @transform_20, window_bounds = array<i64: 1, 16>}, {pipeline_mode = #tpu.pipeline_mode<synchronous>, transform_indices = @transform_21, window_bounds = array<i64: 16, 16>}, {pipeline_mode = #tpu.pipeline_mode<synchronous>, transform_indices = @transform_22, window_bounds = array<i64: 1, 16>}, {transform_indices = @transform_23, window_bounds = array<i64: 1, 8, 16>}]} {
    %c0 = arith.constant 0 : index
    %c0_0 = arith.constant 0 : index
    %c0_1 = arith.constant 0 : index
    %0 = vector.load %arg1[%c0, %c0_0, %c0_1] : memref<1x8x32xf32, #tpu.memory_space<vmem>>, vector<1x8x32xf32>
    %1 = vector.shape_cast %0 : vector<1x8x32xf32> to vector<8x32xf32>
    %c0_2 = arith.constant 0 : index
    %c0_3 = arith.constant 0 : index
    %2 = vector.load %arg3[%c0_2, %c0_3] : memref<32x32xf32, #tpu.memory_space<vmem>>, vector<32x32xf32>
    %cst = arith.constant dense<0.000000e+00> : vector<8x32xf32>
    %3 = tpu.matmul %1, %2, %cst {dimension_numbers = #tpu.dot_dimension_numbers<[1], [0], [0], [1], [0, 0, 1, 1], [], []>} : vector<8x32xf32>, vector<32x32xf32>, vector<8x32xf32> -> vector<8x32xf32>
    %c0_4 = arith.constant 0 : index
    %c0_5 = arith.constant 0 : index
    %4 = vector.load %arg4[%c0_4, %c0_5] : memref<1x32xf32, #tpu.memory_space<vmem>>, vector<1x32xf32>
    %5 = vector.broadcast %4 : vector<1x32xf32> to vector<8x32xf32>
    %6 = arith.addf %3, %5 : vector<8x32xf32>
    %cst_6 = arith.constant 0.176776692 : f32
    %7 = vector.broadcast %cst_6 : f32 to vector<8x32xf32>
    %8 = arith.mulf %6, %7 : vector<8x32xf32>
    %c0_7 = arith.constant 0 : index
    %c0_8 = arith.constant 0 : index
    %9 = vector.load %arg5[%c0_7, %c0_8] : memref<32x32xf32, #tpu.memory_space<vmem>>, vector<32x32xf32>
    %cst_9 = arith.constant dense<0.000000e+00> : vector<8x32xf32>
    %10 = tpu.matmul %1, %9, %cst_9 {dimension_numbers = #tpu.dot_dimension_numbers<[1], [0], [0], [1], [0, 0, 1, 1], [], []>} : vector<8x32xf32>, vector<32x32xf32>, vector<8x32xf32> -> vector<8x32xf32>
    %c0_10 = arith.constant 0 : index
    %c0_11 = arith.constant 0 : index
    %11 = vector.load %arg6[%c0_10, %c0_11] : memref<1x32xf32, #tpu.memory_space<vmem>>, vector<1x32xf32>
    %12 = vector.broadcast %11 : vector<1x32xf32> to vector<8x32xf32>
    %13 = arith.addf %10, %12 : vector<8x32xf32>
    %c0_12 = arith.constant 0 : index
    %c0_13 = arith.constant 0 : index
    %14 = vector.load %arg7[%c0_12, %c0_13] : memref<32x32xf32, #tpu.memory_space<vmem>>, vector<32x32xf32>
    %cst_14 = arith.constant dense<0.000000e+00> : vector<8x32xf32>
    %15 = tpu.matmul %1, %14, %cst_14 {dimension_numbers = #tpu.dot_dimension_numbers<[1], [0], [0], [1], [0, 0, 1, 1], [], []>} : vector<8x32xf32>, vector<32x32xf32>, vector<8x32xf32> -> vector<8x32xf32>
    %c0_15 = arith.constant 0 : index
    %c0_16 = arith.constant 0 : index
    %16 = vector.load %arg8[%c0_15, %c0_16] : memref<1x32xf32, #tpu.memory_space<vmem>>, vector<1x32xf32>
    %17 = vector.broadcast %16 : vector<1x32xf32> to vector<8x32xf32>
    %18 = arith.addf %15, %17 : vector<8x32xf32>
    %19 = vector.shape_cast %8 : vector<8x32xf32> to vector<1x8x32xf32>
    %20 = vector.shape_cast %13 : vector<8x32xf32> to vector<1x8x32xf32>
    %21 = vector.shape_cast %18 : vector<8x32xf32> to vector<1x8x32xf32>
    %cst_17 = arith.constant dense<0.000000e+00> : vector<1x8x8xf32>
    %22 = tpu.matmul %19, %20, %cst_17 {dimension_numbers = #tpu.dot_dimension_numbers<[2], [2], [1], [1], [0, 0, 0, 1, 1, 1], [0], [0]>} : vector<1x8x32xf32>, vector<1x8x32xf32>, vector<1x8x8xf32> -> vector<1x8x8xf32>
    %cst_18 = arith.constant dense<0xFF800000> : vector<1x8xf32>
    %23 = vector.multi_reduction <maximumf>, %22, %cst_18 [2] : vector<1x8x8xf32> to vector<1x8xf32>
    %24 = vector.shape_cast %23 : vector<1x8xf32> to vector<1x8x1xf32>
    %25 = vector.broadcast %24 : vector<1x8x1xf32> to vector<1x8x8xf32>
    %26 = arith.subf %22, %25 : vector<1x8x8xf32>
    %27 = math.exp %26 : vector<1x8x8xf32>
    %cst_19 = arith.constant dense<0.000000e+00> : vector<1x8xf32>
    %28 = vector.multi_reduction <add>, %27, %cst_19 [2] : vector<1x8x8xf32> to vector<1x8xf32>
    %29 = vector.shape_cast %28 : vector<1x8xf32> to vector<1x8x1xf32>
    %30 = vector.broadcast %29 : vector<1x8x1xf32> to vector<1x8x8xf32>
    %31 = arith.divf %27, %30 : vector<1x8x8xf32>
    %cst_20 = arith.constant dense<0.000000e+00> : vector<1x8x32xf32>
    %32 = tpu.matmul %31, %21, %cst_20 {dimension_numbers = #tpu.dot_dimension_numbers<[2], [1], [1], [2], [0, 0, 0, 1, 1, 2], [0], [0]>} : vector<1x8x8xf32>, vector<1x8x32xf32>, vector<1x8x32xf32> -> vector<1x8x32xf32>
    %33 = arith.addf %0, %32 : vector<1x8x32xf32>
    %34 = vector.shape_cast %33 : vector<1x8x32xf32> to vector<8x32xf32>
    %c0_21 = arith.constant 0 : index
    %c0_22 = arith.constant 0 : index
    %35 = vector.load %arg9[%c0_21, %c0_22] : memref<1x32xf32, #tpu.memory_space<vmem>>, vector<1x32xf32>
    %c0_23 = arith.constant 0 : index
    %c0_24 = arith.constant 0 : index
    %36 = vector.load %arg10[%c0_23, %c0_24] : memref<1x32xf32, #tpu.memory_space<vmem>>, vector<1x32xf32>
    %cst_25 = arith.constant dense<0.000000e+00> : vector<8xf32>
    %37 = vector.multi_reduction <add>, %34, %cst_25 [1] : vector<8x32xf32> to vector<8xf32>
    %38 = vector.shape_cast %37 : vector<8xf32> to vector<8x1xf32>
    %cst_26 = arith.constant 3.200000e+01 : f32
    %39 = vector.broadcast %cst_26 : f32 to vector<8x1xf32>
    %40 = arith.divf %38, %39 : vector<8x1xf32>
    %41 = vector.broadcast %40 : vector<8x1xf32> to vector<8x32xf32>
    %42 = arith.subf %34, %41 : vector<8x32xf32>
    %43 = arith.mulf %42, %42 : vector<8x32xf32>
    %cst_27 = arith.constant dense<0.000000e+00> : vector<8xf32>
    %44 = vector.multi_reduction <add>, %43, %cst_27 [1] : vector<8x32xf32> to vector<8xf32>
    %45 = vector.shape_cast %44 : vector<8xf32> to vector<8x1xf32>
    %cst_28 = arith.constant 3.200000e+01 : f32
    %46 = vector.broadcast %cst_28 : f32 to vector<8x1xf32>
    %47 = arith.divf %45, %46 : vector<8x1xf32>
    %cst_29 = arith.constant 9.99999974E-6 : f32
    %48 = vector.broadcast %cst_29 : f32 to vector<8x1xf32>
    %49 = arith.addf %47, %48 : vector<8x1xf32>
    %50 = math.rsqrt %49 : vector<8x1xf32>
    %51 = vector.broadcast %50 : vector<8x1xf32> to vector<8x32xf32>
    %52 = arith.mulf %42, %51 : vector<8x32xf32>
    %53 = vector.broadcast %35 : vector<1x32xf32> to vector<8x32xf32>
    %54 = arith.mulf %52, %53 : vector<8x32xf32>
    %55 = vector.broadcast %36 : vector<1x32xf32> to vector<8x32xf32>
    %56 = arith.addf %54, %55 : vector<8x32xf32>
    %c0_30 = arith.constant 0 : index
    %c0_31 = arith.constant 0 : index
    %c0_32 = arith.constant 0 : index
    %57 = vector.load %arg2[%c0_30, %c0_31, %c0_32] : memref<1x8x16xf32, #tpu.memory_space<vmem>>, vector<1x8x16xf32>
    %58 = vector.shape_cast %57 : vector<1x8x16xf32> to vector<8x16xf32>
    %c0_33 = arith.constant 0 : index
    %c0_34 = arith.constant 0 : index
    %59 = vector.load %arg11[%c0_33, %c0_34] : memref<16x16xf32, #tpu.memory_space<vmem>>, vector<16x16xf32>
    %cst_35 = arith.constant dense<0.000000e+00> : vector<8x16xf32>
    %60 = tpu.matmul %58, %59, %cst_35 {dimension_numbers = #tpu.dot_dimension_numbers<[1], [0], [0], [1], [0, 0, 1, 1], [], []>} : vector<8x16xf32>, vector<16x16xf32>, vector<8x16xf32> -> vector<8x16xf32>
    %c0_36 = arith.constant 0 : index
    %c0_37 = arith.constant 0 : index
    %61 = vector.load %arg12[%c0_36, %c0_37] : memref<1x16xf32, #tpu.memory_space<vmem>>, vector<1x16xf32>
    %62 = vector.broadcast %61 : vector<1x16xf32> to vector<8x16xf32>
    %63 = arith.addf %60, %62 : vector<8x16xf32>
    %c0_38 = arith.constant 0 : index
    %c0_39 = arith.constant 0 : index
    %64 = vector.load %arg13[%c0_38, %c0_39] : memref<32x32xf32, #tpu.memory_space<vmem>>, vector<32x32xf32>
    %cst_40 = arith.constant dense<0.000000e+00> : vector<8x32xf32>
    %65 = tpu.matmul %56, %64, %cst_40 {dimension_numbers = #tpu.dot_dimension_numbers<[1], [0], [0], [1], [0, 0, 1, 1], [], []>} : vector<8x32xf32>, vector<32x32xf32>, vector<8x32xf32> -> vector<8x32xf32>
    %c0_41 = arith.constant 0 : index
    %c0_42 = arith.constant 0 : index
    %66 = vector.load %arg14[%c0_41, %c0_42] : memref<16x32xf32, #tpu.memory_space<vmem>>, vector<16x32xf32>
    %cst_43 = arith.constant dense<0.000000e+00> : vector<8x32xf32>
    %67 = tpu.matmul %63, %66, %cst_43 {dimension_numbers = #tpu.dot_dimension_numbers<[1], [0], [0], [1], [0, 0, 1, 1], [], []>} : vector<8x16xf32>, vector<16x32xf32>, vector<8x32xf32> -> vector<8x32xf32>
    %68 = arith.addf %65, %67 : vector<8x32xf32>
    %c0_44 = arith.constant 0 : index
    %c0_45 = arith.constant 0 : index
    %69 = vector.load %arg15[%c0_44, %c0_45] : memref<1x32xf32, #tpu.memory_space<vmem>>, vector<1x32xf32>
    %70 = vector.broadcast %69 : vector<1x32xf32> to vector<8x32xf32>
    %71 = arith.addf %68, %70 : vector<8x32xf32>
    %cst_46 = arith.constant 5.000000e-01 : f32
    %72 = vector.broadcast %cst_46 : f32 to vector<8x32xf32>
    %73 = arith.mulf %72, %71 : vector<8x32xf32>
    %cst_47 = arith.constant 0.707106769 : f32
    %74 = vector.broadcast %cst_47 : f32 to vector<8x32xf32>
    %75 = arith.mulf %71, %74 : vector<8x32xf32>
    %76 = math.erf %75 : vector<8x32xf32>
    %cst_48 = arith.constant 1.000000e+00 : f32
    %77 = vector.broadcast %cst_48 : f32 to vector<8x32xf32>
    %78 = arith.addf %77, %76 : vector<8x32xf32>
    %79 = arith.mulf %73, %78 : vector<8x32xf32>
    %c0_49 = arith.constant 0 : index
    %c0_50 = arith.constant 0 : index
    %80 = vector.load %arg16[%c0_49, %c0_50] : memref<1x32xf32, #tpu.memory_space<vmem>>, vector<1x32xf32>
    %c0_51 = arith.constant 0 : index
    %c0_52 = arith.constant 0 : index
    %81 = vector.load %arg17[%c0_51, %c0_52] : memref<1x32xf32, #tpu.memory_space<vmem>>, vector<1x32xf32>
    %cst_53 = arith.constant dense<0.000000e+00> : vector<8xf32>
    %82 = vector.multi_reduction <add>, %79, %cst_53 [1] : vector<8x32xf32> to vector<8xf32>
    %83 = vector.shape_cast %82 : vector<8xf32> to vector<8x1xf32>
    %cst_54 = arith.constant 3.200000e+01 : f32
    %84 = vector.broadcast %cst_54 : f32 to vector<8x1xf32>
    %85 = arith.divf %83, %84 : vector<8x1xf32>
    %86 = vector.broadcast %85 : vector<8x1xf32> to vector<8x32xf32>
    %87 = arith.subf %79, %86 : vector<8x32xf32>
    %88 = arith.mulf %87, %87 : vector<8x32xf32>
    %cst_55 = arith.constant dense<0.000000e+00> : vector<8xf32>
    %89 = vector.multi_reduction <add>, %88, %cst_55 [1] : vector<8x32xf32> to vector<8xf32>
    %90 = vector.shape_cast %89 : vector<8xf32> to vector<8x1xf32>
    %cst_56 = arith.constant 3.200000e+01 : f32
    %91 = vector.broadcast %cst_56 : f32 to vector<8x1xf32>
    %92 = arith.divf %90, %91 : vector<8x1xf32>
    %cst_57 = arith.constant 9.99999974E-6 : f32
    %93 = vector.broadcast %cst_57 : f32 to vector<8x1xf32>
    %94 = arith.addf %92, %93 : vector<8x1xf32>
    %95 = math.rsqrt %94 : vector<8x1xf32>
    %96 = vector.broadcast %95 : vector<8x1xf32> to vector<8x32xf32>
    %97 = arith.mulf %87, %96 : vector<8x32xf32>
    %98 = vector.broadcast %80 : vector<1x32xf32> to vector<8x32xf32>
    %99 = arith.mulf %97, %98 : vector<8x32xf32>
    %100 = vector.broadcast %81 : vector<1x32xf32> to vector<8x32xf32>
    %101 = arith.addf %99, %100 : vector<8x32xf32>
    %c0_58 = arith.constant 0 : index
    %c0_59 = arith.constant 0 : index
    %102 = vector.load %arg18[%c0_58, %c0_59] : memref<32x16xf32, #tpu.memory_space<vmem>>, vector<32x16xf32>
    %cst_60 = arith.constant dense<0.000000e+00> : vector<8x16xf32>
    %103 = tpu.matmul %101, %102, %cst_60 {dimension_numbers = #tpu.dot_dimension_numbers<[1], [0], [0], [1], [0, 0, 1, 1], [], []>} : vector<8x32xf32>, vector<32x16xf32>, vector<8x16xf32> -> vector<8x16xf32>
    %c0_61 = arith.constant 0 : index
    %c0_62 = arith.constant 0 : index
    %104 = vector.load %arg19[%c0_61, %c0_62] : memref<1x16xf32, #tpu.memory_space<vmem>>, vector<1x16xf32>
    %105 = vector.broadcast %104 : vector<1x16xf32> to vector<8x16xf32>
    %106 = arith.addf %103, %105 : vector<8x16xf32>
    %cst_63 = arith.constant 5.000000e-01 : f32
    %107 = vector.broadcast %cst_63 : f32 to vector<8x16xf32>
    %108 = arith.mulf %107, %106 : vector<8x16xf32>
    %cst_64 = arith.constant 0.707106769 : f32
    %109 = vector.broadcast %cst_64 : f32 to vector<8x16xf32>
    %110 = arith.mulf %106, %109 : vector<8x16xf32>
    %111 = math.erf %110 : vector<8x16xf32>
    %cst_65 = arith.constant 1.000000e+00 : f32
    %112 = vector.broadcast %cst_65 : f32 to vector<8x16xf32>
    %113 = arith.addf %112, %111 : vector<8x16xf32>
    %114 = arith.mulf %108, %113 : vector<8x16xf32>
    %c0_66 = arith.constant 0 : index
    %c0_67 = arith.constant 0 : index
    %115 = vector.load %arg20[%c0_66, %c0_67] : memref<1x16xf32, #tpu.memory_space<vmem>>, vector<1x16xf32>
    %c0_68 = arith.constant 0 : index
    %c0_69 = arith.constant 0 : index
    %116 = vector.load %arg21[%c0_68, %c0_69] : memref<1x16xf32, #tpu.memory_space<vmem>>, vector<1x16xf32>
    %cst_70 = arith.constant dense<0.000000e+00> : vector<8xf32>
    %117 = vector.multi_reduction <add>, %114, %cst_70 [1] : vector<8x16xf32> to vector<8xf32>
    %118 = vector.shape_cast %117 : vector<8xf32> to vector<8x1xf32>
    %cst_71 = arith.constant 1.600000e+01 : f32
    %119 = vector.broadcast %cst_71 : f32 to vector<8x1xf32>
    %120 = arith.divf %118, %119 : vector<8x1xf32>
    %121 = vector.broadcast %120 : vector<8x1xf32> to vector<8x16xf32>
    %122 = arith.subf %114, %121 : vector<8x16xf32>
    %123 = arith.mulf %122, %122 : vector<8x16xf32>
    %cst_72 = arith.constant dense<0.000000e+00> : vector<8xf32>
    %124 = vector.multi_reduction <add>, %123, %cst_72 [1] : vector<8x16xf32> to vector<8xf32>
    %125 = vector.shape_cast %124 : vector<8xf32> to vector<8x1xf32>
    %cst_73 = arith.constant 1.600000e+01 : f32
    %126 = vector.broadcast %cst_73 : f32 to vector<8x1xf32>
    %127 = arith.divf %125, %126 : vector<8x1xf32>
    %cst_74 = arith.constant 9.99999974E-6 : f32
    %128 = vector.broadcast %cst_74 : f32 to vector<8x1xf32>
    %129 = arith.addf %127, %128 : vector<8x1xf32>
    %130 = math.rsqrt %129 : vector<8x1xf32>
    %131 = vector.broadcast %130 : vector<8x1xf32> to vector<8x16xf32>
    %132 = arith.mulf %122, %131 : vector<8x16xf32>
    %133 = vector.broadcast %115 : vector<1x16xf32> to vector<8x16xf32>
    %134 = arith.mulf %132, %133 : vector<8x16xf32>
    %135 = vector.broadcast %116 : vector<1x16xf32> to vector<8x16xf32>
    %136 = arith.addf %134, %135 : vector<8x16xf32>
    %c0_75 = arith.constant 0 : index
    %c0_76 = arith.constant 0 : index
    %137 = vector.load %arg22[%c0_75, %c0_76] : memref<16x16xf32, #tpu.memory_space<vmem>>, vector<16x16xf32>
    %cst_77 = arith.constant dense<0.000000e+00> : vector<8x16xf32>
    %138 = tpu.matmul %136, %137, %cst_77 {dimension_numbers = #tpu.dot_dimension_numbers<[1], [0], [0], [1], [0, 0, 1, 1], [], []>} : vector<8x16xf32>, vector<16x16xf32>, vector<8x16xf32> -> vector<8x16xf32>
    %c0_78 = arith.constant 0 : index
    %c0_79 = arith.constant 0 : index
    %139 = vector.load %arg23[%c0_78, %c0_79] : memref<1x16xf32, #tpu.memory_space<vmem>>, vector<1x16xf32>
    %140 = vector.broadcast %139 : vector<1x16xf32> to vector<8x16xf32>
    %141 = arith.addf %138, %140 : vector<8x16xf32>
    %142 = vector.shape_cast %141 : vector<8x16xf32> to vector<1x8x16xf32>
    %c0_80 = arith.constant 0 : index
    %c0_81 = arith.constant 0 : index
    %c0_82 = arith.constant 0 : index
    %143 = vector.load %arg24[%c0_80, %c0_81, %c0_82] : memref<1x8x16xf32, #tpu.memory_space<vmem>>, vector<1x8x16xf32>
    tpu.vector_store %arg24[%c0_80, %c0_81, %c0_82], %142 {strides = array<i32>} : memref<1x8x16xf32, #tpu.memory_space<vmem>>, vector<1x8x16xf32>,
    return
  }
  func.func @transform_0(%arg0: i32) -> (i32, i32, i32) {
    %c0_i32 = arith.constant 0 : i32
    %c0_i32_0 = arith.constant 0 : i32
    %c0_i32_1 = arith.constant 0 : i32
    return %arg0, %c0_i32, %c0_i32_0 : i32, i32, i32
  }
  func.func @transform_1(%arg0: i32) -> (i32, i32, i32) {
    %c0_i32 = arith.constant 0 : i32
    %c0_i32_0 = arith.constant 0 : i32
    %c0_i32_1 = arith.constant 0 : i32
    return %arg0, %c0_i32, %c0_i32_0 : i32, i32, i32
  }
  func.func @transform_2(%arg0: i32) -> (i32, i32) {
    %c0_i32 = arith.constant 0 : i32
    %c0_i32_0 = arith.constant 0 : i32
    %c0_i32_1 = arith.constant 0 : i32
    return %c0_i32, %c0_i32_0 : i32, i32
  }
  func.func @transform_3(%arg0: i32) -> (i32, i32) {
    %c0_i32 = arith.constant 0 : i32
    %c0_i32_0 = arith.constant 0 : i32
    %c0_i32_1 = arith.constant 0 : i32
    return %c0_i32, %c0_i32_0 : i32, i32
  }
  func.func @transform_4(%arg0: i32) -> (i32, i32) {
    %c0_i32 = arith.constant 0 : i32
    %c0_i32_0 = arith.constant 0 : i32
    %c0_i32_1 = arith.constant 0 : i32
    return %c0_i32, %c0_i32_0 : i32, i32
  }
  func.func @transform_5(%arg0: i32) -> (i32, i32) {
    %c0_i32 = arith.constant 0 : i32
    %c0_i32_0 = arith.constant 0 : i32
    %c0_i32_1 = arith.constant 0 : i32
    return %c0_i32, %c0_i32_0 : i32, i32
  }
  func.func @transform_6(%arg0: i32) -> (i32, i32) {
    %c0_i32 = arith.constant 0 : i32
    %c0_i32_0 = arith.constant 0 : i32
    %c0_i32_1 = arith.constant 0 : i32
    return %c0_i32, %c0_i32_0 : i32, i32
  }
  func.func @transform_7(%arg0: i32) -> (i32, i32) {
    %c0_i32 = arith.constant 0 : i32
    %c0_i32_0 = arith.constant 0 : i32
    %c0_i32_1 = arith.constant 0 : i32
    return %c0_i32, %c0_i32_0 : i32, i32
  }
  func.func @transform_8(%arg0: i32) -> (i32, i32) {
    %c0_i32 = arith.constant 0 : i32
    %c0_i32_0 = arith.constant 0 : i32
    %c0_i32_1 = arith.constant 0 : i32
    return %c0_i32, %c0_i32_0 : i32, i32
  }
  func.func @transform_9(%arg0: i32) -> (i32, i32) {
    %c0_i32 = arith.constant 0 : i32
    %c0_i32_0 = arith.constant 0 : i32
    %c0_i32_1 = arith.constant 0 : i32
    return %c0_i32, %c0_i32_0 : i32, i32
  }
  func.func @transform_10(%arg0: i32) -> (i32, i32) {
    %c0_i32 = arith.constant 0 : i32
    %c0_i32_0 = arith.constant 0 : i32
    %c0_i32_1 = arith.constant 0 : i32
    return %c0_i32, %c0_i32_0 : i32, i32
  }
  func.func @transform_11(%arg0: i32) -> (i32, i32) {
    %c0_i32 = arith.constant 0 : i32
    %c0_i32_0 = arith.constant 0 : i32
    %c0_i32_1 = arith.constant 0 : i32
    return %c0_i32, %c0_i32_0 : i32, i32
  }
  func.func @transform_12(%arg0: i32) -> (i32, i32) {
    %c0_i32 = arith.constant 0 : i32
    %c0_i32_0 = arith.constant 0 : i32
    %c0_i32_1 = arith.constant 0 : i32
    return %c0_i32, %c0_i32_0 : i32, i32
  }
  func.func @transform_13(%arg0: i32) -> (i32, i32) {
    %c0_i32 = arith.constant 0 : i32
    %c0_i32_0 = arith.constant 0 : i32
    %c0_i32_1 = arith.constant 0 : i32
    return %c0_i32, %c0_i32_0 : i32, i32
  }
  func.func @transform_14(%arg0: i32) -> (i32, i32) {
    %c0_i32 = arith.constant 0 : i32
    %c0_i32_0 = arith.constant 0 : i32
    %c0_i32_1 = arith.constant 0 : i32
    return %c0_i32, %c0_i32_0 : i32, i32
  }
  func.func @transform_15(%arg0: i32) -> (i32, i32) {
    %c0_i32 = arith.constant 0 : i32
    %c0_i32_0 = arith.constant 0 : i32
    %c0_i32_1 = arith.constant 0 : i32
    return %c0_i32, %c0_i32_0 : i32, i32
  }
  func.func @transform_16(%arg0: i32) -> (i32, i32) {
    %c0_i32 = arith.constant 0 : i32
    %c0_i32_0 = arith.constant 0 : i32
    %c0_i32_1 = arith.constant 0 : i32
    return %c0_i32, %c0_i32_0 : i32, i32
  }
  func.func @transform_17(%arg0: i32) -> (i32, i32) {
    %c0_i32 = arith.constant 0 : i32
    %c0_i32_0 = arith.constant 0 : i32
    %c0_i32_1 = arith.constant 0 : i32
    return %c0_i32, %c0_i32_0 : i32, i32
  }
  func.func @transform_18(%arg0: i32) -> (i32, i32) {
    %c0_i32 = arith.constant 0 : i32
    %c0_i32_0 = arith.constant 0 : i32
    %c0_i32_1 = arith.constant 0 : i32
    return %c0_i32, %c0_i32_0 : i32, i32
  }
  func.func @transform_19(%arg0: i32) -> (i32, i32) {
    %c0_i32 = arith.constant 0 : i32
    %c0_i32_0 = arith.constant 0 : i32
    %c0_i32_1 = arith.constant 0 : i32
    return %c0_i32, %c0_i32_0 : i32, i32
  }
  func.func @transform_20(%arg0: i32) -> (i32, i32) {
    %c0_i32 = arith.constant 0 : i32
    %c0_i32_0 = arith.constant 0 : i32
    %c0_i32_1 = arith.constant 0 : i32
    return %c0_i32, %c0_i32_0 : i32, i32
  }
  func.func @transform_21(%arg0: i32) -> (i32, i32) {
    %c0_i32 = arith.constant 0 : i32
    %c0_i32_0 = arith.constant 0 : i32
    %c0_i32_1 = arith.constant 0 : i32
    return %c0_i32, %c0_i32_0 : i32, i32
  }
  func.func @transform_22(%arg0: i32) -> (i32, i32) {
    %c0_i32 = arith.constant 0 : i32
    %c0_i32_0 = arith.constant 0 : i32
    %c0_i32_1 = arith.constant 0 : i32
    return %c0_i32, %c0_i32_0 : i32, i32
  }
  func.func @transform_23(%arg0: i32) -> (i32, i32, i32) {
    %c0_i32 = arith.constant 0 : i32
    %c0_i32_0 = arith.constant 0 : i32
    %c0_i32_1 = arith.constant 0 : i32
    return %arg0, %c0_i32, %c0_i32_0 : i32, i32, i32
  }
}

module attributes {stable_mosaic.version = 11 : i64} {
  func.func @kernel(%arg0: i32, %arg1: memref<1x8x32xf32, #tpu.memory_space<vmem>>, %arg2: memref<1x8x16xf32, #tpu.memory_space<vmem>>, %arg3: memref<32x32xf32, #tpu.memory_space<vmem>>, %arg4: memref<1x32xf32, #tpu.memory_space<vmem>>, %arg5: memref<32x32xf32, #tpu.memory_space<vmem>>, %arg6: memref<1x32xf32, #tpu.memory_space<vmem>>, %arg7: memref<32x32xf32, #tpu.memory_space<vmem>>, %arg8: memref<1x32xf32, #tpu.memory_space<vmem>>, %arg9: memref<1x32xf32, #tpu.memory_space<vmem>>, %arg10: memref<1x32xf32, #tpu.memory_space<vmem>>, %arg11: memref<16x16xf32, #tpu.memory_space<vmem>>, %arg12: memref<1x16xf32, #tpu.memory_space<vmem>>, %arg13: memref<32x32xf32, #tpu.memory_space<vmem>>, %arg14: memref<16x32xf32, #tpu.memory_space<vmem>>, %arg15: memref<1x32xf32, #tpu.memory_space<vmem>>, %arg16: memref<1x32xf32, #tpu.memory_space<vmem>>, %arg17: memref<1x32xf32, #tpu.memory_space<vmem>>, %arg18: memref<32x16xf32, #tpu.memory_space<vmem>>, %arg19: memref<1x16xf32, #tpu.memory_space<vmem>>, %arg20: memref<1x16xf32, #tpu.memory_space<vmem>>, %arg21: memref<1x16xf32, #tpu.memory_space<vmem>>, %arg22: memref<16x16xf32, #tpu.memory_space<vmem>>, %arg23: memref<1x16xf32, #tpu.memory_space<vmem>>, %arg24: memref<1x8x16xf32, #tpu.memory_space<vmem>>) attributes {dimension_semantics = [#tpu.dimension_semantics<parallel>], iteration_bounds = array<i64: 2>, scalar_prefetch = 0 : i64, scratch_operands = 0 : i64, tpu.core_type = #tpu.core_type<tc>, window_params = [{transform_indices = @transform_0, window_bounds = array<i64: 1, 8, 32>}, {transform_indices = @transform_1, window_bounds = array<i64: 1, 8, 16>}, {pipeline_mode = #tpu.pipeline_mode<synchronous>, transform_indices = @transform_2, window_bounds = array<i64: 32, 32>}, {pipeline_mode = #tpu.pipeline_mode<synchronous>, transform_indices = @transform_3, window_bounds = array<i64: 1, 32>}, {pipeline_mode = #tpu.pipeline_mode<synchronous>, transform_indices = @transform_4, window_bounds = array<i64: 32, 32>}, {pipeline_mode = #tpu.pipeline_mode<synchronous>, transform_indices = @transform_5, window_bounds = array<i64: 1, 32>}, {pipeline_mode = #tpu.pipeline_mode<synchronous>, transform_indices = @transform_6, window_bounds = array<i64: 32, 32>}, {pipeline_mode = #tpu.pipeline_mode<synchronous>, transform_indices = @transform_7, window_bounds = array<i64: 1, 32>}, {pipeline_mode = #tpu.pipeline_mode<synchronous>, transform_indices = @transform_8, window_bounds = array<i64: 1, 32>}, {pipeline_mode = #tpu.pipeline_mode<synchronous>, transform_indices = @transform_9, window_bounds = array<i64: 1, 32>}, {pipeline_mode = #tpu.pipeline_mode<synchronous>, transform_indices = @transform_10, window_bounds = array<i64: 16, 16>}, {pipeline_mode = #tpu.pipeline_mode<synchronous>, transform_indices = @transform_11, window_bounds = array<i64: 1, 16>}, {pipeline_mode = #tpu.pipeline_mode<synchronous>, transform_indices = @transform_12, window_bounds = array<i64: 32, 32>}, {pipeline_mode = #tpu.pipeline_mode<synchronous>, transform_indices = @transform_13, window_bounds = array<i64: 16, 32>}, {pipeline_mode = #tpu.pipeline_mode<synchronous>, transform_indices = @transform_14, window_bounds = array<i64: 1, 32>}, {pipeline_mode = #tpu.pipeline_mode<synchronous>, transform_indices = @transform_15, window_bounds = array<i64: 1, 32>}, {pipeline_mode = #tpu.pipeline_mode<synchronous>, transform_indices = @transform_16, window_bounds = array<i64: 1, 32>}, {pipeline_mode = #tpu.pipeline_mode<synchronous>, transform_indices = @transform_17, window_bounds = array<i64: 32, 16>}, {pipeline_mode = #tpu.pipeline_mode<synchronous>, transform_indices = @transform_18, window_bounds = array<i64: 1, 16>}, {pipeline_mode = #tpu.pipeline_mode<synchronous>, transform_indices = @transform_19, window_bounds = array<i64: 1, 16>}, {pipeline_mode = #tpu.pipeline_mode<synchronous>, transform_indices = @transform_20, window_bounds = array<i64: 1, 16>}, {pipeline_mode = #tpu.pipeline_mode<synchronous>, transform_indices = @transform_21, window_bounds = array<i64: 16, 16>}, {pipeline_mode = #tpu.pipeline_mode<synchronous>, transform_indices = @transform_22, window_bounds = array<i64: 1, 16>}, {transform_indices = @transform_23, window_bounds = array<i64: 1, 8, 16>}]} {
    %c0 = arith.constant 0 : index
    %c0_0 = arith.constant 0 : index
    %c0_1 = arith.constant 0 : index
    %0 = vector.load %arg1[%c0, %c0_0, %c0_1] : memref<1x8x32xf32, #tpu.memory_space<vmem>>, vector<1x8x32xf32>
    %1 = vector.shape_cast %0 : vector<1x8x32xf32> to vector<8x32xf32>
    %c0_2 = arith.constant 0 : index
    %c0_3 = arith.constant 0 : index
    %2 = vector.load %arg3[%c0_2, %c0_3] : memref<32x32xf32, #tpu.memory_space<vmem>>, vector<32x32xf32>
    %cst = arith.constant dense<0.000000e+00> : vector<8x32xf32>
    %3 = tpu.matmul %1, %2, %cst {dimension_numbers = #tpu.dot_dimension_numbers<[1], [0], [0], [1], [0, 0, 1, 1], [], []>} : vector<8x32xf32>, vector<32x32xf32>, vector<8x32xf32> -> vector<8x32xf32>
    %c0_4 = arith.constant 0 : index
    %c0_5 = arith.constant 0 : index
    %4 = vector.load %arg4[%c0_4, %c0_5] : memref<1x32xf32, #tpu.memory_space<vmem>>, vector<1x32xf32>
    %5 = vector.broadcast %4 : vector<1x32xf32> to vector<8x32xf32>
    %6 = arith.addf %3, %5 : vector<8x32xf32>
    %cst_6 = arith.constant 0.176776692 : f32
    %7 = vector.broadcast %cst_6 : f32 to vector<8x32xf32>
    %8 = arith.mulf %6, %7 : vector<8x32xf32>
    %c0_7 = arith.constant 0 : index
    %c0_8 = arith.constant 0 : index
    %9 = vector.load %arg5[%c0_7, %c0_8] : memref<32x32xf32, #tpu.memory_space<vmem>>, vector<32x32xf32>
    %cst_9 = arith.constant dense<0.000000e+00> : vector<8x32xf32>
    %10 = tpu.matmul %1, %9, %cst_9 {dimension_numbers = #tpu.dot_dimension_numbers<[1], [0], [0], [1], [0, 0, 1, 1], [], []>} : vector<8x32xf32>, vector<32x32xf32>, vector<8x32xf32> -> vector<8x32xf32>
    %c0_10 = arith.constant 0 : index
    %c0_11 = arith.constant 0 : index
    %11 = vector.load %arg6[%c0_10, %c0_11] : memref<1x32xf32, #tpu.memory_space<vmem>>, vector<1x32xf32>
    %12 = vector.broadcast %11 : vector<1x32xf32> to vector<8x32xf32>
    %13 = arith.addf %10, %12 : vector<8x32xf32>
    %c0_12 = arith.constant 0 : index
    %c0_13 = arith.constant 0 : index
    %14 = vector.load %arg7[%c0_12, %c0_13] : memref<32x32xf32, #tpu.memory_space<vmem>>, vector<32x32xf32>
    %cst_14 = arith.constant dense<0.000000e+00> : vector<8x32xf32>
    %15 = tpu.matmul %1, %14, %cst_14 {dimension_numbers = #tpu.dot_dimension_numbers<[1], [0], [0], [1], [0, 0, 1, 1], [], []>} : vector<8x32xf32>, vector<32x32xf32>, vector<8x32xf32> -> vector<8x32xf32>
    %c0_15 = arith.constant 0 : index
    %c0_16 = arith.constant 0 : index
    %16 = vector.load %arg8[%c0_15, %c0_16] : memref<1x32xf32, #tpu.memory_space<vmem>>, vector<1x32xf32>
    %17 = vector.broadcast %16 : vector<1x32xf32> to vector<8x32xf32>
    %18 = arith.addf %15, %17 : vector<8x32xf32>
    %19 = vector.shape_cast %8 : vector<8x32xf32> to vector<1x8x32xf32>
    %20 = vector.shape_cast %13 : vector<8x32xf32> to vector<1x8x32xf32>
    %21 = vector.shape_cast %18 : vector<8x32xf32> to vector<1x8x32xf32>
    %cst_17 = arith.constant dense<0.000000e+00> : vector<1x8x8xf32>
    %22 = tpu.matmul %19, %20, %cst_17 {dimension_numbers = #tpu.dot_dimension_numbers<[2], [2], [1], [1], [0, 0, 0, 1, 1, 1], [0], [0]>} : vector<1x8x32xf32>, vector<1x8x32xf32>, vector<1x8x8xf32> -> vector<1x8x8xf32>
    %cst_18 = arith.constant dense<0xFF800000> : vector<1x8xf32>
    %23 = vector.multi_reduction <maximumf>, %22, %cst_18 [2] : vector<1x8x8xf32> to vector<1x8xf32>
    %24 = vector.shape_cast %23 : vector<1x8xf32> to vector<1x8x1xf32>
    %25 = vector.broadcast %24 : vector<1x8x1xf32> to vector<1x8x8xf32>
    %26 = arith.subf %22, %25 : vector<1x8x8xf32>
    %27 = math.exp %26 : vector<1x8x8xf32>
    %cst_19 = arith.constant dense<0.000000e+00> : vector<1x8xf32>
    %28 = vector.multi_reduction <add>, %27, %cst_19 [2] : vector<1x8x8xf32> to vector<1x8xf32>
    %29 = vector.shape_cast %28 : vector<1x8xf32> to vector<1x8x1xf32>
    %30 = vector.broadcast %29 : vector<1x8x1xf32> to vector<1x8x8xf32>
    %31 = arith.divf %27, %30 : vector<1x8x8xf32>
    %cst_20 = arith.constant dense<0.000000e+00> : vector<1x8x32xf32>
    %32 = tpu.matmul %31, %21, %cst_20 {dimension_numbers = #tpu.dot_dimension_numbers<[2], [1], [1], [2], [0, 0, 0, 1, 1, 2], [0], [0]>} : vector<1x8x8xf32>, vector<1x8x32xf32>, vector<1x8x32xf32> -> vector<1x8x32xf32>
    %33 = arith.addf %0, %32 : vector<1x8x32xf32>
    %34 = vector.shape_cast %33 : vector<1x8x32xf32> to vector<8x32xf32>
    %c0_21 = arith.constant 0 : index
    %c0_22 = arith.constant 0 : index
    %35 = vector.load %arg9[%c0_21, %c0_22] : memref<1x32xf32, #tpu.memory_space<vmem>>, vector<1x32xf32>
    %c0_23 = arith.constant 0 : index
    %c0_24 = arith.constant 0 : index
    %36 = vector.load %arg10[%c0_23, %c0_24] : memref<1x32xf32, #tpu.memory_space<vmem>>, vector<1x32xf32>
    %cst_25 = arith.constant dense<0.000000e+00> : vector<8xf32>
    %37 = vector.multi_reduction <add>, %34, %cst_25 [1] : vector<8x32xf32> to vector<8xf32>
    %38 = vector.shape_cast %37 : vector<8xf32> to vector<8x1xf32>
    %cst_26 = arith.constant 3.200000e+01 : f32
    %39 = vector.broadcast %cst_26 : f32 to vector<8x1xf32>
    %40 = arith.divf %38, %39 : vector<8x1xf32>
    %41 = vector.broadcast %40 : vector<8x1xf32> to vector<8x32xf32>
    %42 = arith.subf %34, %41 : vector<8x32xf32>
    %43 = arith.mulf %42, %42 : vector<8x32xf32>
    %cst_27 = arith.constant dense<0.000000e+00> : vector<8xf32>
    %44 = vector.multi_reduction <add>, %43, %cst_27 [1] : vector<8x32xf32> to vector<8xf32>
    %45 = vector.shape_cast %44 : vector<8xf32> to vector<8x1xf32>
    %cst_28 = arith.constant 3.200000e+01 : f32
    %46 = vector.broadcast %cst_28 : f32 to vector<8x1xf32>
    %47 = arith.divf %45, %46 : vector<8x1xf32>
    %cst_29 = arith.constant 9.99999974E-6 : f32
    %48 = vector.broadcast %cst_29 : f32 to vector<8x1xf32>
    %49 = arith.addf %47, %48 : vector<8x1xf32>
    %50 = math.rsqrt %49 : vector<8x1xf32>
    %51 = vector.broadcast %50 : vector<8x1xf32> to vector<8x32xf32>
    %52 = arith.mulf %42, %51 : vector<8x32xf32>
    %53 = vector.broadcast %35 : vector<1x32xf32> to vector<8x32xf32>
    %54 = arith.mulf %52, %53 : vector<8x32xf32>
    %55 = vector.broadcast %36 : vector<1x32xf32> to vector<8x32xf32>
    %56 = arith.addf %54, %55 : vector<8x32xf32>
    %c0_30 = arith.constant 0 : index
    %c0_31 = arith.constant 0 : index
    %c0_32 = arith.constant 0 : index
    %57 = vector.load %arg2[%c0_30, %c0_31, %c0_32] : memref<1x8x16xf32, #tpu.memory_space<vmem>>, vector<1x8x16xf32>
    %58 = vector.shape_cast %57 : vector<1x8x16xf32> to vector<8x16xf32>
    %c0_33 = arith.constant 0 : index
    %c0_34 = arith.constant 0 : index
    %59 = vector.load %arg11[%c0_33, %c0_34] : memref<16x16xf32, #tpu.memory_space<vmem>>, vector<16x16xf32>
    %cst_35 = arith.constant dense<0.000000e+00> : vector<8x16xf32>
    %60 = tpu.matmul %58, %59, %cst_35 {dimension_numbers = #tpu.dot_dimension_numbers<[1], [0], [0], [1], [0, 0, 1, 1], [], []>} : vector<8x16xf32>, vector<16x16xf32>, vector<8x16xf32> -> vector<8x16xf32>
    %c0_36 = arith.constant 0 : index
    %c0_37 = arith.constant 0 : index
    %61 = vector.load %arg12[%c0_36, %c0_37] : memref<1x16xf32, #tpu.memory_space<vmem>>, vector<1x16xf32>
    %62 = vector.broadcast %61 : vector<1x16xf32> to vector<8x16xf32>
    %63 = arith.addf %60, %62 : vector<8x16xf32>
    %c0_38 = arith.constant 0 : index
    %c0_39 = arith.constant 0 : index
    %64 = vector.load %arg13[%c0_38, %c0_39] : memref<32x32xf32, #tpu.memory_space<vmem>>, vector<32x32xf32>
    %cst_40 = arith.constant dense<0.000000e+00> : vector<8x32xf32>
    %65 = tpu.matmul %56, %64, %cst_40 {dimension_numbers = #tpu.dot_dimension_numbers<[1], [0], [0], [1], [0, 0, 1, 1], [], []>} : vector<8x32xf32>, vector<32x32xf32>, vector<8x32xf32> -> vector<8x32xf32>
    %c0_41 = arith.constant 0 : index
    %c0_42 = arith.constant 0 : index
    %66 = vector.load %arg14[%c0_41, %c0_42] : memref<16x32xf32, #tpu.memory_space<vmem>>, vector<16x32xf32>
    %cst_43 = arith.constant dense<0.000000e+00> : vector<8x32xf32>
    %67 = tpu.matmul %63, %66, %cst_43 {dimension_numbers = #tpu.dot_dimension_numbers<[1], [0], [0], [1], [0, 0, 1, 1], [], []>} : vector<8x16xf32>, vector<16x32xf32>, vector<8x32xf32> -> vector<8x32xf32>
    %68 = arith.addf %65, %67 : vector<8x32xf32>
    %c0_44 = arith.constant 0 : index
    %c0_45 = arith.constant 0 : index
    %69 = vector.load %arg15[%c0_44, %c0_45] : memref<1x32xf32, #tpu.memory_space<vmem>>, vector<1x32xf32>
    %70 = vector.broadcast %69 : vector<1x32xf32> to vector<8x32xf32>
    %71 = arith.addf %68, %70 : vector<8x32xf32>
    %cst_46 = arith.constant 5.000000e-01 : f32
    %72 = vector.broadcast %cst_46 : f32 to vector<8x32xf32>
    %73 = arith.mulf %72, %71 : vector<8x32xf32>
    %cst_47 = arith.constant 0.707106769 : f32
    %74 = vector.broadcast %cst_47 : f32 to vector<8x32xf32>
    %75 = arith.mulf %71, %74 : vector<8x32xf32>
    %76 = math.erf %75 : vector<8x32xf32>
    %cst_48 = arith.constant 1.000000e+00 : f32
    %77 = vector.broadcast %cst_48 : f32 to vector<8x32xf32>
    %78 = arith.addf %77, %76 : vector<8x32xf32>
    %79 = arith.mulf %73, %78 : vector<8x32xf32>
    %c0_49 = arith.constant 0 : index
    %c0_50 = arith.constant 0 : index
    %80 = vector.load %arg16[%c0_49, %c0_50] : memref<1x32xf32, #tpu.memory_space<vmem>>, vector<1x32xf32>
    %c0_51 = arith.constant 0 : index
    %c0_52 = arith.constant 0 : index
    %81 = vector.load %arg17[%c0_51, %c0_52] : memref<1x32xf32, #tpu.memory_space<vmem>>, vector<1x32xf32>
    %cst_53 = arith.constant dense<0.000000e+00> : vector<8xf32>
    %82 = vector.multi_reduction <add>, %79, %cst_53 [1] : vector<8x32xf32> to vector<8xf32>
    %83 = vector.shape_cast %82 : vector<8xf32> to vector<8x1xf32>
    %cst_54 = arith.constant 3.200000e+01 : f32
    %84 = vector.broadcast %cst_54 : f32 to vector<8x1xf32>
    %85 = arith.divf %83, %84 : vector<8x1xf32>
    %86 = vector.broadcast %85 : vector<8x1xf32> to vector<8x32xf32>
    %87 = arith.subf %79, %86 : vector<8x32xf32>
    %88 = arith.mulf %87, %87 : vector<8x32xf32>
    %cst_55 = arith.constant dense<0.000000e+00> : vector<8xf32>
    %89 = vector.multi_reduction <add>, %88, %cst_55 [1] : vector<8x32xf32> to vector<8xf32>
    %90 = vector.shape_cast %89 : vector<8xf32> to vector<8x1xf32>
    %cst_56 = arith.constant 3.200000e+01 : f32
    %91 = vector.broadcast %cst_56 : f32 to vector<8x1xf32>
    %92 = arith.divf %90, %91 : vector<8x1xf32>
    %cst_57 = arith.constant 9.99999974E-6 : f32
    %93 = vector.broadcast %cst_57 : f32 to vector<8x1xf32>
    %94 = arith.addf %92, %93 : vector<8x1xf32>
    %95 = math.rsqrt %94 : vector<8x1xf32>
    %96 = vector.broadcast %95 : vector<8x1xf32> to vector<8x32xf32>
    %97 = arith.mulf %87, %96 : vector<8x32xf32>
    %98 = vector.broadcast %80 : vector<1x32xf32> to vector<8x32xf32>
    %99 = arith.mulf %97, %98 : vector<8x32xf32>
    %100 = vector.broadcast %81 : vector<1x32xf32> to vector<8x32xf32>
    %101 = arith.addf %99, %100 : vector<8x32xf32>
    %c0_58 = arith.constant 0 : index
    %c0_59 = arith.constant 0 : index
    %102 = vector.load %arg18[%c0_58, %c0_59] : memref<32x16xf32, #tpu.memory_space<vmem>>, vector<32x16xf32>
    %cst_60 = arith.constant dense<0.000000e+00> : vector<8x16xf32>
    %103 = tpu.matmul %101, %102, %cst_60 {dimension_numbers = #tpu.dot_dimension_numbers<[1], [0], [0], [1], [0, 0, 1, 1], [], []>} : vector<8x32xf32>, vector<32x16xf32>, vector<8x16xf32> -> vector<8x16xf32>
    %c0_61 = arith.constant 0 : index
    %c0_62 = arith.constant 0 : index
    %104 = vector.load %arg19[%c0_61, %c0_62] : memref<1x16xf32, #tpu.memory_space<vmem>>, vector<1x16xf32>
    %105 = vector.broadcast %104 : vector<1x16xf32> to vector<8x16xf32>
    %106 = arith.addf %103, %105 : vector<8x16xf32>
    %cst_63 = arith.constant 5.000000e-01 : f32
    %107 = vector.broadcast %cst_63 : f32 to vector<8x16xf32>
    %108 = arith.mulf %107, %106 : vector<8x16xf32>
    %cst_64 = arith.constant 0.707106769 : f32
    %109 = vector.broadcast %cst_64 : f32 to vector<8x16xf32>
    %110 = arith.mulf %106, %109 : vector<8x16xf32>
    %111 = math.erf %110 : vector<8x16xf32>
    %cst_65 = arith.constant 1.000000e+00 : f32
    %112 = vector.broadcast %cst_65 : f32 to vector<8x16xf32>
    %113 = arith.addf %112, %111 : vector<8x16xf32>
    %114 = arith.mulf %108, %113 : vector<8x16xf32>
    %c0_66 = arith.constant 0 : index
    %c0_67 = arith.constant 0 : index
    %115 = vector.load %arg20[%c0_66, %c0_67] : memref<1x16xf32, #tpu.memory_space<vmem>>, vector<1x16xf32>
    %c0_68 = arith.constant 0 : index
    %c0_69 = arith.constant 0 : index
    %116 = vector.load %arg21[%c0_68, %c0_69] : memref<1x16xf32, #tpu.memory_space<vmem>>, vector<1x16xf32>
    %cst_70 = arith.constant dense<0.000000e+00> : vector<8xf32>
    %117 = vector.multi_reduction <add>, %114, %cst_70 [1] : vector<8x16xf32> to vector<8xf32>
    %118 = vector.shape_cast %117 : vector<8xf32> to vector<8x1xf32>
    %cst_71 = arith.constant 1.600000e+01 : f32
    %119 = vector.broadcast %cst_71 : f32 to vector<8x1xf32>
    %120 = arith.divf %118, %119 : vector<8x1xf32>
    %121 = vector.broadcast %120 : vector<8x1xf32> to vector<8x16xf32>
    %122 = arith.subf %114, %121 : vector<8x16xf32>
    %123 = arith.mulf %122, %122 : vector<8x16xf32>
    %cst_72 = arith.constant dense<0.000000e+00> : vector<8xf32>
    %124 = vector.multi_reduction <add>, %123, %cst_72 [1] : vector<8x16xf32> to vector<8xf32>
    %125 = vector.shape_cast %124 : vector<8xf32> to vector<8x1xf32>
    %cst_73 = arith.constant 1.600000e+01 : f32
    %126 = vector.broadcast %cst_73 : f32 to vector<8x1xf32>
    %127 = arith.divf %125, %126 : vector<8x1xf32>
    %cst_74 = arith.constant 9.99999974E-6 : f32
    %128 = vector.broadcast %cst_74 : f32 to vector<8x1xf32>
    %129 = arith.addf %127, %128 : vector<8x1xf32>
    %130 = math.rsqrt %129 : vector<8x1xf32>
    %131 = vector.broadcast %130 : vector<8x1xf32> to vector<8x16xf32>
    %132 = arith.mulf %122, %131 : vector<8x16xf32>
    %133 = vector.broadcast %115 : vector<1x16xf32> to vector<8x16xf32>
    %134 = arith.mulf %132, %133 : vector<8x16xf32>
    %135 = vector.broadcast %116 : vector<1x16xf32> to vector<8x16xf32>
    %136 = arith.addf %134, %135 : vector<8x16xf32>
    %c0_75 = arith.constant 0 : index
    %c0_76 = arith.constant 0 : index
    %137 = vector.load %arg22[%c0_75, %c0_76] : memref<16x16xf32, #tpu.memory_space<vmem>>, vector<16x16xf32>
    %cst_77 = arith.constant dense<0.000000e+00> : vector<8x16xf32>
    %138 = tpu.matmul %136, %137, %cst_77 {dimension_numbers = #tpu.dot_dimension_numbers<[1], [0], [0], [1], [0, 0, 1, 1], [], []>} : vector<8x16xf32>, vector<16x16xf32>, vector<8x16xf32> -> vector<8x16xf32>
    %c0_78 = arith.constant 0 : index
    %c0_79 = arith.constant 0 : index
    %139 = vector.load %arg23[%c0_78, %c0_79] : memref<1x16xf32, #tpu.memory_space<vmem>>, vector<1x16xf32>
    %140 = vector.broadcast %139 : vector<1x16xf32> to vector<8x16xf32>
    %141 = arith.addf %138, %140 : vector<8x16xf32>
    %142 = vector.shape_cast %141 : vector<8x16xf32> to vector<1x8x16xf32>
    %c0_80 = arith.constant 0 : index
    %c0_81 = arith.constant 0 : index
    %c0_82 = arith.constant 0 : index
    %143 = vector.load %arg24[%c0_80, %c0_81, %c0_82] : memref<1x8x16xf32, #tpu.memory_space<vmem>>, vector<1x8x16xf32>
    tpu.vector_store %arg24[%c0_80, %c0_81, %c0_82], %142 {strides = array<i32>} : memref<1x8x16xf32, #tpu.memory_space<vmem>>, vector<1x8x16xf32>,
    return
  }
  func.func @transform_0(%arg0: i32) -> (i32, i32, i32) {
    %c0_i32 = arith.constant 0 : i32
    %c0_i32_0 = arith.constant 0 : i32
    %c0_i32_1 = arith.constant 0 : i32
    return %arg0, %c0_i32, %c0_i32_0 : i32, i32, i32
  }
  func.func @transform_1(%arg0: i32) -> (i32, i32, i32) {
    %c0_i32 = arith.constant 0 : i32
    %c0_i32_0 = arith.constant 0 : i32
    %c0_i32_1 = arith.constant 0 : i32
    return %arg0, %c0_i32, %c0_i32_0 : i32, i32, i32
  }
  func.func @transform_2(%arg0: i32) -> (i32, i32) {
    %c0_i32 = arith.constant 0 : i32
    %c0_i32_0 = arith.constant 0 : i32
    %c0_i32_1 = arith.constant 0 : i32
    return %c0_i32, %c0_i32_0 : i32, i32
  }
  func.func @transform_3(%arg0: i32) -> (i32, i32) {
    %c0_i32 = arith.constant 0 : i32
    %c0_i32_0 = arith.constant 0 : i32
    %c0_i32_1 = arith.constant 0 : i32
    return %c0_i32, %c0_i32_0 : i32, i32
  }
  func.func @transform_4(%arg0: i32) -> (i32, i32) {
    %c0_i32 = arith.constant 0 : i32
    %c0_i32_0 = arith.constant 0 : i32
    %c0_i32_1 = arith.constant 0 : i32
    return %c0_i32, %c0_i32_0 : i32, i32
  }
  func.func @transform_5(%arg0: i32) -> (i32, i32) {
    %c0_i32 = arith.constant 0 : i32
    %c0_i32_0 = arith.constant 0 : i32
    %c0_i32_1 = arith.constant 0 : i32
    return %c0_i32, %c0_i32_0 : i32, i32
  }
  func.func @transform_6(%arg0: i32) -> (i32, i32) {
    %c0_i32 = arith.constant 0 : i32
    %c0_i32_0 = arith.constant 0 : i32
    %c0_i32_1 = arith.constant 0 : i32
    return %c0_i32, %c0_i32_0 : i32, i32
  }
  func.func @transform_7(%arg0: i32) -> (i32, i32) {
    %c0_i32 = arith.constant 0 : i32
    %c0_i32_0 = arith.constant 0 : i32
    %c0_i32_1 = arith.constant 0 : i32
    return %c0_i32, %c0_i32_0 : i32, i32
  }
  func.func @transform_8(%arg0: i32) -> (i32, i32) {
    %c0_i32 = arith.constant 0 : i32
    %c0_i32_0 = arith.constant 0 : i32
    %c0_i32_1 = arith.constant 0 : i32
    return %c0_i32, %c0_i32_0 : i32, i32
  }
  func.func @transform_9(%arg0: i32) -> (i32, i32) {
    %c0_i32 = arith.constant 0 : i32
    %c0_i32_0 = arith.constant 0 : i32
    %c0_i32_1 = arith.constant 0 : i32
    return %c0_i32, %c0_i32_0 : i32, i32
  }
  func.func @transform_10(%arg0: i32) -> (i32, i32) {
    %c0_i32 = arith.constant 0 : i32
    %c0_i32_0 = arith.constant 0 : i32
    %c0_i32_1 = arith.constant 0 : i32
    return %c0_i32, %c0_i32_0 : i32, i32
  }
  func.func @transform_11(%arg0: i32) -> (i32, i32) {
    %c0_i32 = arith.constant 0 : i32
    %c0_i32_0 = arith.constant 0 : i32
    %c0_i32_1 = arith.constant 0 : i32
    return %c0_i32, %c0_i32_0 : i32, i32
  }
  func.func @transform_12(%arg0: i32) -> (i32, i32) {
    %c0_i32 = arith.constant 0 : i32
    %c0_i32_0 = arith.constant 0 : i32
    %c0_i32_1 = arith.constant 0 : i32
    return %c0_i32, %c0_i32_0 : i32, i32
  }
  func.func @transform_13(%arg0: i32) -> (i32, i32) {
    %c0_i32 = arith.constant 0 : i32
    %c0_i32_0 = arith.constant 0 : i32
    %c0_i32_1 = arith.constant 0 : i32
    return %c0_i32, %c0_i32_0 : i32, i32
  }
  func.func @transform_14(%arg0: i32) -> (i32, i32) {
    %c0_i32 = arith.constant 0 : i32
    %c0_i32_0 = arith.constant 0 : i32
    %c0_i32_1 = arith.constant 0 : i32
    return %c0_i32, %c0_i32_0 : i32, i32
  }
  func.func @transform_15(%arg0: i32) -> (i32, i32) {
    %c0_i32 = arith.constant 0 : i32
    %c0_i32_0 = arith.constant 0 : i32
    %c0_i32_1 = arith.constant 0 : i32
    return %c0_i32, %c0_i32_0 : i32, i32
  }
  func.func @transform_16(%arg0: i32) -> (i32, i32) {
    %c0_i32 = arith.constant 0 : i32
    %c0_i32_0 = arith.constant 0 : i32
    %c0_i32_1 = arith.constant 0 : i32
    return %c0_i32, %c0_i32_0 : i32, i32
  }
  func.func @transform_17(%arg0: i32) -> (i32, i32) {
    %c0_i32 = arith.constant 0 : i32
    %c0_i32_0 = arith.constant 0 : i32
    %c0_i32_1 = arith.constant 0 : i32
    return %c0_i32, %c0_i32_0 : i32, i32
  }
  func.func @transform_18(%arg0: i32) -> (i32, i32) {
    %c0_i32 = arith.constant 0 : i32
    %c0_i32_0 = arith.constant 0 : i32
    %c0_i32_1 = arith.constant 0 : i32
    return %c0_i32, %c0_i32_0 : i32, i32
  }
  func.func @transform_19(%arg0: i32) -> (i32, i32) {
    %c0_i32 = arith.constant 0 : i32
    %c0_i32_0 = arith.constant 0 : i32
    %c0_i32_1 = arith.constant 0 : i32
    return %c0_i32, %c0_i32_0 : i32, i32
  }
  func.func @transform_20(%arg0: i32) -> (i32, i32) {
    %c0_i32 = arith.constant 0 : i32
    %c0_i32_0 = arith.constant 0 : i32
    %c0_i32_1 = arith.constant 0 : i32
    return %c0_i32, %c0_i32_0 : i32, i32
  }
  func.func @transform_21(%arg0: i32) -> (i32, i32) {
    %c0_i32 = arith.constant 0 : i32
    %c0_i32_0 = arith.constant 0 : i32
    %c0_i32_1 = arith.constant 0 : i32
    return %c0_i32, %c0_i32_0 : i32, i32
  }
  func.func @transform_22(%arg0: i32) -> (i32, i32) {
    %c0_i32 = arith.constant 0 : i32
    %c0_i32_0 = arith.constant 0 : i32
    %c0_i32_1 = arith.constant 0 : i32
    return %c0_i32, %c0_i32_0 : i32, i32
  }
  func.func @transform_23(%arg0: i32) -> (i32, i32, i32) {
    %c0_i32 = arith.constant 0 : i32
    %c0_i32_0 = arith.constant 0 : i32
    %c0_i32_1 = arith.constant 0 : i32
    return %arg0, %c0_i32, %c0_i32_0 : i32, i32, i32
  }
}

</mosaic_0001>

<llo_original>
// kernel: tpu_custom_call.1
$region0: #{tpu_custom_call.1}
  #allocation0 [shape = 'u32[]', space=smem, size = 0x4, offset = 0x4, fixed_abs, tag = 'smem constant byte address 0x4 - core index']
  #allocation1 [shape = 'u32[144,128]{1,0:T(1,128)}', space=vmem, size = 0x12000, scoped, tag = 'internal scratch']
  %s0 = inlined_call_operand.hbm [shape: f32[2,8,32], index: 0, kind: input, shape index: {}]
  %s1 = inlined_call_operand.hbm [shape: f32[2,8,16], index: 1, kind: input, shape index: {}]
  %s2 = inlined_call_operand.vmem [shape: f32[32,32], index: 2, kind: input, shape index: {}]
  %s3 = inlined_call_operand.hbm [shape: f32[1,32], index: 3, kind: input, shape index: {}]
  %s4 = inlined_call_operand.hbm [shape: f32[32,32], index: 4, kind: input, shape index: {}]
  %s5 = inlined_call_operand.hbm [shape: f32[1,32], index: 5, kind: input, shape index: {}]
  %s6 = inlined_call_operand.hbm [shape: f32[32,32], index: 6, kind: input, shape index: {}]
  %s7 = inlined_call_operand.hbm [shape: f32[1,32], index: 7, kind: input, shape index: {}]
  %s8 = inlined_call_operand.hbm [shape: f32[1,32], index: 8, kind: input, shape index: {}]
  %s9 = inlined_call_operand.hbm [shape: f32[1,32], index: 9, kind: input, shape index: {}]
  %s10 = inlined_call_operand.hbm [shape: f32[16,16], index: 10, kind: input, shape index: {}]
  %s11 = inlined_call_operand.hbm [shape: f32[1,16], index: 11, kind: input, shape index: {}]
  %s12 = inlined_call_operand.vmem [shape: f32[32,32], index: 12, kind: input, shape index: {}]
  %s13 = inlined_call_operand.hbm [shape: f32[16,32], index: 13, kind: input, shape index: {}]
  %s14 = inlined_call_operand.hbm [shape: f32[1,32], index: 14, kind: input, shape index: {}]
  %s15 = inlined_call_operand.hbm [shape: f32[1,32], index: 15, kind: input, shape index: {}]
  %s16 = inlined_call_operand.hbm [shape: f32[1,32], index: 16, kind: input, shape index: {}]
  %s17 = inlined_call_operand.vmem [shape: f32[32,16], index: 17, kind: input, shape index: {}]
  %s18 = inlined_call_operand.hbm [shape: f32[1,16], index: 18, kind: input, shape index: {}]
  %s19 = inlined_call_operand.vmem [shape: f32[1,16], index: 19, kind: input, shape index: {}]
  %s20 = inlined_call_operand.vmem [shape: f32[1,16], index: 20, kind: input, shape index: {}]
  %s21 = inlined_call_operand.vmem [shape: f32[16,16], index: 21, kind: input, shape index: {}]
  %s22 = inlined_call_operand.vmem [shape: f32[1,16], index: 22, kind: input, shape index: {}]
  %s23 = inlined_call_operand.hbm [shape: f32[2,8,16], index: 23, kind: output, shape index: {}]
  %s24 = sld [smem:[#allocation0]]
  $region189: #{tpu_custom_call.1} parent=0
    _
  %s26 = ssub.s32 1, %s24
  %s27 = scalar_select 0, %s26, %s24
  $region1: #{tpu_custom_call.1} parent=0
    #allocation2 [shape = 'u8[8192]{0}', space=vmem, size = 0x2000, scoped, tag = 'input window, operand 0']
    #allocation3 [shape = 's32[2]{0}', space=sflag, size = 0x8, scoped, tag = 'scoped memory for tpu_custom_call.1']
    #allocation4 [shape = 's32[2]{0}', space=sflag, size = 0x8, scoped, tag = 'scoped memory for tpu_custom_call.1']
    #allocation5 [shape = 'u8[8192]{0}', space=vmem, size = 0x2000, scoped, tag = 'input window, operand 1']
    #allocation6 [shape = 's32[2]{0}', space=sflag, size = 0x8, scoped, tag = 'scoped memory for tpu_custom_call.1']
    #allocation7 [shape = 'u8[512]{0}', space=vmem, size = 0x400, scoped, tag = 'input window, operand 3, single buffered']
    #allocation8 [shape = 'u8[16384]{0}', space=vmem, size = 0x4000, scoped, tag = 'input window, operand 4, single buffered']
    #allocation9 [shape = 's32[1]{0}', space=sflag, size = 0x4, scoped, tag = 'scoped memory for tpu_custom_call.1']
    #allocation10 [shape = 'u8[512]{0}', space=vmem, size = 0x400, scoped, tag = 'input window, operand 5, single buffered']
    #allocation11 [shape = 'u8[16384]{0}', space=vmem, size = 0x4000, scoped, tag = 'input window, operand 6, single buffered']
    #allocation12 [shape = 's32[1]{0}', space=sflag, size = 0x4, scoped, tag = 'scoped memory for tpu_custom_call.1']
    #allocation13 [shape = 'u8[512]{0}', space=vmem, size = 0x400, scoped, tag = 'input window, operand 7, single buffered']
    #allocation14 [shape = 'u8[512]{0}', space=vmem, size = 0x400, scoped, tag = 'input window, operand 8, single buffered']
    #allocation15 [shape = 's32[1]{0}', space=sflag, size = 0x4, scoped, tag = 'scoped memory for tpu_custom_call.1']
    #allocation16 [shape = 'u8[512]{0}', space=vmem, size = 0x400, scoped, tag = 'input window, operand 9, single buffered']
    #allocation17 [shape = 'u8[8192]{0}', space=vmem, size = 0x2000, scoped, tag = 'input window, operand 10, single buffered']
    #allocation18 [shape = 's32[1]{0}', space=sflag, size = 0x4, scoped, tag = 'scoped memory for tpu_custom_call.1']
    #allocation19 [shape = 'u8[512]{0}', space=vmem, size = 0x400, scoped, tag = 'input window, operand 11, single buffered']
    #allocation20 [shape = 'u8[8192]{0}', space=vmem, size = 0x2000, scoped, tag = 'input window, operand 13, single buffered']
    #allocation21 [shape = 's32[1]{0}', space=sflag, size = 0x4, scoped, tag = 'scoped memory for tpu_custom_call.1']
    #allocation22 [shape = 'u8[512]{0}', space=vmem, size = 0x400, scoped, tag = 'input window, operand 14, single buffered']
    #allocation23 [shape = 'u8[512]{0}', space=vmem, size = 0x400, scoped, tag = 'input window, operand 15, single buffered']
    #allocation24 [shape = 's32[1]{0}', space=sflag, size = 0x4, scoped, tag = 'scoped memory for tpu_custom_call.1']
    #allocation25 [shape = 'u8[512]{0}', space=vmem, size = 0x400, scoped, tag = 'input window, operand 16, single buffered']
    #allocation26 [shape = 'u8[512]{0}', space=vmem, size = 0x400, scoped, tag = 'input window, operand 18, single buffered']
    #allocation27 [shape = 's32[1]{0}', space=sflag, size = 0x4, scoped, tag = 'scoped memory for tpu_custom_call.1']
    #allocation28 [shape = 'u8[8192]{0}', space=vmem, size = 0x2000, scoped, tag = 'output window, operand 0']
    %28 = vsyncpa [#allocation3], 0
    %s29 = scalar_lea.sflag [#allocation3], 1
    %30 = vsyncpa %s29, 0
    %31 = vsyncpa [#allocation6], 0
    %s32 = scalar_lea.sflag [#allocation6], 1
    %33 = vsyncpa %s32, 0
    %34 = vsyncpa [#allocation9], 0
    %35 = vsyncpa [#allocation12], 0
    %36 = vsyncpa [#allocation15], 0
    %37 = vsyncpa [#allocation18], 0
    %38 = vsyncpa [#allocation21], 0
    %39 = vsyncpa [#allocation24], 0
    %40 = vsyncpa [#allocation27], 0
    %41 = vsyncpa [#allocation4], 0
    %s42 = scalar_lea.sflag [#allocation4], 1
    %43 = vsyncpa %s42, 0
    loop: start=0, step=1, limit=4
    $region2: #{tpu_custom_call.1} parent=1 // loop_pre_header
      _
    $region3: #{tpu_custom_call.1} parent=1 // loop_header
      %s45 = sphi 0, %s49
      %p46 = scmp.ge.s32.totalorder %s45, 4
      %s55 = sphi 0, %s57
      %s58 = sphi 0, %s55
      %s59 = sphi 0, %s58
      %s75 = sphi 0, %s59
      %s81 = sphi 0, %s83
      %s84 = sphi 0, %s81
      %s85 = sphi 0, %s84
      %s101 = sphi 0, %s85
      %s105 = sphi 0, %s105
      %s107 = sphi 0, %s105
      %s108 = sphi 0, %s107
      %s122 = sphi 0, %s108
      %s126 = sphi 0, %s126
      %s128 = sphi 0, %s126
      %s129 = sphi 0, %s128
      %s143 = sphi 0, %s129
      %s147 = sphi 0, %s147
      %s149 = sphi 0, %s147
      %s150 = sphi 0, %s149
      %s164 = sphi 0, %s150
      %s168 = sphi 0, %s168
      %s170 = sphi 0, %s168
      %s171 = sphi 0, %s170
      %s185 = sphi 0, %s171
      %s189 = sphi 0, %s189
      %s191 = sphi 0, %s189
      %s192 = sphi 0, %s191
      %s206 = sphi 0, %s192
      %s210 = sphi 0, %s210
      %s212 = sphi 0, %s210
      %s213 = sphi 0, %s212
      %s227 = sphi 0, %s213
      %s231 = sphi 0, %s231
      %s233 = sphi 0, %s231
      %s234 = sphi 0, %s233
      %s248 = sphi 0, %s234
      %s252 = sphi 0, %s252
      %s254 = sphi 0, %s252
      %s255 = sphi 0, %s254
      %s269 = sphi 0, %s255
      %s273 = sphi 0, %s273
      %s275 = sphi 0, %s273
      %s276 = sphi 0, %s275
      %s290 = sphi 0, %s276
      %s294 = sphi 0, %s294
      %s296 = sphi 0, %s294
      %s297 = sphi 0, %s296
      %s311 = sphi 0, %s297
      %s315 = sphi 0, %s315
      %s317 = sphi 0, %s315
      %s318 = sphi 0, %s317
      %s332 = sphi 0, %s318
      %s336 = sphi 0, %s336
      %s338 = sphi 0, %s336
      %s339 = sphi 0, %s338
      %s353 = sphi 0, %s339
      %s357 = sphi 0, %s357
      %s359 = sphi 0, %s357
      %s360 = sphi 0, %s359
      %s374 = sphi 0, %s360
      %s378 = sphi 0, %s378
      %s380 = sphi 0, %s378
      %s381 = sphi 0, %s380
      %s395 = sphi 0, %s381
      %s399 = sphi 0, %s399
      %s401 = sphi 0, %s399
      %s402 = sphi 0, %s401
      %s416 = sphi 0, %s402
      %s420 = sphi 0, %s420
      %s422 = sphi 0, %s420
      %s423 = sphi 0, %s422
      %s437 = sphi 0, %s423
      %s441 = sphi 0, %s441
      %s443 = sphi 0, %s441
      %s444 = sphi 0, %s443
      %s458 = sphi 0, %s444
      %s462 = sphi 0, %s462
      %s464 = sphi 0, %s462
      %s465 = sphi 0, %s464
      %s479 = sphi 0, %s465
      %s483 = sphi 0, %s483
      %s485 = sphi 0, %s483
      %s486 = sphi 0, %s485
      %s500 = sphi 0, %s486
      %s504 = sphi 0, %s504
      %s506 = sphi 0, %s504
      %s507 = sphi 0, %s506
      %s521 = sphi 0, %s507
      %s525 = sphi 0, %s525
      %s527 = sphi 0, %s525
      %s528 = sphi 0, %s527
      %s542 = sphi 0, %s528
      %s548 = sphi 0, %s550
      %s551 = sphi 0, %s548
      %s552 = sphi 0, %s551
      %s568 = sphi 0, %s552
    $region4: #{tpu_custom_call.1} parent=1 // loop_header_branch
      %48 = sbr.rel (%p46) target = $region8
    $region5: #{tpu_custom_call.1} parent=1 // loop_body
      %s50 = ssub.s32 %s45, 1
      %s51 = ssub.s32 %s45, 2
      %s52 = sadd.s32 %s45, 1
      %s53 = ssub.s32 %s45, %s52
      %p54 = scmp.eq.s32.totalorder %s53, 0
      %s56 = sadd.s32 %s55, 1
      %s57 = scalar_select %p54, %s55, %s56
      %p60 = pneg %p54
      %p61 = scmp.eq.s32.totalorder %s45, 1
      %p62 = por %p60, %p61
      %p63 = scmp.ne.s32.totalorder %s55, %s58
      %p64 = scmp.eq.s32.totalorder %s45, 0
      %p65 = por %p63, %p64
      %p66 = scmp.ne.s32.totalorder %s55, %s58
      %p67 = scmp.eq.s32.totalorder %s50, 1
      %p68 = por %p66, %p67
      %p69 = scmp.ne.s32.totalorder %s58, %s59
      %p70 = scmp.eq.s32.totalorder %s50, 0
      %p71 = por %p69, %p70
      %p72 = scmp.ne.s32.totalorder %s58, %s59
      %p73 = scmp.eq.s32.totalorder %s51, 1
      %p74 = por %p72, %p73
      %p76 = scmp.ne.s32.totalorder %s59, %s75
      %p77 = scmp.eq.s32.totalorder %s51, 0
      %p78 = por %p76, %p77
      %s79 = ssub.s32 %s45, %s52
      %p80 = scmp.eq.s32.totalorder %s79, 0
      %s82 = sadd.s32 %s81, 1
      %s83 = scalar_select %p80, %s81, %s82
      %p86 = pneg %p80
      %p87 = scmp.eq.s32.totalorder %s45, 1
      %p88 = por %p86, %p87
      %p89 = scmp.ne.s32.totalorder %s81, %s84
      %p90 = scmp.eq.s32.totalorder %s45, 0
      %p91 = por %p89, %p90
      %p92 = scmp.ne.s32.totalorder %s81, %s84
      %p93 = scmp.eq.s32.totalorder %s50, 1
      %p94 = por %p92, %p93
      %p95 = scmp.ne.s32.totalorder %s84, %s85
      %p96 = scmp.eq.s32.totalorder %s50, 0
      %p97 = por %p95, %p96
      %p98 = scmp.ne.s32.totalorder %s84, %s85
      %p99 = scmp.eq.s32.totalorder %s51, 1
      %p100 = por %p98, %p99
      %p102 = scmp.ne.s32.totalorder %s85, %s101
      %p103 = scmp.eq.s32.totalorder %s51, 0
      %p104 = por %p102, %p103
      %s106 = sadd.s32 %s105, 1
      %p109 = scmp.eq.s32.totalorder %s45, 1
      %p110 = scmp.ne.s32.totalorder %s105, %s107
      %p111 = scmp.eq.s32.totalorder %s45, 0
      %p112 = por %p110, %p111
      %p113 = scmp.ne.s32.totalorder %s105, %s107
      %p114 = scmp.eq.s32.totalorder %s50, 1
      %p115 = por %p113, %p114
      %p116 = scmp.ne.s32.totalorder %s107, %s108
      %p117 = scmp.eq.s32.totalorder %s50, 0
      %p118 = por %p116, %p117
      %p119 = scmp.ne.s32.totalorder %s107, %s108
      %p120 = scmp.eq.s32.totalorder %s51, 1
      %p121 = por %p119, %p120
      %p123 = scmp.ne.s32.totalorder %s108, %s122
      %p124 = scmp.eq.s32.totalorder %s51, 0
      %p125 = por %p123, %p124
      %s127 = sadd.s32 %s126, 1
      %p130 = scmp.eq.s32.totalorder %s45, 1
      %p131 = scmp.ne.s32.totalorder %s126, %s128
      %p132 = scmp.eq.s32.totalorder %s45, 0
      %p133 = por %p131, %p132
      %p134 = scmp.ne.s32.totalorder %s126, %s128
      %p135 = scmp.eq.s32.totalorder %s50, 1
      %p136 = por %p134, %p135
      %p137 = scmp.ne.s32.totalorder %s128, %s129
      %p138 = scmp.eq.s32.totalorder %s50, 0
      %p139 = por %p137, %p138
      %p140 = scmp.ne.s32.totalorder %s128, %s129
      %p141 = scmp.eq.s32.totalorder %s51, 1
      %p142 = por %p140, %p141
      %p144 = scmp.ne.s32.totalorder %s129, %s143
      %p145 = scmp.eq.s32.totalorder %s51, 0
      %p146 = por %p144, %p145
      %s148 = sadd.s32 %s147, 1
      %p151 = scmp.eq.s32.totalorder %s45, 1
      %p152 = scmp.ne.s32.totalorder %s147, %s149
      %p153 = scmp.eq.s32.totalorder %s45, 0
      %p154 = por %p152, %p153
      %p155 = scmp.ne.s32.totalorder %s147, %s149
      %p156 = scmp.eq.s32.totalorder %s50, 1
      %p157 = por %p155, %p156
      %p158 = scmp.ne.s32.totalorder %s149, %s150
      %p159 = scmp.eq.s32.totalorder %s50, 0
      %p160 = por %p158, %p159
      %p161 = scmp.ne.s32.totalorder %s149, %s150
      %p162 = scmp.eq.s32.totalorder %s51, 1
      %p163 = por %p161, %p162
      %p165 = scmp.ne.s32.totalorder %s150, %s164
      %p166 = scmp.eq.s32.totalorder %s51, 0
      %p167 = por %p165, %p166
      %s169 = sadd.s32 %s168, 1
      %p172 = scmp.eq.s32.totalorder %s45, 1
      %p173 = scmp.ne.s32.totalorder %s168, %s170
      %p174 = scmp.eq.s32.totalorder %s45, 0
      %p175 = por %p173, %p174
      %p176 = scmp.ne.s32.totalorder %s168, %s170
      %p177 = scmp.eq.s32.totalorder %s50, 1
      %p178 = por %p176, %p177
      %p179 = scmp.ne.s32.totalorder %s170, %s171
      %p180 = scmp.eq.s32.totalorder %s50, 0
      %p181 = por %p179, %p180
      %p182 = scmp.ne.s32.totalorder %s170, %s171
      %p183 = scmp.eq.s32.totalorder %s51, 1
      %p184 = por %p182, %p183
      %p186 = scmp.ne.s32.totalorder %s171, %s185
      %p187 = scmp.eq.s32.totalorder %s51, 0
      %p188 = por %p186, %p187
      %s190 = sadd.s32 %s189, 1
      %p193 = scmp.eq.s32.totalorder %s45, 1
      %p194 = scmp.ne.s32.totalorder %s189, %s191
      %p195 = scmp.eq.s32.totalorder %s45, 0
      %p196 = por %p194, %p195
      %p197 = scmp.ne.s32.totalorder %s189, %s191
      %p198 = scmp.eq.s32.totalorder %s50, 1
      %p199 = por %p197, %p198
      %p200 = scmp.ne.s32.totalorder %s191, %s192
      %p201 = scmp.eq.s32.totalorder %s50, 0
      %p202 = por %p200, %p201
      %p203 = scmp.ne.s32.totalorder %s191, %s192
      %p204 = scmp.eq.s32.totalorder %s51, 1
      %p205 = por %p203, %p204
      %p207 = scmp.ne.s32.totalorder %s192, %s206
      %p208 = scmp.eq.s32.totalorder %s51, 0
      %p209 = por %p207, %p208
      %s211 = sadd.s32 %s210, 1
      %p214 = scmp.eq.s32.totalorder %s45, 1
      %p215 = scmp.ne.s32.totalorder %s210, %s212
      %p216 = scmp.eq.s32.totalorder %s45, 0
      %p217 = por %p215, %p216
      %p218 = scmp.ne.s32.totalorder %s210, %s212
      %p219 = scmp.eq.s32.totalorder %s50, 1
      %p220 = por %p218, %p219
      %p221 = scmp.ne.s32.totalorder %s212, %s213
      %p222 = scmp.eq.s32.totalorder %s50, 0
      %p223 = por %p221, %p222
      %p224 = scmp.ne.s32.totalorder %s212, %s213
      %p225 = scmp.eq.s32.totalorder %s51, 1
      %p226 = por %p224, %p225
      %p228 = scmp.ne.s32.totalorder %s213, %s227
      %p229 = scmp.eq.s32.totalorder %s51, 0
      %p230 = por %p228, %p229
      %s232 = sadd.s32 %s231, 1
      %p235 = scmp.eq.s32.totalorder %s45, 1
      %p236 = scmp.ne.s32.totalorder %s231, %s233
      %p237 = scmp.eq.s32.totalorder %s45, 0
      %p238 = por %p236, %p237
      %p239 = scmp.ne.s32.totalorder %s231, %s233
      %p240 = scmp.eq.s32.totalorder %s50, 1
      %p241 = por %p239, %p240
      %p242 = scmp.ne.s32.totalorder %s233, %s234
      %p243 = scmp.eq.s32.totalorder %s50, 0
      %p244 = por %p242, %p243
      %p245 = scmp.ne.s32.totalorder %s233, %s234
      %p246 = scmp.eq.s32.totalorder %s51, 1
      %p247 = por %p245, %p246
      %p249 = scmp.ne.s32.totalorder %s234, %s248
      %p250 = scmp.eq.s32.totalorder %s51, 0
      %p251 = por %p249, %p250
      %s253 = sadd.s32 %s252, 1
      %p256 = scmp.eq.s32.totalorder %s45, 1
      %p257 = scmp.ne.s32.totalorder %s252, %s254
      %p258 = scmp.eq.s32.totalorder %s45, 0
      %p259 = por %p257, %p258
      %p260 = scmp.ne.s32.totalorder %s252, %s254
      %p261 = scmp.eq.s32.totalorder %s50, 1
      %p262 = por %p260, %p261
      %p263 = scmp.ne.s32.totalorder %s254, %s255
      %p264 = scmp.eq.s32.totalorder %s50, 0
      %p265 = por %p263, %p264
      %p266 = scmp.ne.s32.totalorder %s254, %s255
      %p267 = scmp.eq.s32.totalorder %s51, 1
      %p268 = por %p266, %p267
      %p270 = scmp.ne.s32.totalorder %s255, %s269
      %p271 = scmp.eq.s32.totalorder %s51, 0
      %p272 = por %p270, %p271
      %s274 = sadd.s32 %s273, 1
      %p277 = scmp.eq.s32.totalorder %s45, 1
      %p278 = scmp.ne.s32.totalorder %s273, %s275
      %p279 = scmp.eq.s32.totalorder %s45, 0
      %p280 = por %p278, %p279
      %p281 = scmp.ne.s32.totalorder %s273, %s275
      %p282 = scmp.eq.s32.totalorder %s50, 1
      %p283 = por %p281, %p282
      %p284 = scmp.ne.s32.totalorder %s275, %s276
      %p285 = scmp.eq.s32.totalorder %s50, 0
      %p286 = por %p284, %p285
      %p287 = scmp.ne.s32.totalorder %s275, %s276
      %p288 = scmp.eq.s32.totalorder %s51, 1
      %p289 = por %p287, %p288
      %p291 = scmp.ne.s32.totalorder %s276, %s290
      %p292 = scmp.eq.s32.totalorder %s51, 0
      %p293 = por %p291, %p292
      %s295 = sadd.s32 %s294, 1
      %p298 = scmp.eq.s32.totalorder %s45, 1
      %p299 = scmp.ne.s32.totalorder %s294, %s296
      %p300 = scmp.eq.s32.totalorder %s45, 0
      %p301 = por %p299, %p300
      %p302 = scmp.ne.s32.totalorder %s294, %s296
      %p303 = scmp.eq.s32.totalorder %s50, 1
      %p304 = por %p302, %p303
      %p305 = scmp.ne.s32.totalorder %s296, %s297
      %p306 = scmp.eq.s32.totalorder %s50, 0
      %p307 = por %p305, %p306
      %p308 = scmp.ne.s32.totalorder %s296, %s297
      %p309 = scmp.eq.s32.totalorder %s51, 1
      %p310 = por %p308, %p309
      %p312 = scmp.ne.s32.totalorder %s297, %s311
      %p313 = scmp.eq.s32.totalorder %s51, 0
      %p314 = por %p312, %p313
      %s316 = sadd.s32 %s315, 1
      %p319 = scmp.eq.s32.totalorder %s45, 1
      %p320 = scmp.ne.s32.totalorder %s315, %s317
      %p321 = scmp.eq.s32.totalorder %s45, 0
      %p322 = por %p320, %p321
      %p323 = scmp.ne.s32.totalorder %s315, %s317
      %p324 = scmp.eq.s32.totalorder %s50, 1
      %p325 = por %p323, %p324
      %p326 = scmp.ne.s32.totalorder %s317, %s318
      %p327 = scmp.eq.s32.totalorder %s50, 0
      %p328 = por %p326, %p327
      %p329 = scmp.ne.s32.totalorder %s317, %s318
      %p330 = scmp.eq.s32.totalorder %s51, 1
      %p331 = por %p329, %p330
      %p333 = scmp.ne.s32.totalorder %s318, %s332
      %p334 = scmp.eq.s32.totalorder %s51, 0
      %p335 = por %p333, %p334
      %s337 = sadd.s32 %s336, 1
      %p340 = scmp.eq.s32.totalorder %s45, 1
      %p341 = scmp.ne.s32.totalorder %s336, %s338
      %p342 = scmp.eq.s32.totalorder %s45, 0
      %p343 = por %p341, %p342
      %p344 = scmp.ne.s32.totalorder %s336, %s338
      %p345 = scmp.eq.s32.totalorder %s50, 1
      %p346 = por %p344, %p345
      %p347 = scmp.ne.s32.totalorder %s338, %s339
      %p348 = scmp.eq.s32.totalorder %s50, 0
      %p349 = por %p347, %p348
      %p350 = scmp.ne.s32.totalorder %s338, %s339
      %p351 = scmp.eq.s32.totalorder %s51, 1
      %p352 = por %p350, %p351
      %p354 = scmp.ne.s32.totalorder %s339, %s353
      %p355 = scmp.eq.s32.totalorder %s51, 0
      %p356 = por %p354, %p355
      %s358 = sadd.s32 %s357, 1
      %p361 = scmp.eq.s32.totalorder %s45, 1
      %p362 = scmp.ne.s32.totalorder %s357, %s359
      %p363 = scmp.eq.s32.totalorder %s45, 0
      %p364 = por %p362, %p363
      %p365 = scmp.ne.s32.totalorder %s357, %s359
      %p366 = scmp.eq.s32.totalorder %s50, 1
      %p367 = por %p365, %p366
      %p368 = scmp.ne.s32.totalorder %s359, %s360
      %p369 = scmp.eq.s32.totalorder %s50, 0
      %p370 = por %p368, %p369
      %p371 = scmp.ne.s32.totalorder %s359, %s360
      %p372 = scmp.eq.s32.totalorder %s51, 1
      %p373 = por %p371, %p372
      %p375 = scmp.ne.s32.totalorder %s360, %s374
      %p376 = scmp.eq.s32.totalorder %s51, 0
      %p377 = por %p375, %p376
      %s379 = sadd.s32 %s378, 1
      %p382 = scmp.eq.s32.totalorder %s45, 1
      %p383 = scmp.ne.s32.totalorder %s378, %s380
      %p384 = scmp.eq.s32.totalorder %s45, 0
      %p385 = por %p383, %p384
      %p386 = scmp.ne.s32.totalorder %s378, %s380
      %p387 = scmp.eq.s32.totalorder %s50, 1
      %p388 = por %p386, %p387
      %p389 = scmp.ne.s32.totalorder %s380, %s381
      %p390 = scmp.eq.s32.totalorder %s50, 0
      %p391 = por %p389, %p390
      %p392 = scmp.ne.s32.totalorder %s380, %s381
      %p393 = scmp.eq.s32.totalorder %s51, 1
      %p394 = por %p392, %p393
      %p396 = scmp.ne.s32.totalorder %s381, %s395
      %p397 = scmp.eq.s32.totalorder %s51, 0
      %p398 = por %p396, %p397
      %s400 = sadd.s32 %s399, 1
      %p403 = scmp.eq.s32.totalorder %s45, 1
      %p404 = scmp.ne.s32.totalorder %s399, %s401
      %p405 = scmp.eq.s32.totalorder %s45, 0
      %p406 = por %p404, %p405
      %p407 = scmp.ne.s32.totalorder %s399, %s401
      %p408 = scmp.eq.s32.totalorder %s50, 1
      %p409 = por %p407, %p408
      %p410 = scmp.ne.s32.totalorder %s401, %s402
      %p411 = scmp.eq.s32.totalorder %s50, 0
      %p412 = por %p410, %p411
      %p413 = scmp.ne.s32.totalorder %s401, %s402
      %p414 = scmp.eq.s32.totalorder %s51, 1
      %p415 = por %p413, %p414
      %p417 = scmp.ne.s32.totalorder %s402, %s416
      %p418 = scmp.eq.s32.totalorder %s51, 0
      %p419 = por %p417, %p418
      %s421 = sadd.s32 %s420, 1
      %p424 = scmp.eq.s32.totalorder %s45, 1
      %p425 = scmp.ne.s32.totalorder %s420, %s422
      %p426 = scmp.eq.s32.totalorder %s45, 0
      %p427 = por %p425, %p426
      %p428 = scmp.ne.s32.totalorder %s420, %s422
      %p429 = scmp.eq.s32.totalorder %s50, 1
      %p430 = por %p428, %p429
      %p431 = scmp.ne.s32.totalorder %s422, %s423
      %p432 = scmp.eq.s32.totalorder %s50, 0
      %p433 = por %p431, %p432
      %p434 = scmp.ne.s32.totalorder %s422, %s423
      %p435 = scmp.eq.s32.totalorder %s51, 1
      %p436 = por %p434, %p435
      %p438 = scmp.ne.s32.totalorder %s423, %s437
      %p439 = scmp.eq.s32.totalorder %s51, 0
      %p440 = por %p438, %p439
      %s442 = sadd.s32 %s441, 1
      %p445 = scmp.eq.s32.totalorder %s45, 1
      %p446 = scmp.ne.s32.totalorder %s441, %s443
      %p447 = scmp.eq.s32.totalorder %s45, 0
      %p448 = por %p446, %p447
      %p449 = scmp.ne.s32.totalorder %s441, %s443
      %p450 = scmp.eq.s32.totalorder %s50, 1
      %p451 = por %p449, %p450
      %p452 = scmp.ne.s32.totalorder %s443, %s444
      %p453 = scmp.eq.s32.totalorder %s50, 0
      %p454 = por %p452, %p453
      %p455 = scmp.ne.s32.totalorder %s443, %s444
      %p456 = scmp.eq.s32.totalorder %s51, 1
      %p457 = por %p455, %p456
      %p459 = scmp.ne.s32.totalorder %s444, %s458
      %p460 = scmp.eq.s32.totalorder %s51, 0
      %p461 = por %p459, %p460
      %s463 = sadd.s32 %s462, 1
      %p466 = scmp.eq.s32.totalorder %s45, 1
      %p467 = scmp.ne.s32.totalorder %s462, %s464
      %p468 = scmp.eq.s32.totalorder %s45, 0
      %p469 = por %p467, %p468
      %p470 = scmp.ne.s32.totalorder %s462, %s464
      %p471 = scmp.eq.s32.totalorder %s50, 1
      %p472 = por %p470, %p471
      %p473 = scmp.ne.s32.totalorder %s464, %s465
      %p474 = scmp.eq.s32.totalorder %s50, 0
      %p475 = por %p473, %p474
      %p476 = scmp.ne.s32.totalorder %s464, %s465
      %p477 = scmp.eq.s32.totalorder %s51, 1
      %p478 = por %p476, %p477
      %p480 = scmp.ne.s32.totalorder %s465, %s479
      %p481 = scmp.eq.s32.totalorder %s51, 0
      %p482 = por %p480, %p481
      %s484 = sadd.s32 %s483, 1
      %p487 = scmp.eq.s32.totalorder %s45, 1
      %p488 = scmp.ne.s32.totalorder %s483, %s485
      %p489 = scmp.eq.s32.totalorder %s45, 0
      %p490 = por %p488, %p489
      %p491 = scmp.ne.s32.totalorder %s483, %s485
      %p492 = scmp.eq.s32.totalorder %s50, 1
      %p493 = por %p491, %p492
      %p494 = scmp.ne.s32.totalorder %s485, %s486
      %p495 = scmp.eq.s32.totalorder %s50, 0
      %p496 = por %p494, %p495
      %p497 = scmp.ne.s32.totalorder %s485, %s486
      %p498 = scmp.eq.s32.totalorder %s51, 1
      %p499 = por %p497, %p498
      %p501 = scmp.ne.s32.totalorder %s486, %s500
      %p502 = scmp.eq.s32.totalorder %s51, 0
      %p503 = por %p501, %p502
      %s505 = sadd.s32 %s504, 1
      %p508 = scmp.eq.s32.totalorder %s45, 1
      %p509 = scmp.ne.s32.totalorder %s504, %s506
      %p510 = scmp.eq.s32.totalorder %s45, 0
      %p511 = por %p509, %p510
      %p512 = scmp.ne.s32.totalorder %s504, %s506
      %p513 = scmp.eq.s32.totalorder %s50, 1
      %p514 = por %p512, %p513
      %p515 = scmp.ne.s32.totalorder %s506, %s507
      %p516 = scmp.eq.s32.totalorder %s50, 0
      %p517 = por %p515, %p516
      %p518 = scmp.ne.s32.totalorder %s506, %s507
      %p519 = scmp.eq.s32.totalorder %s51, 1
      %p520 = por %p518, %p519
      %p522 = scmp.ne.s32.totalorder %s507, %s521
      %p523 = scmp.eq.s32.totalorder %s51, 0
      %p524 = por %p522, %p523
      %s526 = sadd.s32 %s525, 1
      %p529 = scmp.eq.s32.totalorder %s45, 1
      %p530 = scmp.ne.s32.totalorder %s525, %s527
      %p531 = scmp.eq.s32.totalorder %s45, 0
      %p532 = por %p530, %p531
      %p533 = scmp.ne.s32.totalorder %s525, %s527
      %p534 = scmp.eq.s32.totalorder %s50, 1
      %p535 = por %p533, %p534
      %p536 = scmp.ne.s32.totalorder %s527, %s528
      %p537 = scmp.eq.s32.totalorder %s50, 0
      %p538 = por %p536, %p537
      %p539 = scmp.ne.s32.totalorder %s527, %s528
      %p540 = scmp.eq.s32.totalorder %s51, 1
      %p541 = por %p539, %p540
      %p543 = scmp.ne.s32.totalorder %s528, %s542
      %p544 = scmp.eq.s32.totalorder %s51, 0
      %p545 = por %p543, %p544
      %s546 = ssub.s32 %s45, %s52
      %p547 = scmp.eq.s32.totalorder %s546, 0
      %s549 = sadd.s32 %s548, 1
      %s550 = scalar_select %p547, %s548, %s549
      %p553 = pneg %p547
      %p554 = scmp.eq.s32.totalorder %s45, 1
      %p555 = por %p553, %p554
      %p556 = scmp.ne.s32.totalorder %s548, %s551
      %p557 = scmp.eq.s32.totalorder %s45, 0
      %p558 = por %p556, %p557
      %p559 = scmp.ne.s32.totalorder %s548, %s551
      %p560 = scmp.eq.s32.totalorder %s50, 1
      %p561 = por %p559, %p560
      %p562 = scmp.ne.s32.totalorder %s551, %s552
      %p563 = scmp.eq.s32.totalorder %s50, 0
      %p564 = por %p562, %p563
      %p565 = scmp.ne.s32.totalorder %s551, %s552
      %p566 = scmp.eq.s32.totalorder %s51, 1
      %p567 = por %p565, %p566
      %p569 = scmp.ne.s32.totalorder %s552, %s568
      %p570 = scmp.eq.s32.totalorder %s51, 0
      %p571 = por %p569, %p570
      %p572 = scmp.le.s32.totalorder 1, %s45
      %p573 = scmp.lt.s32.totalorder %s45, 3
      %p574 = pnand %p572, %p573
      %p575 = pneg %p574
      // Predicated region
      $region9: #{tpu_custom_call.1} parent=5 // pred_check
        _
      $region10: #{tpu_custom_call.1} parent=5 // pred_check_branch
        %577 = sbr.rel (%p574) target = $region12
      $region11: #{tpu_custom_call.1} parent=5 // pred_region
        %s578 = ssub.s32 %s45, 1
        // Predicated region
        $region13: #{tpu_custom_call.1} parent=11 // pred_check
          %p579 = pneg %p118
        $region14: #{tpu_custom_call.1} parent=11 // pred_check_branch
          %581 = sbr.rel (%p579) target = $region16
        $region15: #{tpu_custom_call.1} parent=11 // pred_region
          _
        $region16: #{tpu_custom_call.1} parent=11 // pred_fallthru
          _
        // Predicated region
        $region17: #{tpu_custom_call.1} parent=11 // pred_check
          %p582 = pneg %p139
        $region18: #{tpu_custom_call.1} parent=11 // pred_check_branch
          %584 = sbr.rel (%p582) target = $region20
        $region19: #{tpu_custom_call.1} parent=11 // pred_region
          %s586 = ssub.s32 16, 16
          %587 = vsyncadd [#allocation6], %s586
          %s589 = sshll.u32 [#allocation7], 4
          %s590 = int_to_ptr.vmem [resolvable:$true] %s589
          %592 = dma.hbm_to_vmem [thread:$0]  %s3, 16, %s590, [#allocation6]
        $region20: #{tpu_custom_call.1} parent=11 // pred_fallthru
          _
        // Predicated region
        $region21: #{tpu_custom_call.1} parent=11 // pred_check
          %p593 = pneg %p160
        $region22: #{tpu_custom_call.1} parent=11 // pred_check_branch
          %595 = sbr.rel (%p593) target = $region24
        $region23: #{tpu_custom_call.1} parent=11 // pred_region
          %s597 = ssub.s32 512, 512
          %598 = vsyncadd [#allocation9], %s597
          %s599 = sshll.u32 [#allocation8], 4
          %s600 = int_to_ptr.vmem [resolvable:$true] %s599
          %605 = dma.hbm_to_vmem [thread:$0]  %s4, 512, %s600, [#allocation9], 128, 128, 8
        $region24: #{tpu_custom_call.1} parent=11 // pred_fallthru
          _
        // Predicated region
        $region25: #{tpu_custom_call.1} parent=11 // pred_check
          %p606 = pneg %p181
        $region26: #{tpu_custom_call.1} parent=11 // pred_check_branch
          %608 = sbr.rel (%p606) target = $region28
        $region27: #{tpu_custom_call.1} parent=11 // pred_region
          %s610 = ssub.s32 16, 16
          %611 = vsyncadd [#allocation9], %s610
          %s613 = sshll.u32 [#allocation10], 4
          %s614 = int_to_ptr.vmem [resolvable:$true] %s613
          %616 = dma.hbm_to_vmem [thread:$0]  %s5, 16, %s614, [#allocation9]
        $region28: #{tpu_custom_call.1} parent=11 // pred_fallthru
          _
        // Predicated region
        $region29: #{tpu_custom_call.1} parent=11 // pred_check
          %p617 = pneg %p202
        $region30: #{tpu_custom_call.1} parent=11 // pred_check_branch
          %619 = sbr.rel (%p617) target = $region32
        $region31: #{tpu_custom_call.1} parent=11 // pred_region
          %s621 = ssub.s32 512, 512
          %622 = vsyncadd [#allocation12], %s621
          %s623 = sshll.u32 [#allocation11], 4
          %s624 = int_to_ptr.vmem [resolvable:$true] %s623
          %629 = dma.hbm_to_vmem [thread:$0]  %s6, 512, %s624, [#allocation12], 128, 128, 8
        $region32: #{tpu_custom_call.1} parent=11 // pred_fallthru
          _
        // Predicated region
        $region33: #{tpu_custom_call.1} parent=11 // pred_check
          %p630 = pneg %p223
        $region34: #{tpu_custom_call.1} parent=11 // pred_check_branch
          %632 = sbr.rel (%p630) target = $region36
        $region35: #{tpu_custom_call.1} parent=11 // pred_region
          %s634 = ssub.s32 16, 16
          %635 = vsyncadd [#allocation12], %s634
          %s637 = sshll.u32 [#allocation13], 4
          %s638 = int_to_ptr.vmem [resolvable:$true] %s637
          %640 = dma.hbm_to_vmem [thread:$0]  %s7, 16, %s638, [#allocation12]
        $region36: #{tpu_custom_call.1} parent=11 // pred_fallthru
          _
        // Predicated region
        $region37: #{tpu_custom_call.1} parent=11 // pred_check
          %p641 = pneg %p244
        $region38: #{tpu_custom_call.1} parent=11 // pred_check_branch
          %643 = sbr.rel (%p641) target = $region40
        $region39: #{tpu_custom_call.1} parent=11 // pred_region
          %s645 = ssub.s32 16, 16
          %646 = vsyncadd [#allocation15], %s645
          %s648 = sshll.u32 [#allocation14], 4
          %s649 = int_to_ptr.vmem [resolvable:$true] %s648
          %651 = dma.hbm_to_vmem [thread:$0]  %s8, 16, %s649, [#allocation15]
        $region40: #{tpu_custom_call.1} parent=11 // pred_fallthru
          _
        // Predicated region
        $region41: #{tpu_custom_call.1} parent=11 // pred_check
          %p652 = pneg %p265
        $region42: #{tpu_custom_call.1} parent=11 // pred_check_branch
          %654 = sbr.rel (%p652) target = $region44
        $region43: #{tpu_custom_call.1} parent=11 // pred_region
          %s656 = ssub.s32 16, 16
          %657 = vsyncadd [#allocation15], %s656
          %s659 = sshll.u32 [#allocation16], 4
          %s660 = int_to_ptr.vmem [resolvable:$true] %s659
          %662 = dma.hbm_to_vmem [thread:$0]  %s9, 16, %s660, [#allocation15]
        $region44: #{tpu_custom_call.1} parent=11 // pred_fallthru
          _
        // Predicated region
        $region45: #{tpu_custom_call.1} parent=11 // pred_check
          %p663 = pneg %p286
        $region46: #{tpu_custom_call.1} parent=11 // pred_check_branch
          %665 = sbr.rel (%p663) target = $region48
        $region47: #{tpu_custom_call.1} parent=11 // pred_region
          %s667 = ssub.s32 256, 256
          %668 = vsyncadd [#allocation18], %s667
          %s669 = sshll.u32 [#allocation17], 4
          %s670 = int_to_ptr.vmem [resolvable:$true] %s669
          %675 = dma.hbm_to_vmem [thread:$0]  %s10, 256, %s670, [#allocation18], 128, 128, 8
        $region48: #{tpu_custom_call.1} parent=11 // pred_fallthru
          _
        // Predicated region
        $region49: #{tpu_custom_call.1} parent=11 // pred_check
          %p676 = pneg %p307
        $region50: #{tpu_custom_call.1} parent=11 // pred_check_branch
          %678 = sbr.rel (%p676) target = $region52
        $region51: #{tpu_custom_call.1} parent=11 // pred_region
          %s680 = ssub.s32 16, 16
          %681 = vsyncadd [#allocation18], %s680
          %s683 = sshll.u32 [#allocation19], 4
          %s684 = int_to_ptr.vmem [resolvable:$true] %s683
          %686 = dma.hbm_to_vmem [thread:$0]  %s11, 16, %s684, [#allocation18]
        $region52: #{tpu_custom_call.1} parent=11 // pred_fallthru
          _
        // Predicated region
        $region53: #{tpu_custom_call.1} parent=11 // pred_check
          %p687 = pneg %p328
        $region54: #{tpu_custom_call.1} parent=11 // pred_check_branch
          %689 = sbr.rel (%p687) target = $region56
        $region55: #{tpu_custom_call.1} parent=11 // pred_region
          _
        $region56: #{tpu_custom_call.1} parent=11 // pred_fallthru
          _
        // Predicated region
        $region57: #{tpu_custom_call.1} parent=11 // pred_check
          %p690 = pneg %p349
        $region58: #{tpu_custom_call.1} parent=11 // pred_check_branch
          %692 = sbr.rel (%p690) target = $region60
        $region59: #{tpu_custom_call.1} parent=11 // pred_region
          %s694 = ssub.s32 256, 256
          %695 = vsyncadd [#allocation21], %s694
          %s696 = sshll.u32 [#allocation20], 4
          %s697 = int_to_ptr.vmem [resolvable:$true] %s696
          %702 = dma.hbm_to_vmem [thread:$0]  %s13, 256, %s697, [#allocation21], 128, 128, 8
        $region60: #{tpu_custom_call.1} parent=11 // pred_fallthru
          _
        // Predicated region
        $region61: #{tpu_custom_call.1} parent=11 // pred_check
          %p703 = pneg %p370
        $region62: #{tpu_custom_call.1} parent=11 // pred_check_branch
          %705 = sbr.rel (%p703) target = $region64
        $region63: #{tpu_custom_call.1} parent=11 // pred_region
          %s707 = ssub.s32 16, 16
          %708 = vsyncadd [#allocation21], %s707
          %s710 = sshll.u32 [#allocation22], 4
          %s711 = int_to_ptr.vmem [resolvable:$true] %s710
          %713 = dma.hbm_to_vmem [thread:$0]  %s14, 16, %s711, [#allocation21]
        $region64: #{tpu_custom_call.1} parent=11 // pred_fallthru
          _
        // Predicated region
        $region65: #{tpu_custom_call.1} parent=11 // pred_check
          %p714 = pneg %p391
        $region66: #{tpu_custom_call.1} parent=11 // pred_check_branch
          %716 = sbr.rel (%p714) target = $region68
        $region67: #{tpu_custom_call.1} parent=11 // pred_region
          %s718 = ssub.s32 16, 16
          %719 = vsyncadd [#allocation24], %s718
          %s721 = sshll.u32 [#allocation23], 4
          %s722 = int_to_ptr.vmem [resolvable:$true] %s721
          %724 = dma.hbm_to_vmem [thread:$0]  %s15, 16, %s722, [#allocation24]
        $region68: #{tpu_custom_call.1} parent=11 // pred_fallthru
          _
        // Predicated region
        $region69: #{tpu_custom_call.1} parent=11 // pred_check
          %p725 = pneg %p412
        $region70: #{tpu_custom_call.1} parent=11 // pred_check_branch
          %727 = sbr.rel (%p725) target = $region72
        $region71: #{tpu_custom_call.1} parent=11 // pred_region
          %s729 = ssub.s32 16, 16
          %730 = vsyncadd [#allocation24], %s729
          %s732 = sshll.u32 [#allocation25], 4
          %s733 = int_to_ptr.vmem [resolvable:$true] %s732
          %735 = dma.hbm_to_vmem [thread:$0]  %s16, 16, %s733, [#allocation24]
        $region72: #{tpu_custom_call.1} parent=11 // pred_fallthru
          _
        // Predicated region
        $region73: #{tpu_custom_call.1} parent=11 // pred_check
          %p736 = pneg %p433
        $region74: #{tpu_custom_call.1} parent=11 // pred_check_branch
          %738 = sbr.rel (%p736) target = $region76
        $region75: #{tpu_custom_call.1} parent=11 // pred_region
          _
        $region76: #{tpu_custom_call.1} parent=11 // pred_fallthru
          _
        // Predicated region
        $region77: #{tpu_custom_call.1} parent=11 // pred_check
          %p739 = pneg %p454
        $region78: #{tpu_custom_call.1} parent=11 // pred_check_branch
          %741 = sbr.rel (%p739) target = $region80
        $region79: #{tpu_custom_call.1} parent=11 // pred_region
          %s743 = ssub.s32 16, 16
          %744 = vsyncadd [#allocation27], %s743
          %s746 = sshll.u32 [#allocation26], 4
          %s747 = int_to_ptr.vmem [resolvable:$true] %s746
          %749 = dma.hbm_to_vmem [thread:$0]  %s18, 16, %s747, [#allocation27]
        $region80: #{tpu_custom_call.1} parent=11 // pred_fallthru
          _
        // Predicated region
        $region81: #{tpu_custom_call.1} parent=11 // pred_check
          %p750 = pneg %p475
        $region82: #{tpu_custom_call.1} parent=11 // pred_check_branch
          %752 = sbr.rel (%p750) target = $region84
        $region83: #{tpu_custom_call.1} parent=11 // pred_region
          _
        $region84: #{tpu_custom_call.1} parent=11 // pred_fallthru
          _
        // Predicated region
        $region85: #{tpu_custom_call.1} parent=11 // pred_check
          %p753 = pneg %p496
        $region86: #{tpu_custom_call.1} parent=11 // pred_check_branch
          %755 = sbr.rel (%p753) target = $region88
        $region87: #{tpu_custom_call.1} parent=11 // pred_region
          _
        $region88: #{tpu_custom_call.1} parent=11 // pred_fallthru
          _
        // Predicated region
        $region89: #{tpu_custom_call.1} parent=11 // pred_check
          %p756 = pneg %p517
        $region90: #{tpu_custom_call.1} parent=11 // pred_check_branch
          %758 = sbr.rel (%p756) target = $region92
        $region91: #{tpu_custom_call.1} parent=11 // pred_region
          _
        $region92: #{tpu_custom_call.1} parent=11 // pred_fallthru
          _
        // Predicated region
        $region93: #{tpu_custom_call.1} parent=11 // pred_check
          %p759 = pneg %p538
        $region94: #{tpu_custom_call.1} parent=11 // pred_check_branch
          %761 = sbr.rel (%p759) target = $region96
        $region95: #{tpu_custom_call.1} parent=11 // pred_region
          _
        $region96: #{tpu_custom_call.1} parent=11 // pred_fallthru
          _
      $region12: #{tpu_custom_call.1} parent=5 // pred_fallthru
        _
      %p762 = scmp.lt.s32.totalorder %s45, 2
      // Predicated region
      $region97: #{tpu_custom_call.1} parent=5 // pred_check
        %p763 = pneg %p762
      $region98: #{tpu_custom_call.1} parent=5 // pred_check_branch
        %765 = sbr.rel (%p763) target = $region100
      $region99: #{tpu_custom_call.1} parent=5 // pred_region
        // Predicated region
        $region101: #{tpu_custom_call.1} parent=99 // pred_check
          %p766 = pneg %p65
        $region102: #{tpu_custom_call.1} parent=99 // pred_check_branch
          %768 = sbr.rel (%p766) target = $region104
        $region103: #{tpu_custom_call.1} parent=99 // pred_region
          %s769 = sand.u32 %s55, 1
          %s770 = scalar_lea.sflag [#allocation3], %s769
          %s771 = sand.u32 %s55, 1
          %s772 = smul.addr %s771, 8
          %s773 = scalar_lea.vmem [#allocation2], %s772
          %s775 = ssub.s32 128, 128
          %776 = vsyncadd %s770, %s775
          %s777 = smul.addr %s45, 128
          %s778 = scalar_lea.hbm %s0, %s777
          %s780 = sshll.u32 %s773, 4
          %s781 = int_to_ptr.vmem [resolvable:$true] %s780
          %783 = dma.hbm_to_vmem [thread:$0]  %s778, 128, %s781, %s770
        $region104: #{tpu_custom_call.1} parent=99 // pred_fallthru
          _
        // Predicated region
        $region105: #{tpu_custom_call.1} parent=99 // pred_check
          %p784 = pneg %p91
        $region106: #{tpu_custom_call.1} parent=99 // pred_check_branch
          %786 = sbr.rel (%p784) target = $region108
        $region107: #{tpu_custom_call.1} parent=99 // pred_region
          %s787 = sand.u32 %s45, 1
          %s788 = scalar_lea.sflag [#allocation6], %s787
          %s789 = sand.u32 %s81, 1
          %s790 = smul.addr %s789, 8
          %s791 = scalar_lea.vmem [#allocation5], %s790
          %s793 = ssub.s32 128, 128
          %794 = vsyncadd %s788, %s793
          %s795 = smul.addr %s45, 128
          %s796 = scalar_lea.hbm %s1, %s795
          %s798 = sshll.u32 %s791, 4
          %s799 = int_to_ptr.vmem [resolvable:$true] %s798
          %801 = dma.hbm_to_vmem [thread:$0]  %s796, 128, %s799, %s788
        $region108: #{tpu_custom_call.1} parent=99 // pred_fallthru
          _
      $region100: #{tpu_custom_call.1} parent=5 // pred_fallthru
        _
      %p802 = scmp.le.s32.totalorder 1, %s45
      %p803 = scmp.lt.s32.totalorder %s45, 3
      %p804 = pnand %p802, %p803
      %p805 = pneg %p804
      // Predicated region
      $region109: #{tpu_custom_call.1} parent=5 // pred_check
        _
      $region110: #{tpu_custom_call.1} parent=5 // pred_check_branch
        %807 = sbr.rel (%p804) target = $region112
      $region111: #{tpu_custom_call.1} parent=5 // pred_region
        %s808 = ssub.s32 %s45, 1
        %s809 = sand.u32 %s58, 1
        %s810 = scalar_lea.sflag [#allocation3], %s809
        %s811 = sand.u32 %s58, 1
        %s812 = smul.addr %s811, 8
        %s813 = scalar_lea.vmem [#allocation2], %s812
        // Predicated region
        $region113: #{tpu_custom_call.1} parent=111 // pred_check
          %p814 = pneg %p71
        $region114: #{tpu_custom_call.1} parent=111 // pred_check_branch
          %816 = sbr.rel (%p814) target = $region116
        $region115: #{tpu_custom_call.1} parent=111 // pred_region
          %817 = dma.done %s810, 128
        $region116: #{tpu_custom_call.1} parent=111 // pred_fallthru
          _
        %s818 = sand.u32 %s50, 1
        %s819 = scalar_lea.sflag [#allocation6], %s818
        %s820 = sand.u32 %s84, 1
        %s821 = smul.addr %s820, 8
        %s822 = scalar_lea.vmem [#allocation5], %s821
        // Predicated region
        $region117: #{tpu_custom_call.1} parent=111 // pred_check
          %p823 = pneg %p97
        $region118: #{tpu_custom_call.1} parent=111 // pred_check_branch
          %825 = sbr.rel (%p823) target = $region120
        $region119: #{tpu_custom_call.1} parent=111 // pred_region
          %826 = dma.done %s819, 128
        $region120: #{tpu_custom_call.1} parent=111 // pred_fallthru
          _
        // Predicated region
        $region121: #{tpu_custom_call.1} parent=111 // pred_check
          %p827 = pneg %p139
        $region122: #{tpu_custom_call.1} parent=111 // pred_check_branch
          %829 = sbr.rel (%p827) target = $region124
        $region123: #{tpu_custom_call.1} parent=111 // pred_region
          %830 = dma.done [#allocation6], 16
        $region124: #{tpu_custom_call.1} parent=111 // pred_fallthru
          _
        // Predicated region
        $region125: #{tpu_custom_call.1} parent=111 // pred_check
          %p831 = pneg %p160
        $region126: #{tpu_custom_call.1} parent=111 // pred_check_branch
          %833 = sbr.rel (%p831) target = $region128
        $region127: #{tpu_custom_call.1} parent=111 // pred_region
          %834 = dma.done [#allocation9], 512
        $region128: #{tpu_custom_call.1} parent=111 // pred_fallthru
          _
        // Predicated region
        $region129: #{tpu_custom_call.1} parent=111 // pred_check
          %p835 = pneg %p181
        $region130: #{tpu_custom_call.1} parent=111 // pred_check_branch
          %837 = sbr.rel (%p835) target = $region132
        $region131: #{tpu_custom_call.1} parent=111 // pred_region
          %838 = dma.done [#allocation9], 16
        $region132: #{tpu_custom_call.1} parent=111 // pred_fallthru
          _
        // Predicated region
        $region133: #{tpu_custom_call.1} parent=111 // pred_check
          %p839 = pneg %p202
        $region134: #{tpu_custom_call.1} parent=111 // pred_check_branch
          %841 = sbr.rel (%p839) target = $region136
        $region135: #{tpu_custom_call.1} parent=111 // pred_region
          %842 = dma.done [#allocation12], 512
        $region136: #{tpu_custom_call.1} parent=111 // pred_fallthru
          _
        // Predicated region
        $region137: #{tpu_custom_call.1} parent=111 // pred_check
          %p843 = pneg %p223
        $region138: #{tpu_custom_call.1} parent=111 // pred_check_branch
          %845 = sbr.rel (%p843) target = $region140
        $region139: #{tpu_custom_call.1} parent=111 // pred_region
          %846 = dma.done [#allocation12], 16
        $region140: #{tpu_custom_call.1} parent=111 // pred_fallthru
          _
        // Predicated region
        $region141: #{tpu_custom_call.1} parent=111 // pred_check
          %p847 = pneg %p244
        $region142: #{tpu_custom_call.1} parent=111 // pred_check_branch
          %849 = sbr.rel (%p847) target = $region144
        $region143: #{tpu_custom_call.1} parent=111 // pred_region
          %850 = dma.done [#allocation15], 16
        $region144: #{tpu_custom_call.1} parent=111 // pred_fallthru
          _
        // Predicated region
        $region145: #{tpu_custom_call.1} parent=111 // pred_check
          %p851 = pneg %p265
        $region146: #{tpu_custom_call.1} parent=111 // pred_check_branch
          %853 = sbr.rel (%p851) target = $region148
        $region147: #{tpu_custom_call.1} parent=111 // pred_region
          %854 = dma.done [#allocation15], 16
        $region148: #{tpu_custom_call.1} parent=111 // pred_fallthru
          _
        // Predicated region
        $region149: #{tpu_custom_call.1} parent=111 // pred_check
          %p855 = pneg %p286
        $region150: #{tpu_custom_call.1} parent=111 // pred_check_branch
          %857 = sbr.rel (%p855) target = $region152
        $region151: #{tpu_custom_call.1} parent=111 // pred_region
          %858 = dma.done [#allocation18], 256
        $region152: #{tpu_custom_call.1} parent=111 // pred_fallthru
          _
        // Predicated region
        $region153: #{tpu_custom_call.1} parent=111 // pred_check
          %p859 = pneg %p307
        $region154: #{tpu_custom_call.1} parent=111 // pred_check_branch
          %861 = sbr.rel (%p859) target = $region156
        $region155: #{tpu_custom_call.1} parent=111 // pred_region
          %862 = dma.done [#allocation18], 16
        $region156: #{tpu_custom_call.1} parent=111 // pred_fallthru
          _
        // Predicated region
        $region157: #{tpu_custom_call.1} parent=111 // pred_check
          %p863 = pneg %p349
        $region158: #{tpu_custom_call.1} parent=111 // pred_check_branch
          %865 = sbr.rel (%p863) target = $region160
        $region159: #{tpu_custom_call.1} parent=111 // pred_region
          %866 = dma.done [#allocation21], 256
        $region160: #{tpu_custom_call.1} parent=111 // pred_fallthru
          _
        // Predicated region
        $region161: #{tpu_custom_call.1} parent=111 // pred_check
          %p867 = pneg %p370
        $region162: #{tpu_custom_call.1} parent=111 // pred_check_branch
          %869 = sbr.rel (%p867) target = $region164
        $region163: #{tpu_custom_call.1} parent=111 // pred_region
          %870 = dma.done [#allocation21], 16
        $region164: #{tpu_custom_call.1} parent=111 // pred_fallthru
          _
        // Predicated region
        $region165: #{tpu_custom_call.1} parent=111 // pred_check
          %p871 = pneg %p391
        $region166: #{tpu_custom_call.1} parent=111 // pred_check_branch
          %873 = sbr.rel (%p871) target = $region168
        $region167: #{tpu_custom_call.1} parent=111 // pred_region
          %874 = dma.done [#allocation24], 16
        $region168: #{tpu_custom_call.1} parent=111 // pred_fallthru
          _
        // Predicated region
        $region169: #{tpu_custom_call.1} parent=111 // pred_check
          %p875 = pneg %p412
        $region170: #{tpu_custom_call.1} parent=111 // pred_check_branch
          %877 = sbr.rel (%p875) target = $region172
        $region171: #{tpu_custom_call.1} parent=111 // pred_region
          %878 = dma.done [#allocation24], 16
        $region172: #{tpu_custom_call.1} parent=111 // pred_fallthru
          _
        // Predicated region
        $region173: #{tpu_custom_call.1} parent=111 // pred_check
          %p879 = pneg %p454
        $region174: #{tpu_custom_call.1} parent=111 // pred_check_branch
          %881 = sbr.rel (%p879) target = $region176
        $region175: #{tpu_custom_call.1} parent=111 // pred_region
          %882 = dma.done [#allocation27], 16
        $region176: #{tpu_custom_call.1} parent=111 // pred_fallthru
          _
        %s883 = sand.u32 %s58, 1
        %s884 = scalar_lea.sflag [#allocation3], %s883
        %s885 = sand.u32 %s58, 1
        %s886 = smul.addr %s885, 8
        %s887 = scalar_lea.vmem [#allocation2], %s886
        %p888 = pneg %p71
        %p889 = pneg %p68
        %s890 = sand.u32 %s50, 1
        %s891 = scalar_lea.sflag [#allocation6], %s890
        %s892 = sand.u32 %s84, 1
        %s893 = smul.addr %s892, 8
        %s894 = scalar_lea.vmem [#allocation5], %s893
        %p895 = pneg %p97
        %p896 = pneg %p94
        %p897 = pneg %p118
        %p898 = pneg %p115
        %p899 = pneg %p139
        %p900 = pneg %p136
        %p901 = pneg %p160
        %p902 = pneg %p157
        %p903 = pneg %p181
        %p904 = pneg %p178
        %p905 = pneg %p202
        %p906 = pneg %p199
        %p907 = pneg %p223
        %p908 = pneg %p220
        %p909 = pneg %p244
        %p910 = pneg %p241
        %p911 = pneg %p265
        %p912 = pneg %p262
        %p913 = pneg %p286
        %p914 = pneg %p283
        %p915 = pneg %p307
        %p916 = pneg %p304
        %p917 = pneg %p328
        %p918 = pneg %p325
        %p919 = pneg %p349
        %p920 = pneg %p346
        %p921 = pneg %p370
        %p922 = pneg %p367
        %p923 = pneg %p391
        %p924 = pneg %p388
        %p925 = pneg %p412
        %p926 = pneg %p409
        %p927 = pneg %p433
        %p928 = pneg %p430
        %p929 = pneg %p454
        %p930 = pneg %p451
        %p931 = pneg %p475
        %p932 = pneg %p472
        %p933 = pneg %p496
        %p934 = pneg %p493
        %p935 = pneg %p517
        %p936 = pneg %p514
        %p937 = pneg %p538
        %p938 = pneg %p535
        %p939 = pneg %p564
        %p940 = pneg %p561
        %s941 = sand.u32 %s551, 1
        %s942 = scalar_lea.sflag [#allocation4], %s941
        %s943 = sand.u32 %s551, 1
        %s944 = smul.addr %s943, 8
        %s945 = scalar_lea.vmem [#allocation28], %s944
        %v946 = vld [vmem:[%s813] sm:$0xff]
        %v947 = vld [vmem:[%s2] sm:$0xff]
        %v948 = vld [vmem:[%s2 + $0x8] sm:$0xff]
        %v949 = vld [vmem:[%s2 + $0x10] sm:$0xff]
        %v950 = vld [vmem:[%s2 + $0x18] sm:$0xff]
        %v951 = vld [vmem:[#allocation7] sm:$0x1]
        %v953 = vlaneseq
        %v954 = vshrl.u32 %v953, 7
        %v955 = vsub.s32 0, %v954
        %v956 = vrot.slane %v951, %v955
        %vm958 = vcmask 261120
        %v960 = vsel %vm958, %v946, 0
        %962 = vmatprep.subr.mxu0 0.0
        %963 = vmatpush1.msra.mxu0 0.0
        %964 = vmatprep.subr.mxu0 0.0
        %965 = vmatpush1.msra.mxu0 0.0
        %966 = vmatprep.subr.mxu0 0.0
        %967 = vmatpush1.msra.mxu0 0.0
        %968 = vmatprep.subr.mxu0 0.0
        %969 = vmatpush1.msra.mxu0 0.0
        %970 = vmatprep.subr.mxu0 0.0
        %971 = vmatpush1.msra.mxu0 0.0
        %972 = vmatprep.subr.mxu0 0.0
        %973 = vmatpush1.msra.mxu0 0.0
        %974 = vmatprep.subr.mxu0 0.0
        %975 = vmatpush1.msra.mxu0 0.0
        %976 = vmatprep.subr.mxu0 0.0
        %977 = vmatpush1.msra.mxu0 0.0
        %978 = vmatprep.subr.mxu0 0.0
        %979 = vmatpush1.msra.mxu0 0.0
        %980 = vmatprep.subr.mxu0 0.0
        %981 = vmatpush1.msra.mxu0 0.0
        %982 = vmatprep.subr.mxu0 0.0
        %983 = vmatpush1.msra.mxu0 0.0
        %984 = vmatprep.subr.mxu0 0.0
        %985 = vmatpush1.msra.mxu0 0.0
        %986 = vmatprep.subr.mxu0 0.0
        %987 = vmatpush1.msra.mxu0 %v950
        %988 = vmatprep.subr.mxu0 0.0
        %989 = vmatpush1.msra.mxu0 %v949
        %990 = vmatprep.subr.mxu0 0.0
        %991 = vmatpush1.msra.mxu0 %v948
        %992 = vmatprep.subr.mxu0 0.0
        %993 = vmatpush1.msra.mxu0 %v947
        %994 = vmatprep.subr.mxu0 0.0
        %995 = vmatpush2.msra.mxu0 0.0
        %996 = vmatprep.subr.mxu0 0.0
        %997 = vmatpush2.msra.mxu0 0.0
        %998 = vmatprep.subr.mxu0 0.0
        %999 = vmatpush2.msra.mxu0 0.0
        %1000 = vmatprep.subr.mxu0 0.0
        %1001 = vmatpush2.msra.mxu0 0.0
        %1002 = vmatprep.subr.mxu0 0.0
        %1003 = vmatpush2.msra.mxu0 0.0
        %1004 = vmatprep.subr.mxu0 0.0
        %1005 = vmatpush2.msra.mxu0 0.0
        %1006 = vmatprep.subr.mxu0 0.0
        %1007 = vmatpush2.msra.mxu0 0.0
        %1008 = vmatprep.subr.mxu0 0.0
        %1009 = vmatpush2.msra.mxu0 0.0
        %1010 = vmatprep.subr.mxu0 0.0
        %1011 = vmatpush2.msra.mxu0 0.0
        %1012 = vmatprep.subr.mxu0 0.0
        %1013 = vmatpush2.msra.mxu0 0.0
        %1014 = vmatprep.subr.mxu0 0.0
        %1015 = vmatpush2.msra.mxu0 0.0
        %1016 = vmatprep.subr.mxu0 0.0
        %1017 = vmatpush2.msra.mxu0 0.0
        %1018 = vmatprep.subr.mxu0 0.0
        %1019 = vmatpush2.msra.mxu0 0.0
        %1020 = vmatprep.subr.mxu0 0.0
        %1021 = vmatpush2.msra.mxu0 0.0
        %1022 = vmatprep.subr.mxu0 0.0
        %1023 = vmatpush2.msra.mxu0 0.0
        %1024 = vmatprep.subr.mxu0 0.0
        %1025 = vmatpush2.msra.mxu0 0.0
        %1026 = vmatprep.mubr.f32.mxu0 0.0
        %1027 = vmatmul.mubr.f32.gmra.mxu0 %v960
        %v1028 = vpop.f32.mrf.mxu0
        %v1029 = vadd.f32 %v956, %v1028
        %v1030 = vpop.f32.mrf.mxu0
        %1031 = vdwg.mxu0
        %v1032 = vmul.f32 %v1029, 0.17677669
        %v1033 = vld [vmem:[#allocation8] sm:$0xff]
        %v1034 = vld [vmem:[#allocation8 + $0x8] sm:$0xff]
        %v1035 = vld [vmem:[#allocation8 + $0x10] sm:$0xff]
        %v1036 = vld [vmem:[#allocation8 + $0x18] sm:$0xff]
        %v1037 = vld [vmem:[#allocation10] sm:$0x1]
        %v1039 = vlaneseq
        %v1040 = vshrl.u32 %v1039, 7
        %v1041 = vsub.s32 0, %v1040
        %v1042 = vrot.slane %v1037, %v1041
        %1044 = vmatprep.subr.mxu0 0.0
        %1045 = vmatpush1.msra.mxu0 0.0
        %1046 = vmatprep.subr.mxu0 0.0
        %1047 = vmatpush1.msra.mxu0 0.0
        %1048 = vmatprep.subr.mxu0 0.0
        %1049 = vmatpush1.msra.mxu0 0.0
        %1050 = vmatprep.subr.mxu0 0.0
        %1051 = vmatpush1.msra.mxu0 0.0
        %1052 = vmatprep.subr.mxu0 0.0
        %1053 = vmatpush1.msra.mxu0 0.0
        %1054 = vmatprep.subr.mxu0 0.0
        %1055 = vmatpush1.msra.mxu0 0.0
        %1056 = vmatprep.subr.mxu0 0.0
        %1057 = vmatpush1.msra.mxu0 0.0
        %1058 = vmatprep.subr.mxu0 0.0
        %1059 = vmatpush1.msra.mxu0 0.0
        %1060 = vmatprep.subr.mxu0 0.0
        %1061 = vmatpush1.msra.mxu0 0.0
        %1062 = vmatprep.subr.mxu0 0.0
        %1063 = vmatpush1.msra.mxu0 0.0
        %1064 = vmatprep.subr.mxu0 0.0
        %1065 = vmatpush1.msra.mxu0 0.0
        %1066 = vmatprep.subr.mxu0 0.0
        %1067 = vmatpush1.msra.mxu0 0.0
        %1068 = vmatprep.subr.mxu0 0.0
        %1069 = vmatpush1.msra.mxu0 %v1036
        %1070 = vmatprep.subr.mxu0 0.0
        %1071 = vmatpush1.msra.mxu0 %v1035
        %1072 = vmatprep.subr.mxu0 0.0
        %1073 = vmatpush1.msra.mxu0 %v1034
        %1074 = vmatprep.subr.mxu0 0.0
        %1075 = vmatpush1.msra.mxu0 %v1033
        %1076 = vmatprep.subr.mxu0 0.0
        %1077 = vmatpush2.msra.mxu0 0.0
        %1078 = vmatprep.subr.mxu0 0.0
        %1079 = vmatpush2.msra.mxu0 0.0
        %1080 = vmatprep.subr.mxu0 0.0
        %1081 = vmatpush2.msra.mxu0 0.0
        %1082 = vmatprep.subr.mxu0 0.0
        %1083 = vmatpush2.msra.mxu0 0.0
        %1084 = vmatprep.subr.mxu0 0.0
        %1085 = vmatpush2.msra.mxu0 0.0
        %1086 = vmatprep.subr.mxu0 0.0
        %1087 = vmatpush2.msra.mxu0 0.0
        %1088 = vmatprep.subr.mxu0 0.0
        %1089 = vmatpush2.msra.mxu0 0.0
        %1090 = vmatprep.subr.mxu0 0.0
        %1091 = vmatpush2.msra.mxu0 0.0
        %1092 = vmatprep.subr.mxu0 0.0
        %1093 = vmatpush2.msra.mxu0 0.0
        %1094 = vmatprep.subr.mxu0 0.0
        %1095 = vmatpush2.msra.mxu0 0.0
        %1096 = vmatprep.subr.mxu0 0.0
        %1097 = vmatpush2.msra.mxu0 0.0
        %1098 = vmatprep.subr.mxu0 0.0
        %1099 = vmatpush2.msra.mxu0 0.0
        %1100 = vmatprep.subr.mxu0 0.0
        %1101 = vmatpush2.msra.mxu0 0.0
        %1102 = vmatprep.subr.mxu0 0.0
        %1103 = vmatpush2.msra.mxu0 0.0
        %1104 = vmatprep.subr.mxu0 0.0
        %1105 = vmatpush2.msra.mxu0 0.0
        %1106 = vmatprep.subr.mxu0 0.0
        %1107 = vmatpush2.msra.mxu0 0.0
        %1108 = vmatprep.mubr.f32.mxu0 0.0
        %1109 = vmatmul.mubr.f32.gmra.mxu0 %v960
        %v1110 = vpop.f32.mrf.mxu0
        %v1111 = vadd.f32 %v1042, %v1110
        %v1112 = vpop.f32.mrf.mxu0
        %1113 = vdwg.mxu0
        %v1114 = vld [vmem:[#allocation11] sm:$0xff]
        %v1115 = vld [vmem:[#allocation11 + $0x8] sm:$0xff]
        %v1116 = vld [vmem:[#allocation11 + $0x10] sm:$0xff]
        %v1117 = vld [vmem:[#allocation11 + $0x18] sm:$0xff]
        %v1118 = vld [vmem:[#allocation13] sm:$0x1]
        %v1120 = vlaneseq
        %v1121 = vshrl.u32 %v1120, 7
        %v1122 = vsub.s32 0, %v1121
        %v1123 = vrot.slane %v1118, %v1122
        %1125 = vmatprep.subr.mxu0 0.0
        %1126 = vmatpush1.msra.mxu0 0.0
        %1127 = vmatprep.subr.mxu0 0.0
        %1128 = vmatpush1.msra.mxu0 0.0
        %1129 = vmatprep.subr.mxu0 0.0
        %1130 = vmatpush1.msra.mxu0 0.0
        %1131 = vmatprep.subr.mxu0 0.0
        %1132 = vmatpush1.msra.mxu0 0.0
        %1133 = vmatprep.subr.mxu0 0.0
        %1134 = vmatpush1.msra.mxu0 0.0
        %1135 = vmatprep.subr.mxu0 0.0
        %1136 = vmatpush1.msra.mxu0 0.0
        %1137 = vmatprep.subr.mxu0 0.0
        %1138 = vmatpush1.msra.mxu0 0.0
        %1139 = vmatprep.subr.mxu0 0.0
        %1140 = vmatpush1.msra.mxu0 0.0
        %1141 = vmatprep.subr.mxu0 0.0
        %1142 = vmatpush1.msra.mxu0 0.0
        %1143 = vmatprep.subr.mxu0 0.0
        %1144 = vmatpush1.msra.mxu0 0.0
        %1145 = vmatprep.subr.mxu0 0.0
        %1146 = vmatpush1.msra.mxu0 0.0
        %1147 = vmatprep.subr.mxu0 0.0
        %1148 = vmatpush1.msra.mxu0 0.0
        %1149 = vmatprep.subr.mxu0 0.0
        %1150 = vmatpush1.msra.mxu0 %v1117
        %1151 = vmatprep.subr.mxu0 0.0
        %1152 = vmatpush1.msra.mxu0 %v1116
        %1153 = vmatprep.subr.mxu0 0.0
        %1154 = vmatpush1.msra.mxu0 %v1115
        %1155 = vmatprep.subr.mxu0 0.0
        %1156 = vmatpush1.msra.mxu0 %v1114
        %1157 = vmatprep.subr.mxu0 0.0
        %1158 = vmatpush2.msra.mxu0 0.0
        %1159 = vmatprep.subr.mxu0 0.0
        %1160 = vmatpush2.msra.mxu0 0.0
        %1161 = vmatprep.subr.mxu0 0.0
        %1162 = vmatpush2.msra.mxu0 0.0
        %1163 = vmatprep.subr.mxu0 0.0
        %1164 = vmatpush2.msra.mxu0 0.0
        %1165 = vmatprep.subr.mxu0 0.0
        %1166 = vmatpush2.msra.mxu0 0.0
        %1167 = vmatprep.subr.mxu0 0.0
        %1168 = vmatpush2.msra.mxu0 0.0
        %1169 = vmatprep.subr.mxu0 0.0
        %1170 = vmatpush2.msra.mxu0 0.0
        %1171 = vmatprep.subr.mxu0 0.0
        %1172 = vmatpush2.msra.mxu0 0.0
        %1173 = vmatprep.subr.mxu0 0.0
        %1174 = vmatpush2.msra.mxu0 0.0
        %1175 = vmatprep.subr.mxu0 0.0
        %1176 = vmatpush2.msra.mxu0 0.0
        %1177 = vmatprep.subr.mxu0 0.0
        %1178 = vmatpush2.msra.mxu0 0.0
        %1179 = vmatprep.subr.mxu0 0.0
        %1180 = vmatpush2.msra.mxu0 0.0
        %1181 = vmatprep.subr.mxu0 0.0
        %1182 = vmatpush2.msra.mxu0 0.0
        %1183 = vmatprep.subr.mxu0 0.0
        %1184 = vmatpush2.msra.mxu0 0.0
        %1185 = vmatprep.subr.mxu0 0.0
        %1186 = vmatpush2.msra.mxu0 0.0
        %1187 = vmatprep.subr.mxu0 0.0
        %1188 = vmatpush2.msra.mxu0 0.0
        %1189 = vmatprep.mubr.f32.mxu0 0.0
        %1190 = vmatmul.mubr.f32.gmra.mxu0 %v960
        %v1191 = vpop.f32.mrf.mxu0
        %v1192 = vadd.f32 %v1123, %v1191
        %v1193 = vpop.f32.mrf.mxu0
        %1194 = vdwg.mxu0
        %v1196 = vsel %vm958, %v1032, 0
        %v1199 = vsel %vm958, %v1111, 0
        %1201 = vmatprep.subr.mxu0 0.0
        %1202 = vmatpush1.xpose.msra.mxu0 0.0
        %1203 = vmatprep.subr.mxu0 0.0
        %1204 = vmatpush1.xpose.msra.mxu0 0.0
        %1205 = vmatprep.subr.mxu0 0.0
        %1206 = vmatpush1.xpose.msra.mxu0 0.0
        %1207 = vmatprep.subr.mxu0 0.0
        %1208 = vmatpush1.xpose.msra.mxu0 0.0
        %1209 = vmatprep.subr.mxu0 0.0
        %1210 = vmatpush1.xpose.msra.mxu0 0.0
        %1211 = vmatprep.subr.mxu0 0.0
        %1212 = vmatpush1.xpose.msra.mxu0 0.0
        %1213 = vmatprep.subr.mxu0 0.0
        %1214 = vmatpush1.xpose.msra.mxu0 0.0
        %1215 = vmatprep.subr.mxu0 0.0
        %1216 = vmatpush1.xpose.msra.mxu0 0.0
        %1217 = vmatprep.subr.mxu0 0.0
        %1218 = vmatpush1.xpose.msra.mxu0 0.0
        %1219 = vmatprep.subr.mxu0 0.0
        %1220 = vmatpush1.xpose.msra.mxu0 0.0
        %1221 = vmatprep.subr.mxu0 0.0
        %1222 = vmatpush1.xpose.msra.mxu0 0.0
        %1223 = vmatprep.subr.mxu0 0.0
        %1224 = vmatpush1.xpose.msra.mxu0 0.0
        %1225 = vmatprep.subr.mxu0 0.0
        %1226 = vmatpush1.xpose.msra.mxu0 0.0
        %1227 = vmatprep.subr.mxu0 0.0
        %1228 = vmatpush1.xpose.msra.mxu0 0.0
        %1229 = vmatprep.subr.mxu0 0.0
        %1230 = vmatpush1.xpose.msra.mxu0 0.0
        %1231 = vmatprep.subr.mxu0 0.0
        %1232 = vmatpush1.xpose.msra.mxu0 %v1199
        %1233 = vmatprep.subr.mxu0 0.0
        %1234 = vmatpush2.xpose.msra.mxu0 0.0
        %1235 = vmatprep.subr.mxu0 0.0
        %1236 = vmatpush2.xpose.msra.mxu0 0.0
        %1237 = vmatprep.subr.mxu0 0.0
        %1238 = vmatpush2.xpose.msra.mxu0 0.0
        %1239 = vmatprep.subr.mxu0 0.0
        %1240 = vmatpush2.xpose.msra.mxu0 0.0
        %1241 = vmatprep.subr.mxu0 0.0
        %1242 = vmatpush2.xpose.msra.mxu0 0.0
        %1243 = vmatprep.subr.mxu0 0.0
        %1244 = vmatpush2.xpose.msra.mxu0 0.0
        %1245 = vmatprep.subr.mxu0 0.0
        %1246 = vmatpush2.xpose.msra.mxu0 0.0
        %1247 = vmatprep.subr.mxu0 0.0
        %1248 = vmatpush2.xpose.msra.mxu0 0.0
        %1249 = vmatprep.subr.mxu0 0.0
        %1250 = vmatpush2.xpose.msra.mxu0 0.0
        %1251 = vmatprep.subr.mxu0 0.0
        %1252 = vmatpush2.xpose.msra.mxu0 0.0
        %1253 = vmatprep.subr.mxu0 0.0
        %1254 = vmatpush2.xpose.msra.mxu0 0.0
        %1255 = vmatprep.subr.mxu0 0.0
        %1256 = vmatpush2.xpose.msra.mxu0 0.0
        %1257 = vmatprep.subr.mxu0 0.0
        %1258 = vmatpush2.xpose.msra.mxu0 0.0
        %1259 = vmatprep.subr.mxu0 0.0
        %1260 = vmatpush2.xpose.msra.mxu0 0.0
        %1261 = vmatprep.subr.mxu0 0.0
        %1262 = vmatpush2.xpose.msra.mxu0 0.0
        %1263 = vmatprep.subr.mxu0 0.0
        %1264 = vmatpush2.xpose.msra.mxu0 0.0
        %1265 = vmatprep.mubr.f32.mxu0 0.0
        %1266 = vmatmul.mubr.f32.gmra.mxu0 %v1196
        %v1267 = vpop.f32.mrf.mxu0
        %v1268 = vadd.f32 0.0, %v1267
        %v1269 = vpop.f32.mrf.mxu0
        %1270 = vdwg.mxu0
        %vm1271 = vcmask 64512
        %v1272 = vsel %vm1271, %v1268, -inf
        %1273 = vmax.xlane.f32.xlu0 %v1272
        %v1274 = vpop.xlane.xlu0 %1273
        %v1275 = vsub.f32 %v1268, %v1274
        %v1276 = vmul.f32 %v1275, 1.442695
        %v1277 = vpow.pop %v1276
        %v1278 = vsel %vm1271, %v1277, 0.0
        %1279 = vadd.xlane.f32.xlu0 %v1278
        %v1280 = vpop.xlane.xlu0 %1279
        %v1281 = vrcp.pop %v1280
        %v1282 = vmul.f32 %v1277, %v1281
        %v1284 = vsel %vm1271, %v1282, 0
        %1286 = vmatprep.subr.mxu0 0.0
        %1287 = vmatpush1.msra.mxu0 0.0
        %1288 = vmatprep.subr.mxu0 0.0
        %1289 = vmatpush1.msra.mxu0 0.0
        %1290 = vmatprep.subr.mxu0 0.0
        %1291 = vmatpush1.msra.mxu0 0.0
        %1292 = vmatprep.subr.mxu0 0.0
        %1293 = vmatpush1.msra.mxu0 0.0
        %1294 = vmatprep.subr.mxu0 0.0
        %1295 = vmatpush1.msra.mxu0 0.0
        %1296 = vmatprep.subr.mxu0 0.0
        %1297 = vmatpush1.msra.mxu0 0.0
        %1298 = vmatprep.subr.mxu0 0.0
        %1299 = vmatpush1.msra.mxu0 0.0
        %1300 = vmatprep.subr.mxu0 0.0
        %1301 = vmatpush1.msra.mxu0 0.0
        %1302 = vmatprep.subr.mxu0 0.0
        %1303 = vmatpush1.msra.mxu0 0.0
        %1304 = vmatprep.subr.mxu0 0.0
        %1305 = vmatpush1.msra.mxu0 0.0
        %1306 = vmatprep.subr.mxu0 0.0
        %1307 = vmatpush1.msra.mxu0 0.0
        %1308 = vmatprep.subr.mxu0 0.0
        %1309 = vmatpush1.msra.mxu0 0.0
        %1310 = vmatprep.subr.mxu0 0.0
        %1311 = vmatpush1.msra.mxu0 0.0
        %1312 = vmatprep.subr.mxu0 0.0
        %1313 = vmatpush1.msra.mxu0 0.0
        %1314 = vmatprep.subr.mxu0 0.0
        %1315 = vmatpush1.msra.mxu0 0.0
        %1316 = vmatprep.subr.mxu0 0.0
        %1317 = vmatpush1.msra.mxu0 %v1192
        %1318 = vmatprep.subr.mxu0 0.0
        %1319 = vmatpush2.msra.mxu0 0.0
        %1320 = vmatprep.subr.mxu0 0.0
        %1321 = vmatpush2.msra.mxu0 0.0
        %1322 = vmatprep.subr.mxu0 0.0
        %1323 = vmatpush2.msra.mxu0 0.0
        %1324 = vmatprep.subr.mxu0 0.0
        %1325 = vmatpush2.msra.mxu0 0.0
        %1326 = vmatprep.subr.mxu0 0.0
        %1327 = vmatpush2.msra.mxu0 0.0
        %1328 = vmatprep.subr.mxu0 0.0
        %1329 = vmatpush2.msra.mxu0 0.0
        %1330 = vmatprep.subr.mxu0 0.0
        %1331 = vmatpush2.msra.mxu0 0.0
        %1332 = vmatprep.subr.mxu0 0.0
        %1333 = vmatpush2.msra.mxu0 0.0
        %1334 = vmatprep.subr.mxu0 0.0
        %1335 = vmatpush2.msra.mxu0 0.0
        %1336 = vmatprep.subr.mxu0 0.0
        %1337 = vmatpush2.msra.mxu0 0.0
        %1338 = vmatprep.subr.mxu0 0.0
        %1339 = vmatpush2.msra.mxu0 0.0
        %1340 = vmatprep.subr.mxu0 0.0
        %1341 = vmatpush2.msra.mxu0 0.0
        %1342 = vmatprep.subr.mxu0 0.0
        %1343 = vmatpush2.msra.mxu0 0.0
        %1344 = vmatprep.subr.mxu0 0.0
        %1345 = vmatpush2.msra.mxu0 0.0
        %1346 = vmatprep.subr.mxu0 0.0
        %1347 = vmatpush2.msra.mxu0 0.0
        %1348 = vmatprep.subr.mxu0 0.0
        %1349 = vmatpush2.msra.mxu0 0.0
        %1350 = vmatprep.mubr.f32.mxu0 0.0
        %1351 = vmatmul.mubr.f32.gmra.mxu0 %v1284
        %v1352 = vpop.f32.mrf.mxu0
        %v1353 = vadd.f32 0.0, %v1352
        %v1354 = vpop.f32.mrf.mxu0
        %1355 = vdwg.mxu0
        %v1356 = vadd.f32 %v946, %v1353
        %v1357 = vld [vmem:[#allocation14] sm:$0x1]
        %v1358 = vld [vmem:[#allocation16] sm:$0x1]
        %v1359 = vsel %vm958, %v1356, 0.0
        %1360 = vadd.xlane.f32.xlu0 %v1359
        %v1361 = vpop.xlane.xlu0 %1360
        %v1362 = vrcp.pop 32.0
        %v1363 = vmul.f32 %v1361, %v1362
        %v1364 = vsub.f32 %v1356, %v1363
        %v1365 = vmul.f32 %v1364, %v1364
        %v1366 = vsel %vm958, %v1365, 0.0
        %1367 = vadd.xlane.f32.xlu0 %v1366
        %v1368 = vpop.xlane.xlu0 %1367
        %v1369 = vmul.f32 %v1368, %v1362
        %v1370 = vadd.f32 %v1369, 1e-05
        %v1371 = vrsqrt.pop %v1370
        %v1372 = vmul.f32 %v1364, %v1371
        %v1374 = vlaneseq
        %v1375 = vshrl.u32 %v1374, 7
        %v1376 = vsub.s32 0, %v1375
        %v1377 = vrot.slane %v1357, %v1376
        %v1379 = vmul.f32 %v1372, %v1377
        %v1381 = vlaneseq
        %v1382 = vshrl.u32 %v1381, 7
        %v1383 = vsub.s32 0, %v1382
        %v1384 = vrot.slane %v1358, %v1383
        %v1386 = vadd.f32 %v1379, %v1384
        %v1387 = vld [vmem:[%s822] sm:$0xff]
        %v1388 = vld [vmem:[#allocation17] sm:$0xff]
        %v1389 = vld [vmem:[#allocation17 + $0x8] sm:$0xff]
        %v1390 = vld [vmem:[#allocation19] sm:$0x1]
        %v1392 = vlaneseq
        %v1393 = vshrl.u32 %v1392, 7
        %v1394 = vsub.s32 0, %v1393
        %v1395 = vrot.slane %v1390, %v1394
        %vm1397 = vcmask 130048
        %v1399 = vsel %vm1397, %v1387, 0
        %1401 = vmatprep.subr.mxu0 0.0
        %1402 = vmatpush1.msra.mxu0 0.0
        %1403 = vmatprep.subr.mxu0 0.0
        %1404 = vmatpush1.msra.mxu0 0.0
        %1405 = vmatprep.subr.mxu0 0.0
        %1406 = vmatpush1.msra.mxu0 0.0
        %1407 = vmatprep.subr.mxu0 0.0
        %1408 = vmatpush1.msra.mxu0 0.0
        %1409 = vmatprep.subr.mxu0 0.0
        %1410 = vmatpush1.msra.mxu0 0.0
        %1411 = vmatprep.subr.mxu0 0.0
        %1412 = vmatpush1.msra.mxu0 0.0
        %1413 = vmatprep.subr.mxu0 0.0
        %1414 = vmatpush1.msra.mxu0 0.0
        %1415 = vmatprep.subr.mxu0 0.0
        %1416 = vmatpush1.msra.mxu0 0.0
        %1417 = vmatprep.subr.mxu0 0.0
        %1418 = vmatpush1.msra.mxu0 0.0
        %1419 = vmatprep.subr.mxu0 0.0
        %1420 = vmatpush1.msra.mxu0 0.0
        %1421 = vmatprep.subr.mxu0 0.0
        %1422 = vmatpush1.msra.mxu0 0.0
        %1423 = vmatprep.subr.mxu0 0.0
        %1424 = vmatpush1.msra.mxu0 0.0
        %1425 = vmatprep.subr.mxu0 0.0
        %1426 = vmatpush1.msra.mxu0 0.0
        %1427 = vmatprep.subr.mxu0 0.0
        %1428 = vmatpush1.msra.mxu0 0.0
        %1429 = vmatprep.subr.mxu0 0.0
        %1430 = vmatpush1.msra.mxu0 %v1389
        %1431 = vmatprep.subr.mxu0 0.0
        %1432 = vmatpush1.msra.mxu0 %v1388
        %1433 = vmatprep.subr.mxu0 0.0
        %1434 = vmatpush2.msra.mxu0 0.0
        %1435 = vmatprep.subr.mxu0 0.0
        %1436 = vmatpush2.msra.mxu0 0.0
        %1437 = vmatprep.subr.mxu0 0.0
        %1438 = vmatpush2.msra.mxu0 0.0
        %1439 = vmatprep.subr.mxu0 0.0
        %1440 = vmatpush2.msra.mxu0 0.0
        %1441 = vmatprep.subr.mxu0 0.0
        %1442 = vmatpush2.msra.mxu0 0.0
        %1443 = vmatprep.subr.mxu0 0.0
        %1444 = vmatpush2.msra.mxu0 0.0
        %1445 = vmatprep.subr.mxu0 0.0
        %1446 = vmatpush2.msra.mxu0 0.0
        %1447 = vmatprep.subr.mxu0 0.0
        %1448 = vmatpush2.msra.mxu0 0.0
        %1449 = vmatprep.subr.mxu0 0.0
        %1450 = vmatpush2.msra.mxu0 0.0
        %1451 = vmatprep.subr.mxu0 0.0
        %1452 = vmatpush2.msra.mxu0 0.0
        %1453 = vmatprep.subr.mxu0 0.0
        %1454 = vmatpush2.msra.mxu0 0.0
        %1455 = vmatprep.subr.mxu0 0.0
        %1456 = vmatpush2.msra.mxu0 0.0
        %1457 = vmatprep.subr.mxu0 0.0
        %1458 = vmatpush2.msra.mxu0 0.0
        %1459 = vmatprep.subr.mxu0 0.0
        %1460 = vmatpush2.msra.mxu0 0.0
        %1461 = vmatprep.subr.mxu0 0.0
        %1462 = vmatpush2.msra.mxu0 0.0
        %1463 = vmatprep.subr.mxu0 0.0
        %1464 = vmatpush2.msra.mxu0 0.0
        %1465 = vmatprep.mubr.f32.mxu0 0.0
        %1466 = vmatmul.mubr.f32.gmra.mxu0 %v1399
        %v1467 = vpop.f32.mrf.mxu0
        %v1468 = vadd.f32 %v1395, %v1467
        %v1469 = vpop.f32.mrf.mxu0
        %1470 = vdwg.mxu0
        %v1471 = vld [vmem:[%s12] sm:$0xff]
        %v1472 = vld [vmem:[%s12 + $0x8] sm:$0xff]
        %v1473 = vld [vmem:[%s12 + $0x10] sm:$0xff]
        %v1474 = vld [vmem:[%s12 + $0x18] sm:$0xff]
        %v1475 = vld [vmem:[#allocation20] sm:$0xff]
        %v1476 = vld [vmem:[#allocation20 + $0x8] sm:$0xff]
        %v1478 = vsel %vm1397, %v1468, 0
        %1480 = vmatprep.subr.mxu0 0.0
        %1481 = vmatpush1.msra.mxu0 0.0
        %1482 = vmatprep.subr.mxu0 0.0
        %1483 = vmatpush1.msra.mxu0 0.0
        %1484 = vmatprep.subr.mxu0 0.0
        %1485 = vmatpush1.msra.mxu0 0.0
        %1486 = vmatprep.subr.mxu0 0.0
        %1487 = vmatpush1.msra.mxu0 0.0
        %1488 = vmatprep.subr.mxu0 0.0
        %1489 = vmatpush1.msra.mxu0 0.0
        %1490 = vmatprep.subr.mxu0 0.0
        %1491 = vmatpush1.msra.mxu0 0.0
        %1492 = vmatprep.subr.mxu0 0.0
        %1493 = vmatpush1.msra.mxu0 0.0
        %1494 = vmatprep.subr.mxu0 0.0
        %1495 = vmatpush1.msra.mxu0 0.0
        %1496 = vmatprep.subr.mxu0 0.0
        %1497 = vmatpush1.msra.mxu0 0.0
        %1498 = vmatprep.subr.mxu0 0.0
        %1499 = vmatpush1.msra.mxu0 0.0
        %1500 = vmatprep.subr.mxu0 0.0
        %1501 = vmatpush1.msra.mxu0 0.0
        %1502 = vmatprep.subr.mxu0 0.0
        %1503 = vmatpush1.msra.mxu0 0.0
        %1504 = vmatprep.subr.mxu0 0.0
        %1505 = vmatpush1.msra.mxu0 0.0
        %1506 = vmatprep.subr.mxu0 0.0
        %1507 = vmatpush1.msra.mxu0 0.0
        %1508 = vmatprep.subr.mxu0 0.0
        %1509 = vmatpush1.msra.mxu0 %v1476
        %1510 = vmatprep.subr.mxu0 0.0
        %1511 = vmatpush1.msra.mxu0 %v1475
        %1512 = vmatprep.subr.mxu0 0.0
        %1513 = vmatpush2.msra.mxu0 0.0
        %1514 = vmatprep.subr.mxu0 0.0
        %1515 = vmatpush2.msra.mxu0 0.0
        %1516 = vmatprep.subr.mxu0 0.0
        %1517 = vmatpush2.msra.mxu0 0.0
        %1518 = vmatprep.subr.mxu0 0.0
        %1519 = vmatpush2.msra.mxu0 0.0
        %1520 = vmatprep.subr.mxu0 0.0
        %1521 = vmatpush2.msra.mxu0 0.0
        %1522 = vmatprep.subr.mxu0 0.0
        %1523 = vmatpush2.msra.mxu0 0.0
        %1524 = vmatprep.subr.mxu0 0.0
        %1525 = vmatpush2.msra.mxu0 0.0
        %1526 = vmatprep.subr.mxu0 0.0
        %1527 = vmatpush2.msra.mxu0 0.0
        %1528 = vmatprep.subr.mxu0 0.0
        %1529 = vmatpush2.msra.mxu0 0.0
        %1530 = vmatprep.subr.mxu0 0.0
        %1531 = vmatpush2.msra.mxu0 0.0
        %1532 = vmatprep.subr.mxu0 0.0
        %1533 = vmatpush2.msra.mxu0 0.0
        %1534 = vmatprep.subr.mxu0 0.0
        %1535 = vmatpush2.msra.mxu0 0.0
        %1536 = vmatprep.subr.mxu0 0.0
        %1537 = vmatpush2.msra.mxu0 0.0
        %1538 = vmatprep.subr.mxu0 0.0
        %1539 = vmatpush2.msra.mxu0 0.0
        %1540 = vmatprep.subr.mxu0 0.0
        %1541 = vmatpush2.msra.mxu0 0.0
        %1542 = vmatprep.subr.mxu0 0.0
        %1543 = vmatpush2.msra.mxu0 0.0
        %1544 = vmatprep.mubr.f32.mxu0 0.0
        %1545 = vmatmul.mubr.f32.gmra.mxu0 %v1478
        %v1546 = vpop.f32.mrf.mxu0
        %v1547 = vadd.f32 0.0, %v1546
        %v1548 = vpop.f32.mrf.mxu0
        %1549 = vdwg.mxu0
        %v1551 = vsel %vm958, %v1386, 0
        %1553 = vmatprep.subr.mxu0 0.0
        %1554 = vmatpush1.msra.mxu0 0.0
        %1555 = vmatprep.subr.mxu0 0.0
        %1556 = vmatpush1.msra.mxu0 0.0
        %1557 = vmatprep.subr.mxu0 0.0
        %1558 = vmatpush1.msra.mxu0 0.0
        %1559 = vmatprep.subr.mxu0 0.0
        %1560 = vmatpush1.msra.mxu0 0.0
        %1561 = vmatprep.subr.mxu0 0.0
        %1562 = vmatpush1.msra.mxu0 0.0
        %1563 = vmatprep.subr.mxu0 0.0
        %1564 = vmatpush1.msra.mxu0 0.0
        %1565 = vmatprep.subr.mxu0 0.0
        %1566 = vmatpush1.msra.mxu0 0.0
        %1567 = vmatprep.subr.mxu0 0.0
        %1568 = vmatpush1.msra.mxu0 0.0
        %1569 = vmatprep.subr.mxu0 0.0
        %1570 = vmatpush1.msra.mxu0 0.0
        %1571 = vmatprep.subr.mxu0 0.0
        %1572 = vmatpush1.msra.mxu0 0.0
        %1573 = vmatprep.subr.mxu0 0.0
        %1574 = vmatpush1.msra.mxu0 0.0
        %1575 = vmatprep.subr.mxu0 0.0
        %1576 = vmatpush1.msra.mxu0 0.0
        %1577 = vmatprep.subr.mxu0 0.0
        %1578 = vmatpush1.msra.mxu0 %v1474
        %1579 = vmatprep.subr.mxu0 0.0
        %1580 = vmatpush1.msra.mxu0 %v1473
        %1581 = vmatprep.subr.mxu0 0.0
        %1582 = vmatpush1.msra.mxu0 %v1472
        %1583 = vmatprep.subr.mxu0 0.0
        %1584 = vmatpush1.msra.mxu0 %v1471
        %1585 = vmatprep.subr.mxu0 0.0
        %1586 = vmatpush2.msra.mxu0 0.0
        %1587 = vmatprep.subr.mxu0 0.0
        %1588 = vmatpush2.msra.mxu0 0.0
        %1589 = vmatprep.subr.mxu0 0.0
        %1590 = vmatpush2.msra.mxu0 0.0
        %1591 = vmatprep.subr.mxu0 0.0
        %1592 = vmatpush2.msra.mxu0 0.0
        %1593 = vmatprep.subr.mxu0 0.0
        %1594 = vmatpush2.msra.mxu0 0.0
        %1595 = vmatprep.subr.mxu0 0.0
        %1596 = vmatpush2.msra.mxu0 0.0
        %1597 = vmatprep.subr.mxu0 0.0
        %1598 = vmatpush2.msra.mxu0 0.0
        %1599 = vmatprep.subr.mxu0 0.0
        %1600 = vmatpush2.msra.mxu0 0.0
        %1601 = vmatprep.subr.mxu0 0.0
        %1602 = vmatpush2.msra.mxu0 0.0
        %1603 = vmatprep.subr.mxu0 0.0
        %1604 = vmatpush2.msra.mxu0 0.0
        %1605 = vmatprep.subr.mxu0 0.0
        %1606 = vmatpush2.msra.mxu0 0.0
        %1607 = vmatprep.subr.mxu0 0.0
        %1608 = vmatpush2.msra.mxu0 0.0
        %1609 = vmatprep.subr.mxu0 0.0
        %1610 = vmatpush2.msra.mxu0 0.0
        %1611 = vmatprep.subr.mxu0 0.0
        %1612 = vmatpush2.msra.mxu0 0.0
        %1613 = vmatprep.subr.mxu0 0.0
        %1614 = vmatpush2.msra.mxu0 0.0
        %1615 = vmatprep.subr.mxu0 0.0
        %1616 = vmatpush2.msra.mxu0 0.0
        %1617 = vmatprep.mubr.f32.mxu0 0.0
        %1618 = vmatmul.mubr.f32.gmra.mxu0 %v1551
        %v1619 = vpop.f32.mrf.mxu0
        %v1620 = vadd.f32 %v1547, %v1619
        %v1621 = vpop.f32.mrf.mxu0
        %1622 = vdwg.mxu0
        %v1623 = vld [vmem:[#allocation22] sm:$0x1]
        %v1625 = vlaneseq
        %v1626 = vshrl.u32 %v1625, 7
        %v1627 = vsub.s32 0, %v1626
        %v1628 = vrot.slane %v1623, %v1627
        %v1630 = vadd.f32 %v1620, %v1628
        %v1631 = vmul.f32 %v1630, 0.5
        %v1632 = vmul.f32 %v1630, 0.70710677
        %v1633 = verf.f32.pop %v1632
        %v1634 = vadd.f32 %v1633, 1.0
        %v1635 = vmul.f32 %v1631, %v1634
        %v1636 = vld [vmem:[#allocation23] sm:$0x1]
        %v1637 = vld [vmem:[#allocation25] sm:$0x1]
        %v1638 = vsel %vm958, %v1635, 0.0
        %1639 = vadd.xlane.f32.xlu0 %v1638
        %v1640 = vpop.xlane.xlu0 %1639
        %v1641 = vmul.f32 %v1640, %v1362
        %v1642 = vsub.f32 %v1635, %v1641
        %v1643 = vmul.f32 %v1642, %v1642
        %v1644 = vsel %vm958, %v1643, 0.0
        %1645 = vadd.xlane.f32.xlu0 %v1644
        %v1646 = vpop.xlane.xlu0 %1645
        %v1647 = vmul.f32 %v1646, %v1362
        %v1648 = vadd.f32 %v1647, 1e-05
        %v1649 = vrsqrt.pop %v1648
        %v1650 = vmul.f32 %v1642, %v1649
        %v1652 = vlaneseq
        %v1653 = vshrl.u32 %v1652, 7
        %v1654 = vsub.s32 0, %v1653
        %v1655 = vrot.slane %v1636, %v1654
        %v1657 = vmul.f32 %v1650, %v1655
        %v1659 = vlaneseq
        %v1660 = vshrl.u32 %v1659, 7
        %v1661 = vsub.s32 0, %v1660
        %v1662 = vrot.slane %v1637, %v1661
        %v1664 = vadd.f32 %v1657, %v1662
        %v1665 = vld [vmem:[%s17] sm:$0xff]
        %v1666 = vld [vmem:[%s17 + $0x8] sm:$0xff]
        %v1667 = vld [vmem:[%s17 + $0x10] sm:$0xff]
        %v1668 = vld [vmem:[%s17 + $0x18] sm:$0xff]
        %v1669 = vld [vmem:[#allocation26] sm:$0x1]
        %v1671 = vlaneseq
        %v1672 = vshrl.u32 %v1671, 7
        %v1673 = vsub.s32 0, %v1672
        %v1674 = vrot.slane %v1669, %v1673
        %v1677 = vsel %vm958, %v1664, 0
        %1679 = vmatprep.subr.mxu0 0.0
        %1680 = vmatpush1.msra.mxu0 0.0
        %1681 = vmatprep.subr.mxu0 0.0
        %1682 = vmatpush1.msra.mxu0 0.0
        %1683 = vmatprep.subr.mxu0 0.0
        %1684 = vmatpush1.msra.mxu0 0.0
        %1685 = vmatprep.subr.mxu0 0.0
        %1686 = vmatpush1.msra.mxu0 0.0
        %1687 = vmatprep.subr.mxu0 0.0
        %1688 = vmatpush1.msra.mxu0 0.0
        %1689 = vmatprep.subr.mxu0 0.0
        %1690 = vmatpush1.msra.mxu0 0.0
        %1691 = vmatprep.subr.mxu0 0.0
        %1692 = vmatpush1.msra.mxu0 0.0
        %1693 = vmatprep.subr.mxu0 0.0
        %1694 = vmatpush1.msra.mxu0 0.0
        %1695 = vmatprep.subr.mxu0 0.0
        %1696 = vmatpush1.msra.mxu0 0.0
        %1697 = vmatprep.subr.mxu0 0.0
        %1698 = vmatpush1.msra.mxu0 0.0
        %1699 = vmatprep.subr.mxu0 0.0
        %1700 = vmatpush1.msra.mxu0 0.0
        %1701 = vmatprep.subr.mxu0 0.0
        %1702 = vmatpush1.msra.mxu0 0.0
        %1703 = vmatprep.subr.mxu0 0.0
        %1704 = vmatpush1.msra.mxu0 %v1668
        %1705 = vmatprep.subr.mxu0 0.0
        %1706 = vmatpush1.msra.mxu0 %v1667
        %1707 = vmatprep.subr.mxu0 0.0
        %1708 = vmatpush1.msra.mxu0 %v1666
        %1709 = vmatprep.subr.mxu0 0.0
        %1710 = vmatpush1.msra.mxu0 %v1665
        %1711 = vmatprep.subr.mxu0 0.0
        %1712 = vmatpush2.msra.mxu0 0.0
        %1713 = vmatprep.subr.mxu0 0.0
        %1714 = vmatpush2.msra.mxu0 0.0
        %1715 = vmatprep.subr.mxu0 0.0
        %1716 = vmatpush2.msra.mxu0 0.0
        %1717 = vmatprep.subr.mxu0 0.0
        %1718 = vmatpush2.msra.mxu0 0.0
        %1719 = vmatprep.subr.mxu0 0.0
        %1720 = vmatpush2.msra.mxu0 0.0
        %1721 = vmatprep.subr.mxu0 0.0
        %1722 = vmatpush2.msra.mxu0 0.0
        %1723 = vmatprep.subr.mxu0 0.0
        %1724 = vmatpush2.msra.mxu0 0.0
        %1725 = vmatprep.subr.mxu0 0.0
        %1726 = vmatpush2.msra.mxu0 0.0
        %1727 = vmatprep.subr.mxu0 0.0
        %1728 = vmatpush2.msra.mxu0 0.0
        %1729 = vmatprep.subr.mxu0 0.0
        %1730 = vmatpush2.msra.mxu0 0.0
        %1731 = vmatprep.subr.mxu0 0.0
        %1732 = vmatpush2.msra.mxu0 0.0
        %1733 = vmatprep.subr.mxu0 0.0
        %1734 = vmatpush2.msra.mxu0 0.0
        %1735 = vmatprep.subr.mxu0 0.0
        %1736 = vmatpush2.msra.mxu0 0.0
        %1737 = vmatprep.subr.mxu0 0.0
        %1738 = vmatpush2.msra.mxu0 0.0
        %1739 = vmatprep.subr.mxu0 0.0
        %1740 = vmatpush2.msra.mxu0 0.0
        %1741 = vmatprep.subr.mxu0 0.0
        %1742 = vmatpush2.msra.mxu0 0.0
        %1743 = vmatprep.mubr.f32.mxu0 0.0
        %1744 = vmatmul.mubr.f32.gmra.mxu0 %v1677
        %v1745 = vpop.f32.mrf.mxu0
        %v1746 = vadd.f32 %v1674, %v1745
        %v1747 = vpop.f32.mrf.mxu0
        %1748 = vdwg.mxu0
        %v1749 = vmul.f32 %v1746, 0.5
        %v1750 = vmul.f32 %v1746, 0.70710677
        %v1751 = verf.f32.pop %v1750
        %v1752 = vadd.f32 %v1751, 1.0
        %v1753 = vmul.f32 %v1749, %v1752
        %v1754 = vld [vmem:[%s19] sm:$0x1]
        %v1755 = vld [vmem:[%s20] sm:$0x1]
        %v1756 = vsel %vm1397, %v1753, 0.0
        %1757 = vadd.xlane.f32.xlu0 %v1756
        %v1758 = vpop.xlane.xlu0 %1757
        %v1759 = vrcp.pop 16.0
        %v1760 = vmul.f32 %v1758, %v1759
        %v1761 = vsub.f32 %v1753, %v1760
        %v1762 = vmul.f32 %v1761, %v1761
        %v1763 = vsel %vm1397, %v1762, 0.0
        %1764 = vadd.xlane.f32.xlu0 %v1763
        %v1765 = vpop.xlane.xlu0 %1764
        %v1766 = vmul.f32 %v1765, %v1759
        %v1767 = vadd.f32 %v1766, 1e-05
        %v1768 = vrsqrt.pop %v1767
        %v1769 = vmul.f32 %v1761, %v1768
        %v1771 = vlaneseq
        %v1772 = vshrl.u32 %v1771, 7
        %v1773 = vsub.s32 0, %v1772
        %v1774 = vrot.slane %v1754, %v1773
        %v1776 = vmul.f32 %v1769, %v1774
        %v1778 = vlaneseq
        %v1779 = vshrl.u32 %v1778, 7
        %v1780 = vsub.s32 0, %v1779
        %v1781 = vrot.slane %v1755, %v1780
        %v1783 = vadd.f32 %v1776, %v1781
        %v1784 = vld [vmem:[%s21] sm:$0xff]
        %v1785 = vld [vmem:[%s21 + $0x8] sm:$0xff]
        %v1786 = vld [vmem:[%s22] sm:$0x1]
        %v1788 = vlaneseq
        %v1789 = vshrl.u32 %v1788, 7
        %v1790 = vsub.s32 0, %v1789
        %v1791 = vrot.slane %v1786, %v1790
        %v1794 = vsel %vm1397, %v1783, 0
        %1796 = vmatprep.subr.mxu0 0.0
        %1797 = vmatpush1.msra.mxu0 0.0
        %1798 = vmatprep.subr.mxu0 0.0
        %1799 = vmatpush1.msra.mxu0 0.0
        %1800 = vmatprep.subr.mxu0 0.0
        %1801 = vmatpush1.msra.mxu0 0.0
        %1802 = vmatprep.subr.mxu0 0.0
        %1803 = vmatpush1.msra.mxu0 0.0
        %1804 = vmatprep.subr.mxu0 0.0
        %1805 = vmatpush1.msra.mxu0 0.0
        %1806 = vmatprep.subr.mxu0 0.0
        %1807 = vmatpush1.msra.mxu0 0.0
        %1808 = vmatprep.subr.mxu0 0.0
        %1809 = vmatpush1.msra.mxu0 0.0
        %1810 = vmatprep.subr.mxu0 0.0
        %1811 = vmatpush1.msra.mxu0 0.0
        %1812 = vmatprep.subr.mxu0 0.0
        %1813 = vmatpush1.msra.mxu0 0.0
        %1814 = vmatprep.subr.mxu0 0.0
        %1815 = vmatpush1.msra.mxu0 0.0
        %1816 = vmatprep.subr.mxu0 0.0
        %1817 = vmatpush1.msra.mxu0 0.0
        %1818 = vmatprep.subr.mxu0 0.0
        %1819 = vmatpush1.msra.mxu0 0.0
        %1820 = vmatprep.subr.mxu0 0.0
        %1821 = vmatpush1.msra.mxu0 0.0
        %1822 = vmatprep.subr.mxu0 0.0
        %1823 = vmatpush1.msra.mxu0 0.0
        %1824 = vmatprep.subr.mxu0 0.0
        %1825 = vmatpush1.msra.mxu0 %v1785
        %1826 = vmatprep.subr.mxu0 0.0
        %1827 = vmatpush1.msra.mxu0 %v1784
        %1828 = vmatprep.subr.mxu0 0.0
        %1829 = vmatpush2.msra.mxu0 0.0
        %1830 = vmatprep.subr.mxu0 0.0
        %1831 = vmatpush2.msra.mxu0 0.0
        %1832 = vmatprep.subr.mxu0 0.0
        %1833 = vmatpush2.msra.mxu0 0.0
        %1834 = vmatprep.subr.mxu0 0.0
        %1835 = vmatpush2.msra.mxu0 0.0
        %1836 = vmatprep.subr.mxu0 0.0
        %1837 = vmatpush2.msra.mxu0 0.0
        %1838 = vmatprep.subr.mxu0 0.0
        %1839 = vmatpush2.msra.mxu0 0.0
        %1840 = vmatprep.subr.mxu0 0.0
        %1841 = vmatpush2.msra.mxu0 0.0
        %1842 = vmatprep.subr.mxu0 0.0
        %1843 = vmatpush2.msra.mxu0 0.0
        %1844 = vmatprep.subr.mxu0 0.0
        %1845 = vmatpush2.msra.mxu0 0.0
        %1846 = vmatprep.subr.mxu0 0.0
        %1847 = vmatpush2.msra.mxu0 0.0
        %1848 = vmatprep.subr.mxu0 0.0
        %1849 = vmatpush2.msra.mxu0 0.0
        %1850 = vmatprep.subr.mxu0 0.0
        %1851 = vmatpush2.msra.mxu0 0.0
        %1852 = vmatprep.subr.mxu0 0.0
        %1853 = vmatpush2.msra.mxu0 0.0
        %1854 = vmatprep.subr.mxu0 0.0
        %1855 = vmatpush2.msra.mxu0 0.0
        %1856 = vmatprep.subr.mxu0 0.0
        %1857 = vmatpush2.msra.mxu0 0.0
        %1858 = vmatprep.subr.mxu0 0.0
        %1859 = vmatpush2.msra.mxu0 0.0
        %1860 = vmatprep.mubr.f32.mxu0 0.0
        %1861 = vmatmul.mubr.f32.gmra.mxu0 %v1794
        %v1862 = vpop.f32.mrf.mxu0
        %v1863 = vadd.f32 %v1791, %v1862
        %v1864 = vpop.f32.mrf.mxu0
        %1865 = vdwg.mxu0
        %1866 = vst.msk [vmem:[%s945] sm:$0xff] %vm1397, %v1863
        %s1867 = sand.u32 %s551, 1
        %s1868 = scalar_lea.sflag [#allocation4], %s1867
        %s1869 = sand.u32 %s551, 1
        %s1870 = smul.addr %s1869, 8
        %s1871 = scalar_lea.vmem [#allocation28], %s1870
        // Predicated region
        $region177: #{tpu_custom_call.1} parent=111 // pred_check
          %p1872 = pneg %p561
        $region178: #{tpu_custom_call.1} parent=111 // pred_check_branch
          %1874 = sbr.rel (%p1872) target = $region180
        $region179: #{tpu_custom_call.1} parent=111 // pred_region
          %s1876 = ssub.s32 128, 128
          %1877 = vsyncadd %s1868, %s1876
          %s1878 = smul.addr %s50, 128
          %s1879 = scalar_lea.hbm %s23, %s1878
          %s1881 = sshll.u32 %s1871, 4
          %s1882 = int_to_ptr.vmem [resolvable:$true] %s1881
          %1884 = dma.vmem_to_hbm [thread:$0]  %s1882, 128, %s1879, %s1868
        $region180: #{tpu_custom_call.1} parent=111 // pred_fallthru
          _
      $region112: #{tpu_custom_call.1} parent=5 // pred_fallthru
        _
      %p1885 = scmp.le.s32.totalorder 2, %s45
      // Predicated region
      $region181: #{tpu_custom_call.1} parent=5 // pred_check
        %p1886 = pneg %p1885
      $region182: #{tpu_custom_call.1} parent=5 // pred_check_branch
        %1888 = sbr.rel (%p1886) target = $region184
      $region183: #{tpu_custom_call.1} parent=5 // pred_region
        %s1889 = ssub.s32 %s45, 2
        // Predicated region
        $region185: #{tpu_custom_call.1} parent=183 // pred_check
          %p1890 = pneg %p567
        $region186: #{tpu_custom_call.1} parent=183 // pred_check_branch
          %1892 = sbr.rel (%p1890) target = $region188
        $region187: #{tpu_custom_call.1} parent=183 // pred_region
          %s1893 = sand.u32 %s552, 1
          %s1894 = scalar_lea.sflag [#allocation4], %s1893
          %s1895 = sand.u32 %s552, 1
          %s1896 = smul.addr %s1895, 8
          %s1897 = scalar_lea.vmem [#allocation28], %s1896
          %1898 = dma.done %s1894, 128
        $region188: #{tpu_custom_call.1} parent=183 // pred_fallthru
          _
      $region184: #{tpu_custom_call.1} parent=5 // pred_fallthru
        _
    $region6: #{tpu_custom_call.1} parent=1 // loop_footer
      %s49 = sadd.s32 1, %s45
    $region7: #{tpu_custom_call.1} parent=1 // loop_footer_branch
      %44 = sbr.rel target = $region3
    $region8: #{tpu_custom_call.1} parent=1 // loop_exit
      _
    %1899 = vsyncpa [#allocation3], 1
    %s1900 = scalar_lea.sflag [#allocation3], 1
    %1901 = vsyncpa %s1900, 1
    %1902 = vsyncpa [#allocation6], 1
    %s1903 = scalar_lea.sflag [#allocation6], 1
    %1904 = vsyncpa %s1903, 1
    %1905 = vsyncpa [#allocation9], 1
    %1906 = vsyncpa [#allocation12], 1
    %1907 = vsyncpa [#allocation15], 1
    %1908 = vsyncpa [#allocation18], 1
    %1909 = vsyncpa [#allocation21], 1
    %1910 = vsyncpa [#allocation24], 1
    %1911 = vsyncpa [#allocation27], 1
    %1912 = vsyncpa [#allocation4], 1
    %s1913 = scalar_lea.sflag [#allocation4], 1
    %1914 = vsyncpa %s1913, 1

// kernel: tpu_custom_call.1
$region0: #{tpu_custom_call.1}
  #allocation0 [shape = 'u32[]', space=smem, size = 0x4, offset = 0x4, fixed_abs, tag = 'smem constant byte address 0x4 - core index']
  #allocation1 [shape = 'u32[144,128]{1,0:T(1,128)}', space=vmem, size = 0x12000, scoped, tag = 'internal scratch']
  %s0 = inlined_call_operand.hbm [shape: f32[2,8,32], index: 0, kind: input, shape index: {}]
  %s1 = inlined_call_operand.hbm [shape: f32[2,8,16], index: 1, kind: input, shape index: {}]
  %s2 = inlined_call_operand.vmem [shape: f32[32,32], index: 2, kind: input, shape index: {}]
  %s3 = inlined_call_operand.hbm [shape: f32[1,32], index: 3, kind: input, shape index: {}]
  %s4 = inlined_call_operand.hbm [shape: f32[32,32], index: 4, kind: input, shape index: {}]
  %s5 = inlined_call_operand.hbm [shape: f32[1,32], index: 5, kind: input, shape index: {}]
  %s6 = inlined_call_operand.hbm [shape: f32[32,32], index: 6, kind: input, shape index: {}]
  %s7 = inlined_call_operand.hbm [shape: f32[1,32], index: 7, kind: input, shape index: {}]
  %s8 = inlined_call_operand.hbm [shape: f32[1,32], index: 8, kind: input, shape index: {}]
  %s9 = inlined_call_operand.hbm [shape: f32[1,32], index: 9, kind: input, shape index: {}]
  %s10 = inlined_call_operand.hbm [shape: f32[16,16], index: 10, kind: input, shape index: {}]
  %s11 = inlined_call_operand.hbm [shape: f32[1,16], index: 11, kind: input, shape index: {}]
  %s12 = inlined_call_operand.vmem [shape: f32[32,32], index: 12, kind: input, shape index: {}]
  %s13 = inlined_call_operand.hbm [shape: f32[16,32], index: 13, kind: input, shape index: {}]
  %s14 = inlined_call_operand.hbm [shape: f32[1,32], index: 14, kind: input, shape index: {}]
  %s15 = inlined_call_operand.hbm [shape: f32[1,32], index: 15, kind: input, shape index: {}]
  %s16 = inlined_call_operand.hbm [shape: f32[1,32], index: 16, kind: input, shape index: {}]
  %s17 = inlined_call_operand.vmem [shape: f32[32,16], index: 17, kind: input, shape index: {}]
  %s18 = inlined_call_operand.hbm [shape: f32[1,16], index: 18, kind: input, shape index: {}]
  %s19 = inlined_call_operand.vmem [shape: f32[1,16], index: 19, kind: input, shape index: {}]
  %s20 = inlined_call_operand.vmem [shape: f32[1,16], index: 20, kind: input, shape index: {}]
  %s21 = inlined_call_operand.vmem [shape: f32[16,16], index: 21, kind: input, shape index: {}]
  %s22 = inlined_call_operand.vmem [shape: f32[1,16], index: 22, kind: input, shape index: {}]
  %s23 = inlined_call_operand.hbm [shape: f32[2,8,16], index: 23, kind: output, shape index: {}]
  %s24 = sld [smem:[#allocation0]]
  $region189: #{tpu_custom_call.1} parent=0
    _
  %s26 = ssub.s32 1, %s24
  %s27 = scalar_select 0, %s26, %s24
  $region1: #{tpu_custom_call.1} parent=0
    #allocation2 [shape = 'u8[8192]{0}', space=vmem, size = 0x2000, scoped, tag = 'input window, operand 0']
    #allocation3 [shape = 's32[2]{0}', space=sflag, size = 0x8, scoped, tag = 'scoped memory for tpu_custom_call.1']
    #allocation4 [shape = 's32[2]{0}', space=sflag, size = 0x8, scoped, tag = 'scoped memory for tpu_custom_call.1']
    #allocation5 [shape = 'u8[8192]{0}', space=vmem, size = 0x2000, scoped, tag = 'input window, operand 1']
    #allocation6 [shape = 's32[2]{0}', space=sflag, size = 0x8, scoped, tag = 'scoped memory for tpu_custom_call.1']
    #allocation7 [shape = 'u8[512]{0}', space=vmem, size = 0x400, scoped, tag = 'input window, operand 3, single buffered']
    #allocation8 [shape = 'u8[16384]{0}', space=vmem, size = 0x4000, scoped, tag = 'input window, operand 4, single buffered']
    #allocation9 [shape = 's32[1]{0}', space=sflag, size = 0x4, scoped, tag = 'scoped memory for tpu_custom_call.1']
    #allocation10 [shape = 'u8[512]{0}', space=vmem, size = 0x400, scoped, tag = 'input window, operand 5, single buffered']
    #allocation11 [shape = 'u8[16384]{0}', space=vmem, size = 0x4000, scoped, tag = 'input window, operand 6, single buffered']
    #allocation12 [shape = 's32[1]{0}', space=sflag, size = 0x4, scoped, tag = 'scoped memory for tpu_custom_call.1']
    #allocation13 [shape = 'u8[512]{0}', space=vmem, size = 0x400, scoped, tag = 'input window, operand 7, single buffered']
    #allocation14 [shape = 'u8[512]{0}', space=vmem, size = 0x400, scoped, tag = 'input window, operand 8, single buffered']
    #allocation15 [shape = 's32[1]{0}', space=sflag, size = 0x4, scoped, tag = 'scoped memory for tpu_custom_call.1']
    #allocation16 [shape = 'u8[512]{0}', space=vmem, size = 0x400, scoped, tag = 'input window, operand 9, single buffered']
    #allocation17 [shape = 'u8[8192]{0}', space=vmem, size = 0x2000, scoped, tag = 'input window, operand 10, single buffered']
    #allocation18 [shape = 's32[1]{0}', space=sflag, size = 0x4, scoped, tag = 'scoped memory for tpu_custom_call.1']
    #allocation19 [shape = 'u8[512]{0}', space=vmem, size = 0x400, scoped, tag = 'input window, operand 11, single buffered']
    #allocation20 [shape = 'u8[8192]{0}', space=vmem, size = 0x2000, scoped, tag = 'input window, operand 13, single buffered']
    #allocation21 [shape = 's32[1]{0}', space=sflag, size = 0x4, scoped, tag = 'scoped memory for tpu_custom_call.1']
    #allocation22 [shape = 'u8[512]{0}', space=vmem, size = 0x400, scoped, tag = 'input window, operand 14, single buffered']
    #allocation23 [shape = 'u8[512]{0}', space=vmem, size = 0x400, scoped, tag = 'input window, operand 15, single buffered']
    #allocation24 [shape = 's32[1]{0}', space=sflag, size = 0x4, scoped, tag = 'scoped memory for tpu_custom_call.1']
    #allocation25 [shape = 'u8[512]{0}', space=vmem, size = 0x400, scoped, tag = 'input window, operand 16, single buffered']
    #allocation26 [shape = 'u8[512]{0}', space=vmem, size = 0x400, scoped, tag = 'input window, operand 18, single buffered']
    #allocation27 [shape = 's32[1]{0}', space=sflag, size = 0x4, scoped, tag = 'scoped memory for tpu_custom_call.1']
    #allocation28 [shape = 'u8[8192]{0}', space=vmem, size = 0x2000, scoped, tag = 'output window, operand 0']
    %28 = vsyncpa [#allocation3], 0
    %s29 = scalar_lea.sflag [#allocation3], 1
    %30 = vsyncpa %s29, 0
    %31 = vsyncpa [#allocation6], 0
    %s32 = scalar_lea.sflag [#allocation6], 1
    %33 = vsyncpa %s32, 0
    %34 = vsyncpa [#allocation9], 0
    %35 = vsyncpa [#allocation12], 0
    %36 = vsyncpa [#allocation15], 0
    %37 = vsyncpa [#allocation18], 0
    %38 = vsyncpa [#allocation21], 0
    %39 = vsyncpa [#allocation24], 0
    %40 = vsyncpa [#allocation27], 0
    %41 = vsyncpa [#allocation4], 0
    %s42 = scalar_lea.sflag [#allocation4], 1
    %43 = vsyncpa %s42, 0
    loop: start=0, step=1, limit=4
    $region2: #{tpu_custom_call.1} parent=1 // loop_pre_header
      _
    $region3: #{tpu_custom_call.1} parent=1 // loop_header
      %s45 = sphi 0, %s49
      %p46 = scmp.ge.s32.totalorder %s45, 4
      %s55 = sphi 0, %s57
      %s58 = sphi 0, %s55
      %s59 = sphi 0, %s58
      %s75 = sphi 0, %s59
      %s81 = sphi 0, %s83
      %s84 = sphi 0, %s81
      %s85 = sphi 0, %s84
      %s101 = sphi 0, %s85
      %s105 = sphi 0, %s105
      %s107 = sphi 0, %s105
      %s108 = sphi 0, %s107
      %s122 = sphi 0, %s108
      %s126 = sphi 0, %s126
      %s128 = sphi 0, %s126
      %s129 = sphi 0, %s128
      %s143 = sphi 0, %s129
      %s147 = sphi 0, %s147
      %s149 = sphi 0, %s147
      %s150 = sphi 0, %s149
      %s164 = sphi 0, %s150
      %s168 = sphi 0, %s168
      %s170 = sphi 0, %s168
      %s171 = sphi 0, %s170
      %s185 = sphi 0, %s171
      %s189 = sphi 0, %s189
      %s191 = sphi 0, %s189
      %s192 = sphi 0, %s191
      %s206 = sphi 0, %s192
      %s210 = sphi 0, %s210
      %s212 = sphi 0, %s210
      %s213 = sphi 0, %s212
      %s227 = sphi 0, %s213
      %s231 = sphi 0, %s231
      %s233 = sphi 0, %s231
      %s234 = sphi 0, %s233
      %s248 = sphi 0, %s234
      %s252 = sphi 0, %s252
      %s254 = sphi 0, %s252
      %s255 = sphi 0, %s254
      %s269 = sphi 0, %s255
      %s273 = sphi 0, %s273
      %s275 = sphi 0, %s273
      %s276 = sphi 0, %s275
      %s290 = sphi 0, %s276
      %s294 = sphi 0, %s294
      %s296 = sphi 0, %s294
      %s297 = sphi 0, %s296
      %s311 = sphi 0, %s297
      %s315 = sphi 0, %s315
      %s317 = sphi 0, %s315
      %s318 = sphi 0, %s317
      %s332 = sphi 0, %s318
      %s336 = sphi 0, %s336
      %s338 = sphi 0, %s336
      %s339 = sphi 0, %s338
      %s353 = sphi 0, %s339
      %s357 = sphi 0, %s357
      %s359 = sphi 0, %s357
      %s360 = sphi 0, %s359
      %s374 = sphi 0, %s360
      %s378 = sphi 0, %s378
      %s380 = sphi 0, %s378
      %s381 = sphi 0, %s380
      %s395 = sphi 0, %s381
      %s399 = sphi 0, %s399
      %s401 = sphi 0, %s399
      %s402 = sphi 0, %s401
      %s416 = sphi 0, %s402
      %s420 = sphi 0, %s420
      %s422 = sphi 0, %s420
      %s423 = sphi 0, %s422
      %s437 = sphi 0, %s423
      %s441 = sphi 0, %s441
      %s443 = sphi 0, %s441
      %s444 = sphi 0, %s443
      %s458 = sphi 0, %s444
      %s462 = sphi 0, %s462
      %s464 = sphi 0, %s462
      %s465 = sphi 0, %s464
      %s479 = sphi 0, %s465
      %s483 = sphi 0, %s483
      %s485 = sphi 0, %s483
      %s486 = sphi 0, %s485
      %s500 = sphi 0, %s486
      %s504 = sphi 0, %s504
      %s506 = sphi 0, %s504
      %s507 = sphi 0, %s506
      %s521 = sphi 0, %s507
      %s525 = sphi 0, %s525
      %s527 = sphi 0, %s525
      %s528 = sphi 0, %s527
      %s542 = sphi 0, %s528
      %s548 = sphi 0, %s550
      %s551 = sphi 0, %s548
      %s552 = sphi 0, %s551
      %s568 = sphi 0, %s552
    $region4: #{tpu_custom_call.1} parent=1 // loop_header_branch
      %48 = sbr.rel (%p46) target = $region8
    $region5: #{tpu_custom_call.1} parent=1 // loop_body
      %s50 = ssub.s32 %s45, 1
      %s51 = ssub.s32 %s45, 2
      %s52 = sadd.s32 %s45, 1
      %s53 = ssub.s32 %s45, %s52
      %p54 = scmp.eq.s32.totalorder %s53, 0
      %s56 = sadd.s32 %s55, 1
      %s57 = scalar_select %p54, %s55, %s56
      %p60 = pneg %p54
      %p61 = scmp.eq.s32.totalorder %s45, 1
      %p62 = por %p60, %p61
      %p63 = scmp.ne.s32.totalorder %s55, %s58
      %p64 = scmp.eq.s32.totalorder %s45, 0
      %p65 = por %p63, %p64
      %p66 = scmp.ne.s32.totalorder %s55, %s58
      %p67 = scmp.eq.s32.totalorder %s50, 1
      %p68 = por %p66, %p67
      %p69 = scmp.ne.s32.totalorder %s58, %s59
      %p70 = scmp.eq.s32.totalorder %s50, 0
      %p71 = por %p69, %p70
      %p72 = scmp.ne.s32.totalorder %s58, %s59
      %p73 = scmp.eq.s32.totalorder %s51, 1
      %p74 = por %p72, %p73
      %p76 = scmp.ne.s32.totalorder %s59, %s75
      %p77 = scmp.eq.s32.totalorder %s51, 0
      %p78 = por %p76, %p77
      %s79 = ssub.s32 %s45, %s52
      %p80 = scmp.eq.s32.totalorder %s79, 0
      %s82 = sadd.s32 %s81, 1
      %s83 = scalar_select %p80, %s81, %s82
      %p86 = pneg %p80
      %p87 = scmp.eq.s32.totalorder %s45, 1
      %p88 = por %p86, %p87
      %p89 = scmp.ne.s32.totalorder %s81, %s84
      %p90 = scmp.eq.s32.totalorder %s45, 0
      %p91 = por %p89, %p90
      %p92 = scmp.ne.s32.totalorder %s81, %s84
      %p93 = scmp.eq.s32.totalorder %s50, 1
      %p94 = por %p92, %p93
      %p95 = scmp.ne.s32.totalorder %s84, %s85
      %p96 = scmp.eq.s32.totalorder %s50, 0
      %p97 = por %p95, %p96
      %p98 = scmp.ne.s32.totalorder %s84, %s85
      %p99 = scmp.eq.s32.totalorder %s51, 1
      %p100 = por %p98, %p99
      %p102 = scmp.ne.s32.totalorder %s85, %s101
      %p103 = scmp.eq.s32.totalorder %s51, 0
      %p104 = por %p102, %p103
      %s106 = sadd.s32 %s105, 1
      %p109 = scmp.eq.s32.totalorder %s45, 1
      %p110 = scmp.ne.s32.totalorder %s105, %s107
      %p111 = scmp.eq.s32.totalorder %s45, 0
      %p112 = por %p110, %p111
      %p113 = scmp.ne.s32.totalorder %s105, %s107
      %p114 = scmp.eq.s32.totalorder %s50, 1
      %p115 = por %p113, %p114
      %p116 = scmp.ne.s32.totalorder %s107, %s108
      %p117 = scmp.eq.s32.totalorder %s50, 0
      %p118 = por %p116, %p117
      %p119 = scmp.ne.s32.totalorder %s107, %s108
      %p120 = scmp.eq.s32.totalorder %s51, 1
      %p121 = por %p119, %p120
      %p123 = scmp.ne.s32.totalorder %s108, %s122
      %p124 = scmp.eq.s32.totalorder %s51, 0
      %p125 = por %p123, %p124
      %s127 = sadd.s32 %s126, 1
      %p130 = scmp.eq.s32.totalorder %s45, 1
      %p131 = scmp.ne.s32.totalorder %s126, %s128
      %p132 = scmp.eq.s32.totalorder %s45, 0
      %p133 = por %p131, %p132
      %p134 = scmp.ne.s32.totalorder %s126, %s128
      %p135 = scmp.eq.s32.totalorder %s50, 1
      %p136 = por %p134, %p135
      %p137 = scmp.ne.s32.totalorder %s128, %s129
      %p138 = scmp.eq.s32.totalorder %s50, 0
      %p139 = por %p137, %p138
      %p140 = scmp.ne.s32.totalorder %s128, %s129
      %p141 = scmp.eq.s32.totalorder %s51, 1
      %p142 = por %p140, %p141
      %p144 = scmp.ne.s32.totalorder %s129, %s143
      %p145 = scmp.eq.s32.totalorder %s51, 0
      %p146 = por %p144, %p145
      %s148 = sadd.s32 %s147, 1
      %p151 = scmp.eq.s32.totalorder %s45, 1
      %p152 = scmp.ne.s32.totalorder %s147, %s149
      %p153 = scmp.eq.s32.totalorder %s45, 0
      %p154 = por %p152, %p153
      %p155 = scmp.ne.s32.totalorder %s147, %s149
      %p156 = scmp.eq.s32.totalorder %s50, 1
      %p157 = por %p155, %p156
      %p158 = scmp.ne.s32.totalorder %s149, %s150
      %p159 = scmp.eq.s32.totalorder %s50, 0
      %p160 = por %p158, %p159
      %p161 = scmp.ne.s32.totalorder %s149, %s150
      %p162 = scmp.eq.s32.totalorder %s51, 1
      %p163 = por %p161, %p162
      %p165 = scmp.ne.s32.totalorder %s150, %s164
      %p166 = scmp.eq.s32.totalorder %s51, 0
      %p167 = por %p165, %p166
      %s169 = sadd.s32 %s168, 1
      %p172 = scmp.eq.s32.totalorder %s45, 1
      %p173 = scmp.ne.s32.totalorder %s168, %s170
      %p174 = scmp.eq.s32.totalorder %s45, 0
      %p175 = por %p173, %p174
      %p176 = scmp.ne.s32.totalorder %s168, %s170
      %p177 = scmp.eq.s32.totalorder %s50, 1
      %p178 = por %p176, %p177
      %p179 = scmp.ne.s32.totalorder %s170, %s171
      %p180 = scmp.eq.s32.totalorder %s50, 0
      %p181 = por %p179, %p180
      %p182 = scmp.ne.s32.totalorder %s170, %s171
      %p183 = scmp.eq.s32.totalorder %s51, 1
      %p184 = por %p182, %p183
      %p186 = scmp.ne.s32.totalorder %s171, %s185
      %p187 = scmp.eq.s32.totalorder %s51, 0
      %p188 = por %p186, %p187
      %s190 = sadd.s32 %s189, 1
      %p193 = scmp.eq.s32.totalorder %s45, 1
      %p194 = scmp.ne.s32.totalorder %s189, %s191
      %p195 = scmp.eq.s32.totalorder %s45, 0
      %p196 = por %p194, %p195
      %p197 = scmp.ne.s32.totalorder %s189, %s191
      %p198 = scmp.eq.s32.totalorder %s50, 1
      %p199 = por %p197, %p198
      %p200 = scmp.ne.s32.totalorder %s191, %s192
      %p201 = scmp.eq.s32.totalorder %s50, 0
      %p202 = por %p200, %p201
      %p203 = scmp.ne.s32.totalorder %s191, %s192
      %p204 = scmp.eq.s32.totalorder %s51, 1
      %p205 = por %p203, %p204
      %p207 = scmp.ne.s32.totalorder %s192, %s206
      %p208 = scmp.eq.s32.totalorder %s51, 0
      %p209 = por %p207, %p208
      %s211 = sadd.s32 %s210, 1
      %p214 = scmp.eq.s32.totalorder %s45, 1
      %p215 = scmp.ne.s32.totalorder %s210, %s212
      %p216 = scmp.eq.s32.totalorder %s45, 0
      %p217 = por %p215, %p216
      %p218 = scmp.ne.s32.totalorder %s210, %s212
      %p219 = scmp.eq.s32.totalorder %s50, 1
      %p220 = por %p218, %p219
      %p221 = scmp.ne.s32.totalorder %s212, %s213
      %p222 = scmp.eq.s32.totalorder %s50, 0
      %p223 = por %p221, %p222
      %p224 = scmp.ne.s32.totalorder %s212, %s213
      %p225 = scmp.eq.s32.totalorder %s51, 1
      %p226 = por %p224, %p225
      %p228 = scmp.ne.s32.totalorder %s213, %s227
      %p229 = scmp.eq.s32.totalorder %s51, 0
      %p230 = por %p228, %p229
      %s232 = sadd.s32 %s231, 1
      %p235 = scmp.eq.s32.totalorder %s45, 1
      %p236 = scmp.ne.s32.totalorder %s231, %s233
      %p237 = scmp.eq.s32.totalorder %s45, 0
      %p238 = por %p236, %p237
      %p239 = scmp.ne.s32.totalorder %s231, %s233
      %p240 = scmp.eq.s32.totalorder %s50, 1
      %p241 = por %p239, %p240
      %p242 = scmp.ne.s32.totalorder %s233, %s234
      %p243 = scmp.eq.s32.totalorder %s50, 0
      %p244 = por %p242, %p243
      %p245 = scmp.ne.s32.totalorder %s233, %s234
      %p246 = scmp.eq.s32.totalorder %s51, 1
      %p247 = por %p245, %p246
      %p249 = scmp.ne.s32.totalorder %s234, %s248
      %p250 = scmp.eq.s32.totalorder %s51, 0
      %p251 = por %p249, %p250
      %s253 = sadd.s32 %s252, 1
      %p256 = scmp.eq.s32.totalorder %s45, 1
      %p257 = scmp.ne.s32.totalorder %s252, %s254
      %p258 = scmp.eq.s32.totalorder %s45, 0
      %p259 = por %p257, %p258
      %p260 = scmp.ne.s32.totalorder %s252, %s254
      %p261 = scmp.eq.s32.totalorder %s50, 1
      %p262 = por %p260, %p261
      %p263 = scmp.ne.s32.totalorder %s254, %s255
      %p264 = scmp.eq.s32.totalorder %s50, 0
      %p265 = por %p263, %p264
      %p266 = scmp.ne.s32.totalorder %s254, %s255
      %p267 = scmp.eq.s32.totalorder %s51, 1
      %p268 = por %p266, %p267
      %p270 = scmp.ne.s32.totalorder %s255, %s269
      %p271 = scmp.eq.s32.totalorder %s51, 0
      %p272 = por %p270, %p271
      %s274 = sadd.s32 %s273, 1
      %p277 = scmp.eq.s32.totalorder %s45, 1
      %p278 = scmp.ne.s32.totalorder %s273, %s275
      %p279 = scmp.eq.s32.totalorder %s45, 0
      %p280 = por %p278, %p279
      %p281 = scmp.ne.s32.totalorder %s273, %s275
      %p282 = scmp.eq.s32.totalorder %s50, 1
      %p283 = por %p281, %p282
      %p284 = scmp.ne.s32.totalorder %s275, %s276
      %p285 = scmp.eq.s32.totalorder %s50, 0
      %p286 = por %p284, %p285
      %p287 = scmp.ne.s32.totalorder %s275, %s276
      %p288 = scmp.eq.s32.totalorder %s51, 1
      %p289 = por %p287, %p288
      %p291 = scmp.ne.s32.totalorder %s276, %s290
      %p292 = scmp.eq.s32.totalorder %s51, 0
      %p293 = por %p291, %p292
      %s295 = sadd.s32 %s294, 1
      %p298 = scmp.eq.s32.totalorder %s45, 1
      %p299 = scmp.ne.s32.totalorder %s294, %s296
      %p300 = scmp.eq.s32.totalorder %s45, 0
      %p301 = por %p299, %p300
      %p302 = scmp.ne.s32.totalorder %s294, %s296
      %p303 = scmp.eq.s32.totalorder %s50, 1
      %p304 = por %p302, %p303
      %p305 = scmp.ne.s32.totalorder %s296, %s297
      %p306 = scmp.eq.s32.totalorder %s50, 0
      %p307 = por %p305, %p306
      %p308 = scmp.ne.s32.totalorder %s296, %s297
      %p309 = scmp.eq.s32.totalorder %s51, 1
      %p310 = por %p308, %p309
      %p312 = scmp.ne.s32.totalorder %s297, %s311
      %p313 = scmp.eq.s32.totalorder %s51, 0
      %p314 = por %p312, %p313
      %s316 = sadd.s32 %s315, 1
      %p319 = scmp.eq.s32.totalorder %s45, 1
      %p320 = scmp.ne.s32.totalorder %s315, %s317
      %p321 = scmp.eq.s32.totalorder %s45, 0
      %p322 = por %p320, %p321
      %p323 = scmp.ne.s32.totalorder %s315, %s317
      %p324 = scmp.eq.s32.totalorder %s50, 1
      %p325 = por %p323, %p324
      %p326 = scmp.ne.s32.totalorder %s317, %s318
      %p327 = scmp.eq.s32.totalorder %s50, 0
      %p328 = por %p326, %p327
      %p329 = scmp.ne.s32.totalorder %s317, %s318
      %p330 = scmp.eq.s32.totalorder %s51, 1
      %p331 = por %p329, %p330
      %p333 = scmp.ne.s32.totalorder %s318, %s332
      %p334 = scmp.eq.s32.totalorder %s51, 0
      %p335 = por %p333, %p334
      %s337 = sadd.s32 %s336, 1
      %p340 = scmp.eq.s32.totalorder %s45, 1
      %p341 = scmp.ne.s32.totalorder %s336, %s338
      %p342 = scmp.eq.s32.totalorder %s45, 0
      %p343 = por %p341, %p342
      %p344 = scmp.ne.s32.totalorder %s336, %s338
      %p345 = scmp.eq.s32.totalorder %s50, 1
      %p346 = por %p344, %p345
      %p347 = scmp.ne.s32.totalorder %s338, %s339
      %p348 = scmp.eq.s32.totalorder %s50, 0
      %p349 = por %p347, %p348
      %p350 = scmp.ne.s32.totalorder %s338, %s339
      %p351 = scmp.eq.s32.totalorder %s51, 1
      %p352 = por %p350, %p351
      %p354 = scmp.ne.s32.totalorder %s339, %s353
      %p355 = scmp.eq.s32.totalorder %s51, 0
      %p356 = por %p354, %p355
      %s358 = sadd.s32 %s357, 1
      %p361 = scmp.eq.s32.totalorder %s45, 1
      %p362 = scmp.ne.s32.totalorder %s357, %s359
      %p363 = scmp.eq.s32.totalorder %s45, 0
      %p364 = por %p362, %p363
      %p365 = scmp.ne.s32.totalorder %s357, %s359
      %p366 = scmp.eq.s32.totalorder %s50, 1
      %p367 = por %p365, %p366
      %p368 = scmp.ne.s32.totalorder %s359, %s360
      %p369 = scmp.eq.s32.totalorder %s50, 0
      %p370 = por %p368, %p369
      %p371 = scmp.ne.s32.totalorder %s359, %s360
      %p372 = scmp.eq.s32.totalorder %s51, 1
      %p373 = por %p371, %p372
      %p375 = scmp.ne.s32.totalorder %s360, %s374
      %p376 = scmp.eq.s32.totalorder %s51, 0
      %p377 = por %p375, %p376
      %s379 = sadd.s32 %s378, 1
      %p382 = scmp.eq.s32.totalorder %s45, 1
      %p383 = scmp.ne.s32.totalorder %s378, %s380
      %p384 = scmp.eq.s32.totalorder %s45, 0
      %p385 = por %p383, %p384
      %p386 = scmp.ne.s32.totalorder %s378, %s380
      %p387 = scmp.eq.s32.totalorder %s50, 1
      %p388 = por %p386, %p387
      %p389 = scmp.ne.s32.totalorder %s380, %s381
      %p390 = scmp.eq.s32.totalorder %s50, 0
      %p391 = por %p389, %p390
      %p392 = scmp.ne.s32.totalorder %s380, %s381
      %p393 = scmp.eq.s32.totalorder %s51, 1
      %p394 = por %p392, %p393
      %p396 = scmp.ne.s32.totalorder %s381, %s395
      %p397 = scmp.eq.s32.totalorder %s51, 0
      %p398 = por %p396, %p397
      %s400 = sadd.s32 %s399, 1
      %p403 = scmp.eq.s32.totalorder %s45, 1
      %p404 = scmp.ne.s32.totalorder %s399, %s401
      %p405 = scmp.eq.s32.totalorder %s45, 0
      %p406 = por %p404, %p405
      %p407 = scmp.ne.s32.totalorder %s399, %s401
      %p408 = scmp.eq.s32.totalorder %s50, 1
      %p409 = por %p407, %p408
      %p410 = scmp.ne.s32.totalorder %s401, %s402
      %p411 = scmp.eq.s32.totalorder %s50, 0
      %p412 = por %p410, %p411
      %p413 = scmp.ne.s32.totalorder %s401, %s402
      %p414 = scmp.eq.s32.totalorder %s51, 1
      %p415 = por %p413, %p414
      %p417 = scmp.ne.s32.totalorder %s402, %s416
      %p418 = scmp.eq.s32.totalorder %s51, 0
      %p419 = por %p417, %p418
      %s421 = sadd.s32 %s420, 1
      %p424 = scmp.eq.s32.totalorder %s45, 1
      %p425 = scmp.ne.s32.totalorder %s420, %s422
      %p426 = scmp.eq.s32.totalorder %s45, 0
      %p427 = por %p425, %p426
      %p428 = scmp.ne.s32.totalorder %s420, %s422
      %p429 = scmp.eq.s32.totalorder %s50, 1
      %p430 = por %p428, %p429
      %p431 = scmp.ne.s32.totalorder %s422, %s423
      %p432 = scmp.eq.s32.totalorder %s50, 0
      %p433 = por %p431, %p432
      %p434 = scmp.ne.s32.totalorder %s422, %s423
      %p435 = scmp.eq.s32.totalorder %s51, 1
      %p436 = por %p434, %p435
      %p438 = scmp.ne.s32.totalorder %s423, %s437
      %p439 = scmp.eq.s32.totalorder %s51, 0
      %p440 = por %p438, %p439
      %s442 = sadd.s32 %s441, 1
      %p445 = scmp.eq.s32.totalorder %s45, 1
      %p446 = scmp.ne.s32.totalorder %s441, %s443
      %p447 = scmp.eq.s32.totalorder %s45, 0
      %p448 = por %p446, %p447
      %p449 = scmp.ne.s32.totalorder %s441, %s443
      %p450 = scmp.eq.s32.totalorder %s50, 1
      %p451 = por %p449, %p450
      %p452 = scmp.ne.s32.totalorder %s443, %s444
      %p453 = scmp.eq.s32.totalorder %s50, 0
      %p454 = por %p452, %p453
      %p455 = scmp.ne.s32.totalorder %s443, %s444
      %p456 = scmp.eq.s32.totalorder %s51, 1
      %p457 = por %p455, %p456
      %p459 = scmp.ne.s32.totalorder %s444, %s458
      %p460 = scmp.eq.s32.totalorder %s51, 0
      %p461 = por %p459, %p460
      %s463 = sadd.s32 %s462, 1
      %p466 = scmp.eq.s32.totalorder %s45, 1
      %p467 = scmp.ne.s32.totalorder %s462, %s464
      %p468 = scmp.eq.s32.totalorder %s45, 0
      %p469 = por %p467, %p468
      %p470 = scmp.ne.s32.totalorder %s462, %s464
      %p471 = scmp.eq.s32.totalorder %s50, 1
      %p472 = por %p470, %p471
      %p473 = scmp.ne.s32.totalorder %s464, %s465
      %p474 = scmp.eq.s32.totalorder %s50, 0
      %p475 = por %p473, %p474
      %p476 = scmp.ne.s32.totalorder %s464, %s465
      %p477 = scmp.eq.s32.totalorder %s51, 1
      %p478 = por %p476, %p477
      %p480 = scmp.ne.s32.totalorder %s465, %s479
      %p481 = scmp.eq.s32.totalorder %s51, 0
      %p482 = por %p480, %p481
      %s484 = sadd.s32 %s483, 1
      %p487 = scmp.eq.s32.totalorder %s45, 1
      %p488 = scmp.ne.s32.totalorder %s483, %s485
      %p489 = scmp.eq.s32.totalorder %s45, 0
      %p490 = por %p488, %p489
      %p491 = scmp.ne.s32.totalorder %s483, %s485
      %p492 = scmp.eq.s32.totalorder %s50, 1
      %p493 = por %p491, %p492
      %p494 = scmp.ne.s32.totalorder %s485, %s486
      %p495 = scmp.eq.s32.totalorder %s50, 0
      %p496 = por %p494, %p495
      %p497 = scmp.ne.s32.totalorder %s485, %s486
      %p498 = scmp.eq.s32.totalorder %s51, 1
      %p499 = por %p497, %p498
      %p501 = scmp.ne.s32.totalorder %s486, %s500
      %p502 = scmp.eq.s32.totalorder %s51, 0
      %p503 = por %p501, %p502
      %s505 = sadd.s32 %s504, 1
      %p508 = scmp.eq.s32.totalorder %s45, 1
      %p509 = scmp.ne.s32.totalorder %s504, %s506
      %p510 = scmp.eq.s32.totalorder %s45, 0
      %p511 = por %p509, %p510
      %p512 = scmp.ne.s32.totalorder %s504, %s506
      %p513 = scmp.eq.s32.totalorder %s50, 1
      %p514 = por %p512, %p513
      %p515 = scmp.ne.s32.totalorder %s506, %s507
      %p516 = scmp.eq.s32.totalorder %s50, 0
      %p517 = por %p515, %p516
      %p518 = scmp.ne.s32.totalorder %s506, %s507
      %p519 = scmp.eq.s32.totalorder %s51, 1
      %p520 = por %p518, %p519
      %p522 = scmp.ne.s32.totalorder %s507, %s521
      %p523 = scmp.eq.s32.totalorder %s51, 0
      %p524 = por %p522, %p523
      %s526 = sadd.s32 %s525, 1
      %p529 = scmp.eq.s32.totalorder %s45, 1
      %p530 = scmp.ne.s32.totalorder %s525, %s527
      %p531 = scmp.eq.s32.totalorder %s45, 0
      %p532 = por %p530, %p531
      %p533 = scmp.ne.s32.totalorder %s525, %s527
      %p534 = scmp.eq.s32.totalorder %s50, 1
      %p535 = por %p533, %p534
      %p536 = scmp.ne.s32.totalorder %s527, %s528
      %p537 = scmp.eq.s32.totalorder %s50, 0
      %p538 = por %p536, %p537
      %p539 = scmp.ne.s32.totalorder %s527, %s528
      %p540 = scmp.eq.s32.totalorder %s51, 1
      %p541 = por %p539, %p540
      %p543 = scmp.ne.s32.totalorder %s528, %s542
      %p544 = scmp.eq.s32.totalorder %s51, 0
      %p545 = por %p543, %p544
      %s546 = ssub.s32 %s45, %s52
      %p547 = scmp.eq.s32.totalorder %s546, 0
      %s549 = sadd.s32 %s548, 1
      %s550 = scalar_select %p547, %s548, %s549
      %p553 = pneg %p547
      %p554 = scmp.eq.s32.totalorder %s45, 1
      %p555 = por %p553, %p554
      %p556 = scmp.ne.s32.totalorder %s548, %s551
      %p557 = scmp.eq.s32.totalorder %s45, 0
      %p558 = por %p556, %p557
      %p559 = scmp.ne.s32.totalorder %s548, %s551
      %p560 = scmp.eq.s32.totalorder %s50, 1
      %p561 = por %p559, %p560
      %p562 = scmp.ne.s32.totalorder %s551, %s552
      %p563 = scmp.eq.s32.totalorder %s50, 0
      %p564 = por %p562, %p563
      %p565 = scmp.ne.s32.totalorder %s551, %s552
      %p566 = scmp.eq.s32.totalorder %s51, 1
      %p567 = por %p565, %p566
      %p569 = scmp.ne.s32.totalorder %s552, %s568
      %p570 = scmp.eq.s32.totalorder %s51, 0
      %p571 = por %p569, %p570
      %p572 = scmp.le.s32.totalorder 1, %s45
      %p573 = scmp.lt.s32.totalorder %s45, 3
      %p574 = pnand %p572, %p573
      %p575 = pneg %p574
      // Predicated region
      $region9: #{tpu_custom_call.1} parent=5 // pred_check
        _
      $region10: #{tpu_custom_call.1} parent=5 // pred_check_branch
        %577 = sbr.rel (%p574) target = $region12
      $region11: #{tpu_custom_call.1} parent=5 // pred_region
        %s578 = ssub.s32 %s45, 1
        // Predicated region
        $region13: #{tpu_custom_call.1} parent=11 // pred_check
          %p579 = pneg %p118
        $region14: #{tpu_custom_call.1} parent=11 // pred_check_branch
          %581 = sbr.rel (%p579) target = $region16
        $region15: #{tpu_custom_call.1} parent=11 // pred_region
          _
        $region16: #{tpu_custom_call.1} parent=11 // pred_fallthru
          _
        // Predicated region
        $region17: #{tpu_custom_call.1} parent=11 // pred_check
          %p582 = pneg %p139
        $region18: #{tpu_custom_call.1} parent=11 // pred_check_branch
          %584 = sbr.rel (%p582) target = $region20
        $region19: #{tpu_custom_call.1} parent=11 // pred_region
          %s586 = ssub.s32 16, 16
          %587 = vsyncadd [#allocation6], %s586
          %s589 = sshll.u32 [#allocation7], 4
          %s590 = int_to_ptr.vmem [resolvable:$true] %s589
          %592 = dma.hbm_to_vmem [thread:$0]  %s3, 16, %s590, [#allocation6]
        $region20: #{tpu_custom_call.1} parent=11 // pred_fallthru
          _
        // Predicated region
        $region21: #{tpu_custom_call.1} parent=11 // pred_check
          %p593 = pneg %p160
        $region22: #{tpu_custom_call.1} parent=11 // pred_check_branch
          %595 = sbr.rel (%p593) target = $region24
        $region23: #{tpu_custom_call.1} parent=11 // pred_region
          %s597 = ssub.s32 512, 512
          %598 = vsyncadd [#allocation9], %s597
          %s599 = sshll.u32 [#allocation8], 4
          %s600 = int_to_ptr.vmem [resolvable:$true] %s599
          %605 = dma.hbm_to_vmem [thread:$0]  %s4, 512, %s600, [#allocation9], 128, 128, 8
        $region24: #{tpu_custom_call.1} parent=11 // pred_fallthru
          _
        // Predicated region
        $region25: #{tpu_custom_call.1} parent=11 // pred_check
          %p606 = pneg %p181
        $region26: #{tpu_custom_call.1} parent=11 // pred_check_branch
          %608 = sbr.rel (%p606) target = $region28
        $region27: #{tpu_custom_call.1} parent=11 // pred_region
          %s610 = ssub.s32 16, 16
          %611 = vsyncadd [#allocation9], %s610
          %s613 = sshll.u32 [#allocation10], 4
          %s614 = int_to_ptr.vmem [resolvable:$true] %s613
          %616 = dma.hbm_to_vmem [thread:$0]  %s5, 16, %s614, [#allocation9]
        $region28: #{tpu_custom_call.1} parent=11 // pred_fallthru
          _
        // Predicated region
        $region29: #{tpu_custom_call.1} parent=11 // pred_check
          %p617 = pneg %p202
        $region30: #{tpu_custom_call.1} parent=11 // pred_check_branch
          %619 = sbr.rel (%p617) target = $region32
        $region31: #{tpu_custom_call.1} parent=11 // pred_region
          %s621 = ssub.s32 512, 512
          %622 = vsyncadd [#allocation12], %s621
          %s623 = sshll.u32 [#allocation11], 4
          %s624 = int_to_ptr.vmem [resolvable:$true] %s623
          %629 = dma.hbm_to_vmem [thread:$0]  %s6, 512, %s624, [#allocation12], 128, 128, 8
        $region32: #{tpu_custom_call.1} parent=11 // pred_fallthru
          _
        // Predicated region
        $region33: #{tpu_custom_call.1} parent=11 // pred_check
          %p630 = pneg %p223
        $region34: #{tpu_custom_call.1} parent=11 // pred_check_branch
          %632 = sbr.rel (%p630) target = $region36
        $region35: #{tpu_custom_call.1} parent=11 // pred_region
          %s634 = ssub.s32 16, 16
          %635 = vsyncadd [#allocation12], %s634
          %s637 = sshll.u32 [#allocation13], 4
          %s638 = int_to_ptr.vmem [resolvable:$true] %s637
          %640 = dma.hbm_to_vmem [thread:$0]  %s7, 16, %s638, [#allocation12]
        $region36: #{tpu_custom_call.1} parent=11 // pred_fallthru
          _
        // Predicated region
        $region37: #{tpu_custom_call.1} parent=11 // pred_check
          %p641 = pneg %p244
        $region38: #{tpu_custom_call.1} parent=11 // pred_check_branch
          %643 = sbr.rel (%p641) target = $region40
        $region39: #{tpu_custom_call.1} parent=11 // pred_region
          %s645 = ssub.s32 16, 16
          %646 = vsyncadd [#allocation15], %s645
          %s648 = sshll.u32 [#allocation14], 4
          %s649 = int_to_ptr.vmem [resolvable:$true] %s648
          %651 = dma.hbm_to_vmem [thread:$0]  %s8, 16, %s649, [#allocation15]
        $region40: #{tpu_custom_call.1} parent=11 // pred_fallthru
          _
        // Predicated region
        $region41: #{tpu_custom_call.1} parent=11 // pred_check
          %p652 = pneg %p265
        $region42: #{tpu_custom_call.1} parent=11 // pred_check_branch
          %654 = sbr.rel (%p652) target = $region44
        $region43: #{tpu_custom_call.1} parent=11 // pred_region
          %s656 = ssub.s32 16, 16
          %657 = vsyncadd [#allocation15], %s656
          %s659 = sshll.u32 [#allocation16], 4
          %s660 = int_to_ptr.vmem [resolvable:$true] %s659
          %662 = dma.hbm_to_vmem [thread:$0]  %s9, 16, %s660, [#allocation15]
        $region44: #{tpu_custom_call.1} parent=11 // pred_fallthru
          _
        // Predicated region
        $region45: #{tpu_custom_call.1} parent=11 // pred_check
          %p663 = pneg %p286
        $region46: #{tpu_custom_call.1} parent=11 // pred_check_branch
          %665 = sbr.rel (%p663) target = $region48
        $region47: #{tpu_custom_call.1} parent=11 // pred_region
          %s667 = ssub.s32 256, 256
          %668 = vsyncadd [#allocation18], %s667
          %s669 = sshll.u32 [#allocation17], 4
          %s670 = int_to_ptr.vmem [resolvable:$true] %s669
          %675 = dma.hbm_to_vmem [thread:$0]  %s10, 256, %s670, [#allocation18], 128, 128, 8
        $region48: #{tpu_custom_call.1} parent=11 // pred_fallthru
          _
        // Predicated region
        $region49: #{tpu_custom_call.1} parent=11 // pred_check
          %p676 = pneg %p307
        $region50: #{tpu_custom_call.1} parent=11 // pred_check_branch
          %678 = sbr.rel (%p676) target = $region52
        $region51: #{tpu_custom_call.1} parent=11 // pred_region
          %s680 = ssub.s32 16, 16
          %681 = vsyncadd [#allocation18], %s680
          %s683 = sshll.u32 [#allocation19], 4
          %s684 = int_to_ptr.vmem [resolvable:$true] %s683
          %686 = dma.hbm_to_vmem [thread:$0]  %s11, 16, %s684, [#allocation18]
        $region52: #{tpu_custom_call.1} parent=11 // pred_fallthru
          _
        // Predicated region
        $region53: #{tpu_custom_call.1} parent=11 // pred_check
          %p687 = pneg %p328
        $region54: #{tpu_custom_call.1} parent=11 // pred_check_branch
          %689 = sbr.rel (%p687) target = $region56
        $region55: #{tpu_custom_call.1} parent=11 // pred_region
          _
        $region56: #{tpu_custom_call.1} parent=11 // pred_fallthru
          _
        // Predicated region
        $region57: #{tpu_custom_call.1} parent=11 // pred_check
          %p690 = pneg %p349
        $region58: #{tpu_custom_call.1} parent=11 // pred_check_branch
          %692 = sbr.rel (%p690) target = $region60
        $region59: #{tpu_custom_call.1} parent=11 // pred_region
          %s694 = ssub.s32 256, 256
          %695 = vsyncadd [#allocation21], %s694
          %s696 = sshll.u32 [#allocation20], 4
          %s697 = int_to_ptr.vmem [resolvable:$true] %s696
          %702 = dma.hbm_to_vmem [thread:$0]  %s13, 256, %s697, [#allocation21], 128, 128, 8
        $region60: #{tpu_custom_call.1} parent=11 // pred_fallthru
          _
        // Predicated region
        $region61: #{tpu_custom_call.1} parent=11 // pred_check
          %p703 = pneg %p370
        $region62: #{tpu_custom_call.1} parent=11 // pred_check_branch
          %705 = sbr.rel (%p703) target = $region64
        $region63: #{tpu_custom_call.1} parent=11 // pred_region
          %s707 = ssub.s32 16, 16
          %708 = vsyncadd [#allocation21], %s707
          %s710 = sshll.u32 [#allocation22], 4
          %s711 = int_to_ptr.vmem [resolvable:$true] %s710
          %713 = dma.hbm_to_vmem [thread:$0]  %s14, 16, %s711, [#allocation21]
        $region64: #{tpu_custom_call.1} parent=11 // pred_fallthru
          _
        // Predicated region
        $region65: #{tpu_custom_call.1} parent=11 // pred_check
          %p714 = pneg %p391
        $region66: #{tpu_custom_call.1} parent=11 // pred_check_branch
          %716 = sbr.rel (%p714) target = $region68
        $region67: #{tpu_custom_call.1} parent=11 // pred_region
          %s718 = ssub.s32 16, 16
          %719 = vsyncadd [#allocation24], %s718
          %s721 = sshll.u32 [#allocation23], 4
          %s722 = int_to_ptr.vmem [resolvable:$true] %s721
          %724 = dma.hbm_to_vmem [thread:$0]  %s15, 16, %s722, [#allocation24]
        $region68: #{tpu_custom_call.1} parent=11 // pred_fallthru
          _
        // Predicated region
        $region69: #{tpu_custom_call.1} parent=11 // pred_check
          %p725 = pneg %p412
        $region70: #{tpu_custom_call.1} parent=11 // pred_check_branch
          %727 = sbr.rel (%p725) target = $region72
        $region71: #{tpu_custom_call.1} parent=11 // pred_region
          %s729 = ssub.s32 16, 16
          %730 = vsyncadd [#allocation24], %s729
          %s732 = sshll.u32 [#allocation25], 4
          %s733 = int_to_ptr.vmem [resolvable:$true] %s732
          %735 = dma.hbm_to_vmem [thread:$0]  %s16, 16, %s733, [#allocation24]
        $region72: #{tpu_custom_call.1} parent=11 // pred_fallthru
          _
        // Predicated region
        $region73: #{tpu_custom_call.1} parent=11 // pred_check
          %p736 = pneg %p433
        $region74: #{tpu_custom_call.1} parent=11 // pred_check_branch
          %738 = sbr.rel (%p736) target = $region76
        $region75: #{tpu_custom_call.1} parent=11 // pred_region
          _
        $region76: #{tpu_custom_call.1} parent=11 // pred_fallthru
          _
        // Predicated region
        $region77: #{tpu_custom_call.1} parent=11 // pred_check
          %p739 = pneg %p454
        $region78: #{tpu_custom_call.1} parent=11 // pred_check_branch
          %741 = sbr.rel (%p739) target = $region80
        $region79: #{tpu_custom_call.1} parent=11 // pred_region
          %s743 = ssub.s32 16, 16
          %744 = vsyncadd [#allocation27], %s743
          %s746 = sshll.u32 [#allocation26], 4
          %s747 = int_to_ptr.vmem [resolvable:$true] %s746
          %749 = dma.hbm_to_vmem [thread:$0]  %s18, 16, %s747, [#allocation27]
        $region80: #{tpu_custom_call.1} parent=11 // pred_fallthru
          _
        // Predicated region
        $region81: #{tpu_custom_call.1} parent=11 // pred_check
          %p750 = pneg %p475
        $region82: #{tpu_custom_call.1} parent=11 // pred_check_branch
          %752 = sbr.rel (%p750) target = $region84
        $region83: #{tpu_custom_call.1} parent=11 // pred_region
          _
        $region84: #{tpu_custom_call.1} parent=11 // pred_fallthru
          _
        // Predicated region
        $region85: #{tpu_custom_call.1} parent=11 // pred_check
          %p753 = pneg %p496
        $region86: #{tpu_custom_call.1} parent=11 // pred_check_branch
          %755 = sbr.rel (%p753) target = $region88
        $region87: #{tpu_custom_call.1} parent=11 // pred_region
          _
        $region88: #{tpu_custom_call.1} parent=11 // pred_fallthru
          _
        // Predicated region
        $region89: #{tpu_custom_call.1} parent=11 // pred_check
          %p756 = pneg %p517
        $region90: #{tpu_custom_call.1} parent=11 // pred_check_branch
          %758 = sbr.rel (%p756) target = $region92
        $region91: #{tpu_custom_call.1} parent=11 // pred_region
          _
        $region92: #{tpu_custom_call.1} parent=11 // pred_fallthru
          _
        // Predicated region
        $region93: #{tpu_custom_call.1} parent=11 // pred_check
          %p759 = pneg %p538
        $region94: #{tpu_custom_call.1} parent=11 // pred_check_branch
          %761 = sbr.rel (%p759) target = $region96
        $region95: #{tpu_custom_call.1} parent=11 // pred_region
          _
        $region96: #{tpu_custom_call.1} parent=11 // pred_fallthru
          _
      $region12: #{tpu_custom_call.1} parent=5 // pred_fallthru
        _
      %p762 = scmp.lt.s32.totalorder %s45, 2
      // Predicated region
      $region97: #{tpu_custom_call.1} parent=5 // pred_check
        %p763 = pneg %p762
      $region98: #{tpu_custom_call.1} parent=5 // pred_check_branch
        %765 = sbr.rel (%p763) target = $region100
      $region99: #{tpu_custom_call.1} parent=5 // pred_region
        // Predicated region
        $region101: #{tpu_custom_call.1} parent=99 // pred_check
          %p766 = pneg %p65
        $region102: #{tpu_custom_call.1} parent=99 // pred_check_branch
          %768 = sbr.rel (%p766) target = $region104
        $region103: #{tpu_custom_call.1} parent=99 // pred_region
          %s769 = sand.u32 %s55, 1
          %s770 = scalar_lea.sflag [#allocation3], %s769
          %s771 = sand.u32 %s55, 1
          %s772 = smul.addr %s771, 8
          %s773 = scalar_lea.vmem [#allocation2], %s772
          %s775 = ssub.s32 128, 128
          %776 = vsyncadd %s770, %s775
          %s777 = smul.addr %s45, 128
          %s778 = scalar_lea.hbm %s0, %s777
          %s780 = sshll.u32 %s773, 4
          %s781 = int_to_ptr.vmem [resolvable:$true] %s780
          %783 = dma.hbm_to_vmem [thread:$0]  %s778, 128, %s781, %s770
        $region104: #{tpu_custom_call.1} parent=99 // pred_fallthru
          _
        // Predicated region
        $region105: #{tpu_custom_call.1} parent=99 // pred_check
          %p784 = pneg %p91
        $region106: #{tpu_custom_call.1} parent=99 // pred_check_branch
          %786 = sbr.rel (%p784) target = $region108
        $region107: #{tpu_custom_call.1} parent=99 // pred_region
          %s787 = sand.u32 %s45, 1
          %s788 = scalar_lea.sflag [#allocation6], %s787
          %s789 = sand.u32 %s81, 1
          %s790 = smul.addr %s789, 8
          %s791 = scalar_lea.vmem [#allocation5], %s790
          %s793 = ssub.s32 128, 128
          %794 = vsyncadd %s788, %s793
          %s795 = smul.addr %s45, 128
          %s796 = scalar_lea.hbm %s1, %s795
          %s798 = sshll.u32 %s791, 4
          %s799 = int_to_ptr.vmem [resolvable:$true] %s798
          %801 = dma.hbm_to_vmem [thread:$0]  %s796, 128, %s799, %s788
        $region108: #{tpu_custom_call.1} parent=99 // pred_fallthru
          _
      $region100: #{tpu_custom_call.1} parent=5 // pred_fallthru
        _
      %p802 = scmp.le.s32.totalorder 1, %s45
      %p803 = scmp.lt.s32.totalorder %s45, 3
      %p804 = pnand %p802, %p803
      %p805 = pneg %p804
      // Predicated region
      $region109: #{tpu_custom_call.1} parent=5 // pred_check
        _
      $region110: #{tpu_custom_call.1} parent=5 // pred_check_branch
        %807 = sbr.rel (%p804) target = $region112
      $region111: #{tpu_custom_call.1} parent=5 // pred_region
        %s808 = ssub.s32 %s45, 1
        %s809 = sand.u32 %s58, 1
        %s810 = scalar_lea.sflag [#allocation3], %s809
        %s811 = sand.u32 %s58, 1
        %s812 = smul.addr %s811, 8
        %s813 = scalar_lea.vmem [#allocation2], %s812
        // Predicated region
        $region113: #{tpu_custom_call.1} parent=111 // pred_check
          %p814 = pneg %p71
        $region114: #{tpu_custom_call.1} parent=111 // pred_check_branch
          %816 = sbr.rel (%p814) target = $region116
        $region115: #{tpu_custom_call.1} parent=111 // pred_region
          %817 = dma.done %s810, 128
        $region116: #{tpu_custom_call.1} parent=111 // pred_fallthru
          _
        %s818 = sand.u32 %s50, 1
        %s819 = scalar_lea.sflag [#allocation6], %s818
        %s820 = sand.u32 %s84, 1
        %s821 = smul.addr %s820, 8
        %s822 = scalar_lea.vmem [#allocation5], %s821
        // Predicated region
        $region117: #{tpu_custom_call.1} parent=111 // pred_check
          %p823 = pneg %p97
        $region118: #{tpu_custom_call.1} parent=111 // pred_check_branch
          %825 = sbr.rel (%p823) target = $region120
        $region119: #{tpu_custom_call.1} parent=111 // pred_region
          %826 = dma.done %s819, 128
        $region120: #{tpu_custom_call.1} parent=111 // pred_fallthru
          _
        // Predicated region
        $region121: #{tpu_custom_call.1} parent=111 // pred_check
          %p827 = pneg %p139
        $region122: #{tpu_custom_call.1} parent=111 // pred_check_branch
          %829 = sbr.rel (%p827) target = $region124
        $region123: #{tpu_custom_call.1} parent=111 // pred_region
          %830 = dma.done [#allocation6], 16
        $region124: #{tpu_custom_call.1} parent=111 // pred_fallthru
          _
        // Predicated region
        $region125: #{tpu_custom_call.1} parent=111 // pred_check
          %p831 = pneg %p160
        $region126: #{tpu_custom_call.1} parent=111 // pred_check_branch
          %833 = sbr.rel (%p831) target = $region128
        $region127: #{tpu_custom_call.1} parent=111 // pred_region
          %834 = dma.done [#allocation9], 512
        $region128: #{tpu_custom_call.1} parent=111 // pred_fallthru
          _
        // Predicated region
        $region129: #{tpu_custom_call.1} parent=111 // pred_check
          %p835 = pneg %p181
        $region130: #{tpu_custom_call.1} parent=111 // pred_check_branch
          %837 = sbr.rel (%p835) target = $region132
        $region131: #{tpu_custom_call.1} parent=111 // pred_region
          %838 = dma.done [#allocation9], 16
        $region132: #{tpu_custom_call.1} parent=111 // pred_fallthru
          _
        // Predicated region
        $region133: #{tpu_custom_call.1} parent=111 // pred_check
          %p839 = pneg %p202
        $region134: #{tpu_custom_call.1} parent=111 // pred_check_branch
          %841 = sbr.rel (%p839) target = $region136
        $region135: #{tpu_custom_call.1} parent=111 // pred_region
          %842 = dma.done [#allocation12], 512
        $region136: #{tpu_custom_call.1} parent=111 // pred_fallthru
          _
        // Predicated region
        $region137: #{tpu_custom_call.1} parent=111 // pred_check
          %p843 = pneg %p223
        $region138: #{tpu_custom_call.1} parent=111 // pred_check_branch
          %845 = sbr.rel (%p843) target = $region140
        $region139: #{tpu_custom_call.1} parent=111 // pred_region
          %846 = dma.done [#allocation12], 16
        $region140: #{tpu_custom_call.1} parent=111 // pred_fallthru
          _
        // Predicated region
        $region141: #{tpu_custom_call.1} parent=111 // pred_check
          %p847 = pneg %p244
        $region142: #{tpu_custom_call.1} parent=111 // pred_check_branch
          %849 = sbr.rel (%p847) target = $region144
        $region143: #{tpu_custom_call.1} parent=111 // pred_region
          %850 = dma.done [#allocation15], 16
        $region144: #{tpu_custom_call.1} parent=111 // pred_fallthru
          _
        // Predicated region
        $region145: #{tpu_custom_call.1} parent=111 // pred_check
          %p851 = pneg %p265
        $region146: #{tpu_custom_call.1} parent=111 // pred_check_branch
          %853 = sbr.rel (%p851) target = $region148
        $region147: #{tpu_custom_call.1} parent=111 // pred_region
          %854 = dma.done [#allocation15], 16
        $region148: #{tpu_custom_call.1} parent=111 // pred_fallthru
          _
        // Predicated region
        $region149: #{tpu_custom_call.1} parent=111 // pred_check
          %p855 = pneg %p286
        $region150: #{tpu_custom_call.1} parent=111 // pred_check_branch
          %857 = sbr.rel (%p855) target = $region152
        $region151: #{tpu_custom_call.1} parent=111 // pred_region
          %858 = dma.done [#allocation18], 256
        $region152: #{tpu_custom_call.1} parent=111 // pred_fallthru
          _
        // Predicated region
        $region153: #{tpu_custom_call.1} parent=111 // pred_check
          %p859 = pneg %p307
        $region154: #{tpu_custom_call.1} parent=111 // pred_check_branch
          %861 = sbr.rel (%p859) target = $region156
        $region155: #{tpu_custom_call.1} parent=111 // pred_region
          %862 = dma.done [#allocation18], 16
        $region156: #{tpu_custom_call.1} parent=111 // pred_fallthru
          _
        // Predicated region
        $region157: #{tpu_custom_call.1} parent=111 // pred_check
          %p863 = pneg %p349
        $region158: #{tpu_custom_call.1} parent=111 // pred_check_branch
          %865 = sbr.rel (%p863) target = $region160
        $region159: #{tpu_custom_call.1} parent=111 // pred_region
          %866 = dma.done [#allocation21], 256
        $region160: #{tpu_custom_call.1} parent=111 // pred_fallthru
          _
        // Predicated region
        $region161: #{tpu_custom_call.1} parent=111 // pred_check
          %p867 = pneg %p370
        $region162: #{tpu_custom_call.1} parent=111 // pred_check_branch
          %869 = sbr.rel (%p867) target = $region164
        $region163: #{tpu_custom_call.1} parent=111 // pred_region
          %870 = dma.done [#allocation21], 16
        $region164: #{tpu_custom_call.1} parent=111 // pred_fallthru
          _
        // Predicated region
        $region165: #{tpu_custom_call.1} parent=111 // pred_check
          %p871 = pneg %p391
        $region166: #{tpu_custom_call.1} parent=111 // pred_check_branch
          %873 = sbr.rel (%p871) target = $region168
        $region167: #{tpu_custom_call.1} parent=111 // pred_region
          %874 = dma.done [#allocation24], 16
        $region168: #{tpu_custom_call.1} parent=111 // pred_fallthru
          _
        // Predicated region
        $region169: #{tpu_custom_call.1} parent=111 // pred_check
          %p875 = pneg %p412
        $region170: #{tpu_custom_call.1} parent=111 // pred_check_branch
          %877 = sbr.rel (%p875) target = $region172
        $region171: #{tpu_custom_call.1} parent=111 // pred_region
          %878 = dma.done [#allocation24], 16
        $region172: #{tpu_custom_call.1} parent=111 // pred_fallthru
          _
        // Predicated region
        $region173: #{tpu_custom_call.1} parent=111 // pred_check
          %p879 = pneg %p454
        $region174: #{tpu_custom_call.1} parent=111 // pred_check_branch
          %881 = sbr.rel (%p879) target = $region176
        $region175: #{tpu_custom_call.1} parent=111 // pred_region
          %882 = dma.done [#allocation27], 16
        $region176: #{tpu_custom_call.1} parent=111 // pred_fallthru
          _
        %s883 = sand.u32 %s58, 1
        %s884 = scalar_lea.sflag [#allocation3], %s883
        %s885 = sand.u32 %s58, 1
        %s886 = smul.addr %s885, 8
        %s887 = scalar_lea.vmem [#allocation2], %s886
        %p888 = pneg %p71
        %p889 = pneg %p68
        %s890 = sand.u32 %s50, 1
        %s891 = scalar_lea.sflag [#allocation6], %s890
        %s892 = sand.u32 %s84, 1
        %s893 = smul.addr %s892, 8
        %s894 = scalar_lea.vmem [#allocation5], %s893
        %p895 = pneg %p97
        %p896 = pneg %p94
        %p897 = pneg %p118
        %p898 = pneg %p115
        %p899 = pneg %p139
        %p900 = pneg %p136
        %p901 = pneg %p160
        %p902 = pneg %p157
        %p903 = pneg %p181
        %p904 = pneg %p178
        %p905 = pneg %p202
        %p906 = pneg %p199
        %p907 = pneg %p223
        %p908 = pneg %p220
        %p909 = pneg %p244
        %p910 = pneg %p241
        %p911 = pneg %p265
        %p912 = pneg %p262
        %p913 = pneg %p286
        %p914 = pneg %p283
        %p915 = pneg %p307
        %p916 = pneg %p304
        %p917 = pneg %p328
        %p918 = pneg %p325
        %p919 = pneg %p349
        %p920 = pneg %p346
        %p921 = pneg %p370
        %p922 = pneg %p367
        %p923 = pneg %p391
        %p924 = pneg %p388
        %p925 = pneg %p412
        %p926 = pneg %p409
        %p927 = pneg %p433
        %p928 = pneg %p430
        %p929 = pneg %p454
        %p930 = pneg %p451
        %p931 = pneg %p475
        %p932 = pneg %p472
        %p933 = pneg %p496
        %p934 = pneg %p493
        %p935 = pneg %p517
        %p936 = pneg %p514
        %p937 = pneg %p538
        %p938 = pneg %p535
        %p939 = pneg %p564
        %p940 = pneg %p561
        %s941 = sand.u32 %s551, 1
        %s942 = scalar_lea.sflag [#allocation4], %s941
        %s943 = sand.u32 %s551, 1
        %s944 = smul.addr %s943, 8
        %s945 = scalar_lea.vmem [#allocation28], %s944
        %v946 = vld [vmem:[%s813] sm:$0xff]
        %v947 = vld [vmem:[%s2] sm:$0xff]
        %v948 = vld [vmem:[%s2 + $0x8] sm:$0xff]
        %v949 = vld [vmem:[%s2 + $0x10] sm:$0xff]
        %v950 = vld [vmem:[%s2 + $0x18] sm:$0xff]
        %v951 = vld [vmem:[#allocation7] sm:$0x1]
        %v953 = vlaneseq
        %v954 = vshrl.u32 %v953, 7
        %v955 = vsub.s32 0, %v954
        %v956 = vrot.slane %v951, %v955
        %vm958 = vcmask 261120
        %v960 = vsel %vm958, %v946, 0
        %962 = vmatprep.subr.mxu0 0.0
        %963 = vmatpush1.msra.mxu0 0.0
        %964 = vmatprep.subr.mxu0 0.0
        %965 = vmatpush1.msra.mxu0 0.0
        %966 = vmatprep.subr.mxu0 0.0
        %967 = vmatpush1.msra.mxu0 0.0
        %968 = vmatprep.subr.mxu0 0.0
        %969 = vmatpush1.msra.mxu0 0.0
        %970 = vmatprep.subr.mxu0 0.0
        %971 = vmatpush1.msra.mxu0 0.0
        %972 = vmatprep.subr.mxu0 0.0
        %973 = vmatpush1.msra.mxu0 0.0
        %974 = vmatprep.subr.mxu0 0.0
        %975 = vmatpush1.msra.mxu0 0.0
        %976 = vmatprep.subr.mxu0 0.0
        %977 = vmatpush1.msra.mxu0 0.0
        %978 = vmatprep.subr.mxu0 0.0
        %979 = vmatpush1.msra.mxu0 0.0
        %980 = vmatprep.subr.mxu0 0.0
        %981 = vmatpush1.msra.mxu0 0.0
        %982 = vmatprep.subr.mxu0 0.0
        %983 = vmatpush1.msra.mxu0 0.0
        %984 = vmatprep.subr.mxu0 0.0
        %985 = vmatpush1.msra.mxu0 0.0
        %986 = vmatprep.subr.mxu0 0.0
        %987 = vmatpush1.msra.mxu0 %v950
        %988 = vmatprep.subr.mxu0 0.0
        %989 = vmatpush1.msra.mxu0 %v949
        %990 = vmatprep.subr.mxu0 0.0
        %991 = vmatpush1.msra.mxu0 %v948
        %992 = vmatprep.subr.mxu0 0.0
        %993 = vmatpush1.msra.mxu0 %v947
        %994 = vmatprep.subr.mxu0 0.0
        %995 = vmatpush2.msra.mxu0 0.0
        %996 = vmatprep.subr.mxu0 0.0
        %997 = vmatpush2.msra.mxu0 0.0
        %998 = vmatprep.subr.mxu0 0.0
        %999 = vmatpush2.msra.mxu0 0.0
        %1000 = vmatprep.subr.mxu0 0.0
        %1001 = vmatpush2.msra.mxu0 0.0
        %1002 = vmatprep.subr.mxu0 0.0
        %1003 = vmatpush2.msra.mxu0 0.0
        %1004 = vmatprep.subr.mxu0 0.0
        %1005 = vmatpush2.msra.mxu0 0.0
        %1006 = vmatprep.subr.mxu0 0.0
        %1007 = vmatpush2.msra.mxu0 0.0
        %1008 = vmatprep.subr.mxu0 0.0
        %1009 = vmatpush2.msra.mxu0 0.0
        %1010 = vmatprep.subr.mxu0 0.0
        %1011 = vmatpush2.msra.mxu0 0.0
        %1012 = vmatprep.subr.mxu0 0.0
        %1013 = vmatpush2.msra.mxu0 0.0
        %1014 = vmatprep.subr.mxu0 0.0
        %1015 = vmatpush2.msra.mxu0 0.0
        %1016 = vmatprep.subr.mxu0 0.0
        %1017 = vmatpush2.msra.mxu0 0.0
        %1018 = vmatprep.subr.mxu0 0.0
        %1019 = vmatpush2.msra.mxu0 0.0
        %1020 = vmatprep.subr.mxu0 0.0
        %1021 = vmatpush2.msra.mxu0 0.0
        %1022 = vmatprep.subr.mxu0 0.0
        %1023 = vmatpush2.msra.mxu0 0.0
        %1024 = vmatprep.subr.mxu0 0.0
        %1025 = vmatpush2.msra.mxu0 0.0
        %1026 = vmatprep.mubr.f32.mxu0 0.0
        %1027 = vmatmul.mubr.f32.gmra.mxu0 %v960
        %v1028 = vpop.f32.mrf.mxu0
        %v1029 = vadd.f32 %v956, %v1028
        %v1030 = vpop.f32.mrf.mxu0
        %1031 = vdwg.mxu0
        %v1032 = vmul.f32 %v1029, 0.17677669
        %v1033 = vld [vmem:[#allocation8] sm:$0xff]
        %v1034 = vld [vmem:[#allocation8 + $0x8] sm:$0xff]
        %v1035 = vld [vmem:[#allocation8 + $0x10] sm:$0xff]
        %v1036 = vld [vmem:[#allocation8 + $0x18] sm:$0xff]
        %v1037 = vld [vmem:[#allocation10] sm:$0x1]
        %v1039 = vlaneseq
        %v1040 = vshrl.u32 %v1039, 7
        %v1041 = vsub.s32 0, %v1040
        %v1042 = vrot.slane %v1037, %v1041
        %1044 = vmatprep.subr.mxu0 0.0
        %1045 = vmatpush1.msra.mxu0 0.0
        %1046 = vmatprep.subr.mxu0 0.0
        %1047 = vmatpush1.msra.mxu0 0.0
        %1048 = vmatprep.subr.mxu0 0.0
        %1049 = vmatpush1.msra.mxu0 0.0
        %1050 = vmatprep.subr.mxu0 0.0
        %1051 = vmatpush1.msra.mxu0 0.0
        %1052 = vmatprep.subr.mxu0 0.0
        %1053 = vmatpush1.msra.mxu0 0.0
        %1054 = vmatprep.subr.mxu0 0.0
        %1055 = vmatpush1.msra.mxu0 0.0
        %1056 = vmatprep.subr.mxu0 0.0
        %1057 = vmatpush1.msra.mxu0 0.0
        %1058 = vmatprep.subr.mxu0 0.0
        %1059 = vmatpush1.msra.mxu0 0.0
        %1060 = vmatprep.subr.mxu0 0.0
        %1061 = vmatpush1.msra.mxu0 0.0
        %1062 = vmatprep.subr.mxu0 0.0
        %1063 = vmatpush1.msra.mxu0 0.0
        %1064 = vmatprep.subr.mxu0 0.0
        %1065 = vmatpush1.msra.mxu0 0.0
        %1066 = vmatprep.subr.mxu0 0.0
        %1067 = vmatpush1.msra.mxu0 0.0
        %1068 = vmatprep.subr.mxu0 0.0
        %1069 = vmatpush1.msra.mxu0 %v1036
        %1070 = vmatprep.subr.mxu0 0.0
        %1071 = vmatpush1.msra.mxu0 %v1035
        %1072 = vmatprep.subr.mxu0 0.0
        %1073 = vmatpush1.msra.mxu0 %v1034
        %1074 = vmatprep.subr.mxu0 0.0
        %1075 = vmatpush1.msra.mxu0 %v1033
        %1076 = vmatprep.subr.mxu0 0.0
        %1077 = vmatpush2.msra.mxu0 0.0
        %1078 = vmatprep.subr.mxu0 0.0
        %1079 = vmatpush2.msra.mxu0 0.0
        %1080 = vmatprep.subr.mxu0 0.0
        %1081 = vmatpush2.msra.mxu0 0.0
        %1082 = vmatprep.subr.mxu0 0.0
        %1083 = vmatpush2.msra.mxu0 0.0
        %1084 = vmatprep.subr.mxu0 0.0
        %1085 = vmatpush2.msra.mxu0 0.0
        %1086 = vmatprep.subr.mxu0 0.0
        %1087 = vmatpush2.msra.mxu0 0.0
        %1088 = vmatprep.subr.mxu0 0.0
        %1089 = vmatpush2.msra.mxu0 0.0
        %1090 = vmatprep.subr.mxu0 0.0
        %1091 = vmatpush2.msra.mxu0 0.0
        %1092 = vmatprep.subr.mxu0 0.0
        %1093 = vmatpush2.msra.mxu0 0.0
        %1094 = vmatprep.subr.mxu0 0.0
        %1095 = vmatpush2.msra.mxu0 0.0
        %1096 = vmatprep.subr.mxu0 0.0
        %1097 = vmatpush2.msra.mxu0 0.0
        %1098 = vmatprep.subr.mxu0 0.0
        %1099 = vmatpush2.msra.mxu0 0.0
        %1100 = vmatprep.subr.mxu0 0.0
        %1101 = vmatpush2.msra.mxu0 0.0
        %1102 = vmatprep.subr.mxu0 0.0
        %1103 = vmatpush2.msra.mxu0 0.0
        %1104 = vmatprep.subr.mxu0 0.0
        %1105 = vmatpush2.msra.mxu0 0.0
        %1106 = vmatprep.subr.mxu0 0.0
        %1107 = vmatpush2.msra.mxu0 0.0
        %1108 = vmatprep.mubr.f32.mxu0 0.0
        %1109 = vmatmul.mubr.f32.gmra.mxu0 %v960
        %v1110 = vpop.f32.mrf.mxu0
        %v1111 = vadd.f32 %v1042, %v1110
        %v1112 = vpop.f32.mrf.mxu0
        %1113 = vdwg.mxu0
        %v1114 = vld [vmem:[#allocation11] sm:$0xff]
        %v1115 = vld [vmem:[#allocation11 + $0x8] sm:$0xff]
        %v1116 = vld [vmem:[#allocation11 + $0x10] sm:$0xff]
        %v1117 = vld [vmem:[#allocation11 + $0x18] sm:$0xff]
        %v1118 = vld [vmem:[#allocation13] sm:$0x1]
        %v1120 = vlaneseq
        %v1121 = vshrl.u32 %v1120, 7
        %v1122 = vsub.s32 0, %v1121
        %v1123 = vrot.slane %v1118, %v1122
        %1125 = vmatprep.subr.mxu0 0.0
        %1126 = vmatpush1.msra.mxu0 0.0
        %1127 = vmatprep.subr.mxu0 0.0
        %1128 = vmatpush1.msra.mxu0 0.0
        %1129 = vmatprep.subr.mxu0 0.0
        %1130 = vmatpush1.msra.mxu0 0.0
        %1131 = vmatprep.subr.mxu0 0.0
        %1132 = vmatpush1.msra.mxu0 0.0
        %1133 = vmatprep.subr.mxu0 0.0
        %1134 = vmatpush1.msra.mxu0 0.0
        %1135 = vmatprep.subr.mxu0 0.0
        %1136 = vmatpush1.msra.mxu0 0.0
        %1137 = vmatprep.subr.mxu0 0.0
        %1138 = vmatpush1.msra.mxu0 0.0
        %1139 = vmatprep.subr.mxu0 0.0
        %1140 = vmatpush1.msra.mxu0 0.0
        %1141 = vmatprep.subr.mxu0 0.0
        %1142 = vmatpush1.msra.mxu0 0.0
        %1143 = vmatprep.subr.mxu0 0.0
        %1144 = vmatpush1.msra.mxu0 0.0
        %1145 = vmatprep.subr.mxu0 0.0
        %1146 = vmatpush1.msra.mxu0 0.0
        %1147 = vmatprep.subr.mxu0 0.0
        %1148 = vmatpush1.msra.mxu0 0.0
        %1149 = vmatprep.subr.mxu0 0.0
        %1150 = vmatpush1.msra.mxu0 %v1117
        %1151 = vmatprep.subr.mxu0 0.0
        %1152 = vmatpush1.msra.mxu0 %v1116
        %1153 = vmatprep.subr.mxu0 0.0
        %1154 = vmatpush1.msra.mxu0 %v1115
        %1155 = vmatprep.subr.mxu0 0.0
        %1156 = vmatpush1.msra.mxu0 %v1114
        %1157 = vmatprep.subr.mxu0 0.0
        %1158 = vmatpush2.msra.mxu0 0.0
        %1159 = vmatprep.subr.mxu0 0.0
        %1160 = vmatpush2.msra.mxu0 0.0
        %1161 = vmatprep.subr.mxu0 0.0
        %1162 = vmatpush2.msra.mxu0 0.0
        %1163 = vmatprep.subr.mxu0 0.0
        %1164 = vmatpush2.msra.mxu0 0.0
        %1165 = vmatprep.subr.mxu0 0.0
        %1166 = vmatpush2.msra.mxu0 0.0
        %1167 = vmatprep.subr.mxu0 0.0
        %1168 = vmatpush2.msra.mxu0 0.0
        %1169 = vmatprep.subr.mxu0 0.0
        %1170 = vmatpush2.msra.mxu0 0.0
        %1171 = vmatprep.subr.mxu0 0.0
        %1172 = vmatpush2.msra.mxu0 0.0
        %1173 = vmatprep.subr.mxu0 0.0
        %1174 = vmatpush2.msra.mxu0 0.0
        %1175 = vmatprep.subr.mxu0 0.0
        %1176 = vmatpush2.msra.mxu0 0.0
        %1177 = vmatprep.subr.mxu0 0.0
        %1178 = vmatpush2.msra.mxu0 0.0
        %1179 = vmatprep.subr.mxu0 0.0
        %1180 = vmatpush2.msra.mxu0 0.0
        %1181 = vmatprep.subr.mxu0 0.0
        %1182 = vmatpush2.msra.mxu0 0.0
        %1183 = vmatprep.subr.mxu0 0.0
        %1184 = vmatpush2.msra.mxu0 0.0
        %1185 = vmatprep.subr.mxu0 0.0
        %1186 = vmatpush2.msra.mxu0 0.0
        %1187 = vmatprep.subr.mxu0 0.0
        %1188 = vmatpush2.msra.mxu0 0.0
        %1189 = vmatprep.mubr.f32.mxu0 0.0
        %1190 = vmatmul.mubr.f32.gmra.mxu0 %v960
        %v1191 = vpop.f32.mrf.mxu0
        %v1192 = vadd.f32 %v1123, %v1191
        %v1193 = vpop.f32.mrf.mxu0
        %1194 = vdwg.mxu0
        %v1196 = vsel %vm958, %v1032, 0
        %v1199 = vsel %vm958, %v1111, 0
        %1201 = vmatprep.subr.mxu0 0.0
        %1202 = vmatpush1.xpose.msra.mxu0 0.0
        %1203 = vmatprep.subr.mxu0 0.0
        %1204 = vmatpush1.xpose.msra.mxu0 0.0
        %1205 = vmatprep.subr.mxu0 0.0
        %1206 = vmatpush1.xpose.msra.mxu0 0.0
        %1207 = vmatprep.subr.mxu0 0.0
        %1208 = vmatpush1.xpose.msra.mxu0 0.0
        %1209 = vmatprep.subr.mxu0 0.0
        %1210 = vmatpush1.xpose.msra.mxu0 0.0
        %1211 = vmatprep.subr.mxu0 0.0
        %1212 = vmatpush1.xpose.msra.mxu0 0.0
        %1213 = vmatprep.subr.mxu0 0.0
        %1214 = vmatpush1.xpose.msra.mxu0 0.0
        %1215 = vmatprep.subr.mxu0 0.0
        %1216 = vmatpush1.xpose.msra.mxu0 0.0
        %1217 = vmatprep.subr.mxu0 0.0
        %1218 = vmatpush1.xpose.msra.mxu0 0.0
        %1219 = vmatprep.subr.mxu0 0.0
        %1220 = vmatpush1.xpose.msra.mxu0 0.0
        %1221 = vmatprep.subr.mxu0 0.0
        %1222 = vmatpush1.xpose.msra.mxu0 0.0
        %1223 = vmatprep.subr.mxu0 0.0
        %1224 = vmatpush1.xpose.msra.mxu0 0.0
        %1225 = vmatprep.subr.mxu0 0.0
        %1226 = vmatpush1.xpose.msra.mxu0 0.0
        %1227 = vmatprep.subr.mxu0 0.0
        %1228 = vmatpush1.xpose.msra.mxu0 0.0
        %1229 = vmatprep.subr.mxu0 0.0
        %1230 = vmatpush1.xpose.msra.mxu0 0.0
        %1231 = vmatprep.subr.mxu0 0.0
        %1232 = vmatpush1.xpose.msra.mxu0 %v1199
        %1233 = vmatprep.subr.mxu0 0.0
        %1234 = vmatpush2.xpose.msra.mxu0 0.0
        %1235 = vmatprep.subr.mxu0 0.0
        %1236 = vmatpush2.xpose.msra.mxu0 0.0
        %1237 = vmatprep.subr.mxu0 0.0
        %1238 = vmatpush2.xpose.msra.mxu0 0.0
        %1239 = vmatprep.subr.mxu0 0.0
        %1240 = vmatpush2.xpose.msra.mxu0 0.0
        %1241 = vmatprep.subr.mxu0 0.0
        %1242 = vmatpush2.xpose.msra.mxu0 0.0
        %1243 = vmatprep.subr.mxu0 0.0
        %1244 = vmatpush2.xpose.msra.mxu0 0.0
        %1245 = vmatprep.subr.mxu0 0.0
        %1246 = vmatpush2.xpose.msra.mxu0 0.0
        %1247 = vmatprep.subr.mxu0 0.0
        %1248 = vmatpush2.xpose.msra.mxu0 0.0
        %1249 = vmatprep.subr.mxu0 0.0
        %1250 = vmatpush2.xpose.msra.mxu0 0.0
        %1251 = vmatprep.subr.mxu0 0.0
        %1252 = vmatpush2.xpose.msra.mxu0 0.0
        %1253 = vmatprep.subr.mxu0 0.0
        %1254 = vmatpush2.xpose.msra.mxu0 0.0
        %1255 = vmatprep.subr.mxu0 0.0
        %1256 = vmatpush2.xpose.msra.mxu0 0.0
        %1257 = vmatprep.subr.mxu0 0.0
        %1258 = vmatpush2.xpose.msra.mxu0 0.0
        %1259 = vmatprep.subr.mxu0 0.0
        %1260 = vmatpush2.xpose.msra.mxu0 0.0
        %1261 = vmatprep.subr.mxu0 0.0
        %1262 = vmatpush2.xpose.msra.mxu0 0.0
        %1263 = vmatprep.subr.mxu0 0.0
        %1264 = vmatpush2.xpose.msra.mxu0 0.0
        %1265 = vmatprep.mubr.f32.mxu0 0.0
        %1266 = vmatmul.mubr.f32.gmra.mxu0 %v1196
        %v1267 = vpop.f32.mrf.mxu0
        %v1268 = vadd.f32 0.0, %v1267
        %v1269 = vpop.f32.mrf.mxu0
        %1270 = vdwg.mxu0
        %vm1271 = vcmask 64512
        %v1272 = vsel %vm1271, %v1268, -inf
        %1273 = vmax.xlane.f32.xlu0 %v1272
        %v1274 = vpop.xlane.xlu0 %1273
        %v1275 = vsub.f32 %v1268, %v1274
        %v1276 = vmul.f32 %v1275, 1.442695
        %v1277 = vpow.pop %v1276
        %v1278 = vsel %vm1271, %v1277, 0.0
        %1279 = vadd.xlane.f32.xlu0 %v1278
        %v1280 = vpop.xlane.xlu0 %1279
        %v1281 = vrcp.pop %v1280
        %v1282 = vmul.f32 %v1277, %v1281
        %v1284 = vsel %vm1271, %v1282, 0
        %1286 = vmatprep.subr.mxu0 0.0
        %1287 = vmatpush1.msra.mxu0 0.0
        %1288 = vmatprep.subr.mxu0 0.0
        %1289 = vmatpush1.msra.mxu0 0.0
        %1290 = vmatprep.subr.mxu0 0.0
        %1291 = vmatpush1.msra.mxu0 0.0
        %1292 = vmatprep.subr.mxu0 0.0
        %1293 = vmatpush1.msra.mxu0 0.0
        %1294 = vmatprep.subr.mxu0 0.0
        %1295 = vmatpush1.msra.mxu0 0.0
        %1296 = vmatprep.subr.mxu0 0.0
        %1297 = vmatpush1.msra.mxu0 0.0
        %1298 = vmatprep.subr.mxu0 0.0
        %1299 = vmatpush1.msra.mxu0 0.0
        %1300 = vmatprep.subr.mxu0 0.0
        %1301 = vmatpush1.msra.mxu0 0.0
        %1302 = vmatprep.subr.mxu0 0.0
        %1303 = vmatpush1.msra.mxu0 0.0
        %1304 = vmatprep.subr.mxu0 0.0
        %1305 = vmatpush1.msra.mxu0 0.0
        %1306 = vmatprep.subr.mxu0 0.0
        %1307 = vmatpush1.msra.mxu0 0.0
        %1308 = vmatprep.subr.mxu0 0.0
        %1309 = vmatpush1.msra.mxu0 0.0
        %1310 = vmatprep.subr.mxu0 0.0
        %1311 = vmatpush1.msra.mxu0 0.0
        %1312 = vmatprep.subr.mxu0 0.0
        %1313 = vmatpush1.msra.mxu0 0.0
        %1314 = vmatprep.subr.mxu0 0.0
        %1315 = vmatpush1.msra.mxu0 0.0
        %1316 = vmatprep.subr.mxu0 0.0
        %1317 = vmatpush1.msra.mxu0 %v1192
        %1318 = vmatprep.subr.mxu0 0.0
        %1319 = vmatpush2.msra.mxu0 0.0
        %1320 = vmatprep.subr.mxu0 0.0
        %1321 = vmatpush2.msra.mxu0 0.0
        %1322 = vmatprep.subr.mxu0 0.0
        %1323 = vmatpush2.msra.mxu0 0.0
        %1324 = vmatprep.subr.mxu0 0.0
        %1325 = vmatpush2.msra.mxu0 0.0
        %1326 = vmatprep.subr.mxu0 0.0
        %1327 = vmatpush2.msra.mxu0 0.0
        %1328 = vmatprep.subr.mxu0 0.0
        %1329 = vmatpush2.msra.mxu0 0.0
        %1330 = vmatprep.subr.mxu0 0.0
        %1331 = vmatpush2.msra.mxu0 0.0
        %1332 = vmatprep.subr.mxu0 0.0
        %1333 = vmatpush2.msra.mxu0 0.0
        %1334 = vmatprep.subr.mxu0 0.0
        %1335 = vmatpush2.msra.mxu0 0.0
        %1336 = vmatprep.subr.mxu0 0.0
        %1337 = vmatpush2.msra.mxu0 0.0
        %1338 = vmatprep.subr.mxu0 0.0
        %1339 = vmatpush2.msra.mxu0 0.0
        %1340 = vmatprep.subr.mxu0 0.0
        %1341 = vmatpush2.msra.mxu0 0.0
        %1342 = vmatprep.subr.mxu0 0.0
        %1343 = vmatpush2.msra.mxu0 0.0
        %1344 = vmatprep.subr.mxu0 0.0
        %1345 = vmatpush2.msra.mxu0 0.0
        %1346 = vmatprep.subr.mxu0 0.0
        %1347 = vmatpush2.msra.mxu0 0.0
        %1348 = vmatprep.subr.mxu0 0.0
        %1349 = vmatpush2.msra.mxu0 0.0
        %1350 = vmatprep.mubr.f32.mxu0 0.0
        %1351 = vmatmul.mubr.f32.gmra.mxu0 %v1284
        %v1352 = vpop.f32.mrf.mxu0
        %v1353 = vadd.f32 0.0, %v1352
        %v1354 = vpop.f32.mrf.mxu0
        %1355 = vdwg.mxu0
        %v1356 = vadd.f32 %v946, %v1353
        %v1357 = vld [vmem:[#allocation14] sm:$0x1]
        %v1358 = vld [vmem:[#allocation16] sm:$0x1]
        %v1359 = vsel %vm958, %v1356, 0.0
        %1360 = vadd.xlane.f32.xlu0 %v1359
        %v1361 = vpop.xlane.xlu0 %1360
        %v1362 = vrcp.pop 32.0
        %v1363 = vmul.f32 %v1361, %v1362
        %v1364 = vsub.f32 %v1356, %v1363
        %v1365 = vmul.f32 %v1364, %v1364
        %v1366 = vsel %vm958, %v1365, 0.0
        %1367 = vadd.xlane.f32.xlu0 %v1366
        %v1368 = vpop.xlane.xlu0 %1367
        %v1369 = vmul.f32 %v1368, %v1362
        %v1370 = vadd.f32 %v1369, 1e-05
        %v1371 = vrsqrt.pop %v1370
        %v1372 = vmul.f32 %v1364, %v1371
        %v1374 = vlaneseq
        %v1375 = vshrl.u32 %v1374, 7
        %v1376 = vsub.s32 0, %v1375
        %v1377 = vrot.slane %v1357, %v1376
        %v1379 = vmul.f32 %v1372, %v1377
        %v1381 = vlaneseq
        %v1382 = vshrl.u32 %v1381, 7
        %v1383 = vsub.s32 0, %v1382
        %v1384 = vrot.slane %v1358, %v1383
        %v1386 = vadd.f32 %v1379, %v1384
        %v1387 = vld [vmem:[%s822] sm:$0xff]
        %v1388 = vld [vmem:[#allocation17] sm:$0xff]
        %v1389 = vld [vmem:[#allocation17 + $0x8] sm:$0xff]
        %v1390 = vld [vmem:[#allocation19] sm:$0x1]
        %v1392 = vlaneseq
        %v1393 = vshrl.u32 %v1392, 7
        %v1394 = vsub.s32 0, %v1393
        %v1395 = vrot.slane %v1390, %v1394
        %vm1397 = vcmask 130048
        %v1399 = vsel %vm1397, %v1387, 0
        %1401 = vmatprep.subr.mxu0 0.0
        %1402 = vmatpush1.msra.mxu0 0.0
        %1403 = vmatprep.subr.mxu0 0.0
        %1404 = vmatpush1.msra.mxu0 0.0
        %1405 = vmatprep.subr.mxu0 0.0
        %1406 = vmatpush1.msra.mxu0 0.0
        %1407 = vmatprep.subr.mxu0 0.0
        %1408 = vmatpush1.msra.mxu0 0.0
        %1409 = vmatprep.subr.mxu0 0.0
        %1410 = vmatpush1.msra.mxu0 0.0
        %1411 = vmatprep.subr.mxu0 0.0
        %1412 = vmatpush1.msra.mxu0 0.0
        %1413 = vmatprep.subr.mxu0 0.0
        %1414 = vmatpush1.msra.mxu0 0.0
        %1415 = vmatprep.subr.mxu0 0.0
        %1416 = vmatpush1.msra.mxu0 0.0
        %1417 = vmatprep.subr.mxu0 0.0
        %1418 = vmatpush1.msra.mxu0 0.0
        %1419 = vmatprep.subr.mxu0 0.0
        %1420 = vmatpush1.msra.mxu0 0.0
        %1421 = vmatprep.subr.mxu0 0.0
        %1422 = vmatpush1.msra.mxu0 0.0
        %1423 = vmatprep.subr.mxu0 0.0
        %1424 = vmatpush1.msra.mxu0 0.0
        %1425 = vmatprep.subr.mxu0 0.0
        %1426 = vmatpush1.msra.mxu0 0.0
        %1427 = vmatprep.subr.mxu0 0.0
        %1428 = vmatpush1.msra.mxu0 0.0
        %1429 = vmatprep.subr.mxu0 0.0
        %1430 = vmatpush1.msra.mxu0 %v1389
        %1431 = vmatprep.subr.mxu0 0.0
        %1432 = vmatpush1.msra.mxu0 %v1388
        %1433 = vmatprep.subr.mxu0 0.0
        %1434 = vmatpush2.msra.mxu0 0.0
        %1435 = vmatprep.subr.mxu0 0.0
        %1436 = vmatpush2.msra.mxu0 0.0
        %1437 = vmatprep.subr.mxu0 0.0
        %1438 = vmatpush2.msra.mxu0 0.0
        %1439 = vmatprep.subr.mxu0 0.0
        %1440 = vmatpush2.msra.mxu0 0.0
        %1441 = vmatprep.subr.mxu0 0.0
        %1442 = vmatpush2.msra.mxu0 0.0
        %1443 = vmatprep.subr.mxu0 0.0
        %1444 = vmatpush2.msra.mxu0 0.0
        %1445 = vmatprep.subr.mxu0 0.0
        %1446 = vmatpush2.msra.mxu0 0.0
        %1447 = vmatprep.subr.mxu0 0.0
        %1448 = vmatpush2.msra.mxu0 0.0
        %1449 = vmatprep.subr.mxu0 0.0
        %1450 = vmatpush2.msra.mxu0 0.0
        %1451 = vmatprep.subr.mxu0 0.0
        %1452 = vmatpush2.msra.mxu0 0.0
        %1453 = vmatprep.subr.mxu0 0.0
        %1454 = vmatpush2.msra.mxu0 0.0
        %1455 = vmatprep.subr.mxu0 0.0
        %1456 = vmatpush2.msra.mxu0 0.0
        %1457 = vmatprep.subr.mxu0 0.0
        %1458 = vmatpush2.msra.mxu0 0.0
        %1459 = vmatprep.subr.mxu0 0.0
        %1460 = vmatpush2.msra.mxu0 0.0
        %1461 = vmatprep.subr.mxu0 0.0
        %1462 = vmatpush2.msra.mxu0 0.0
        %1463 = vmatprep.subr.mxu0 0.0
        %1464 = vmatpush2.msra.mxu0 0.0
        %1465 = vmatprep.mubr.f32.mxu0 0.0
        %1466 = vmatmul.mubr.f32.gmra.mxu0 %v1399
        %v1467 = vpop.f32.mrf.mxu0
        %v1468 = vadd.f32 %v1395, %v1467
        %v1469 = vpop.f32.mrf.mxu0
        %1470 = vdwg.mxu0
        %v1471 = vld [vmem:[%s12] sm:$0xff]
        %v1472 = vld [vmem:[%s12 + $0x8] sm:$0xff]
        %v1473 = vld [vmem:[%s12 + $0x10] sm:$0xff]
        %v1474 = vld [vmem:[%s12 + $0x18] sm:$0xff]
        %v1475 = vld [vmem:[#allocation20] sm:$0xff]
        %v1476 = vld [vmem:[#allocation20 + $0x8] sm:$0xff]
        %v1478 = vsel %vm1397, %v1468, 0
        %1480 = vmatprep.subr.mxu0 0.0
        %1481 = vmatpush1.msra.mxu0 0.0
        %1482 = vmatprep.subr.mxu0 0.0
        %1483 = vmatpush1.msra.mxu0 0.0
        %1484 = vmatprep.subr.mxu0 0.0
        %1485 = vmatpush1.msra.mxu0 0.0
        %1486 = vmatprep.subr.mxu0 0.0
        %1487 = vmatpush1.msra.mxu0 0.0
        %1488 = vmatprep.subr.mxu0 0.0
        %1489 = vmatpush1.msra.mxu0 0.0
        %1490 = vmatprep.subr.mxu0 0.0
        %1491 = vmatpush1.msra.mxu0 0.0
        %1492 = vmatprep.subr.mxu0 0.0
        %1493 = vmatpush1.msra.mxu0 0.0
        %1494 = vmatprep.subr.mxu0 0.0
        %1495 = vmatpush1.msra.mxu0 0.0
        %1496 = vmatprep.subr.mxu0 0.0
        %1497 = vmatpush1.msra.mxu0 0.0
        %1498 = vmatprep.subr.mxu0 0.0
        %1499 = vmatpush1.msra.mxu0 0.0
        %1500 = vmatprep.subr.mxu0 0.0
        %1501 = vmatpush1.msra.mxu0 0.0
        %1502 = vmatprep.subr.mxu0 0.0
        %1503 = vmatpush1.msra.mxu0 0.0
        %1504 = vmatprep.subr.mxu0 0.0
        %1505 = vmatpush1.msra.mxu0 0.0
        %1506 = vmatprep.subr.mxu0 0.0
        %1507 = vmatpush1.msra.mxu0 0.0
        %1508 = vmatprep.subr.mxu0 0.0
        %1509 = vmatpush1.msra.mxu0 %v1476
        %1510 = vmatprep.subr.mxu0 0.0
        %1511 = vmatpush1.msra.mxu0 %v1475
        %1512 = vmatprep.subr.mxu0 0.0
        %1513 = vmatpush2.msra.mxu0 0.0
        %1514 = vmatprep.subr.mxu0 0.0
        %1515 = vmatpush2.msra.mxu0 0.0
        %1516 = vmatprep.subr.mxu0 0.0
        %1517 = vmatpush2.msra.mxu0 0.0
        %1518 = vmatprep.subr.mxu0 0.0
        %1519 = vmatpush2.msra.mxu0 0.0
        %1520 = vmatprep.subr.mxu0 0.0
        %1521 = vmatpush2.msra.mxu0 0.0
        %1522 = vmatprep.subr.mxu0 0.0
        %1523 = vmatpush2.msra.mxu0 0.0
        %1524 = vmatprep.subr.mxu0 0.0
        %1525 = vmatpush2.msra.mxu0 0.0
        %1526 = vmatprep.subr.mxu0 0.0
        %1527 = vmatpush2.msra.mxu0 0.0
        %1528 = vmatprep.subr.mxu0 0.0
        %1529 = vmatpush2.msra.mxu0 0.0
        %1530 = vmatprep.subr.mxu0 0.0
        %1531 = vmatpush2.msra.mxu0 0.0
        %1532 = vmatprep.subr.mxu0 0.0
        %1533 = vmatpush2.msra.mxu0 0.0
        %1534 = vmatprep.subr.mxu0 0.0
        %1535 = vmatpush2.msra.mxu0 0.0
        %1536 = vmatprep.subr.mxu0 0.0
        %1537 = vmatpush2.msra.mxu0 0.0
        %1538 = vmatprep.subr.mxu0 0.0
        %1539 = vmatpush2.msra.mxu0 0.0
        %1540 = vmatprep.subr.mxu0 0.0
        %1541 = vmatpush2.msra.mxu0 0.0
        %1542 = vmatprep.subr.mxu0 0.0
        %1543 = vmatpush2.msra.mxu0 0.0
        %1544 = vmatprep.mubr.f32.mxu0 0.0
        %1545 = vmatmul.mubr.f32.gmra.mxu0 %v1478
        %v1546 = vpop.f32.mrf.mxu0
        %v1547 = vadd.f32 0.0, %v1546
        %v1548 = vpop.f32.mrf.mxu0
        %1549 = vdwg.mxu0
        %v1551 = vsel %vm958, %v1386, 0
        %1553 = vmatprep.subr.mxu0 0.0
        %1554 = vmatpush1.msra.mxu0 0.0
        %1555 = vmatprep.subr.mxu0 0.0
        %1556 = vmatpush1.msra.mxu0 0.0
        %1557 = vmatprep.subr.mxu0 0.0
        %1558 = vmatpush1.msra.mxu0 0.0
        %1559 = vmatprep.subr.mxu0 0.0
        %1560 = vmatpush1.msra.mxu0 0.0
        %1561 = vmatprep.subr.mxu0 0.0
        %1562 = vmatpush1.msra.mxu0 0.0
        %1563 = vmatprep.subr.mxu0 0.0
        %1564 = vmatpush1.msra.mxu0 0.0
        %1565 = vmatprep.subr.mxu0 0.0
        %1566 = vmatpush1.msra.mxu0 0.0
        %1567 = vmatprep.subr.mxu0 0.0
        %1568 = vmatpush1.msra.mxu0 0.0
        %1569 = vmatprep.subr.mxu0 0.0
        %1570 = vmatpush1.msra.mxu0 0.0
        %1571 = vmatprep.subr.mxu0 0.0
        %1572 = vmatpush1.msra.mxu0 0.0
        %1573 = vmatprep.subr.mxu0 0.0
        %1574 = vmatpush1.msra.mxu0 0.0
        %1575 = vmatprep.subr.mxu0 0.0
        %1576 = vmatpush1.msra.mxu0 0.0
        %1577 = vmatprep.subr.mxu0 0.0
        %1578 = vmatpush1.msra.mxu0 %v1474
        %1579 = vmatprep.subr.mxu0 0.0
        %1580 = vmatpush1.msra.mxu0 %v1473
        %1581 = vmatprep.subr.mxu0 0.0
        %1582 = vmatpush1.msra.mxu0 %v1472
        %1583 = vmatprep.subr.mxu0 0.0
        %1584 = vmatpush1.msra.mxu0 %v1471
        %1585 = vmatprep.subr.mxu0 0.0
        %1586 = vmatpush2.msra.mxu0 0.0
        %1587 = vmatprep.subr.mxu0 0.0
        %1588 = vmatpush2.msra.mxu0 0.0
        %1589 = vmatprep.subr.mxu0 0.0
        %1590 = vmatpush2.msra.mxu0 0.0
        %1591 = vmatprep.subr.mxu0 0.0
        %1592 = vmatpush2.msra.mxu0 0.0
        %1593 = vmatprep.subr.mxu0 0.0
        %1594 = vmatpush2.msra.mxu0 0.0
        %1595 = vmatprep.subr.mxu0 0.0
        %1596 = vmatpush2.msra.mxu0 0.0
        %1597 = vmatprep.subr.mxu0 0.0
        %1598 = vmatpush2.msra.mxu0 0.0
        %1599 = vmatprep.subr.mxu0 0.0
        %1600 = vmatpush2.msra.mxu0 0.0
        %1601 = vmatprep.subr.mxu0 0.0
        %1602 = vmatpush2.msra.mxu0 0.0
        %1603 = vmatprep.subr.mxu0 0.0
        %1604 = vmatpush2.msra.mxu0 0.0
        %1605 = vmatprep.subr.mxu0 0.0
        %1606 = vmatpush2.msra.mxu0 0.0
        %1607 = vmatprep.subr.mxu0 0.0
        %1608 = vmatpush2.msra.mxu0 0.0
        %1609 = vmatprep.subr.mxu0 0.0
        %1610 = vmatpush2.msra.mxu0 0.0
        %1611 = vmatprep.subr.mxu0 0.0
        %1612 = vmatpush2.msra.mxu0 0.0
        %1613 = vmatprep.subr.mxu0 0.0
        %1614 = vmatpush2.msra.mxu0 0.0
        %1615 = vmatprep.subr.mxu0 0.0
        %1616 = vmatpush2.msra.mxu0 0.0
        %1617 = vmatprep.mubr.f32.mxu0 0.0
        %1618 = vmatmul.mubr.f32.gmra.mxu0 %v1551
        %v1619 = vpop.f32.mrf.mxu0
        %v1620 = vadd.f32 %v1547, %v1619
        %v1621 = vpop.f32.mrf.mxu0
        %1622 = vdwg.mxu0
        %v1623 = vld [vmem:[#allocation22] sm:$0x1]
        %v1625 = vlaneseq
        %v1626 = vshrl.u32 %v1625, 7
        %v1627 = vsub.s32 0, %v1626
        %v1628 = vrot.slane %v1623, %v1627
        %v1630 = vadd.f32 %v1620, %v1628
        %v1631 = vmul.f32 %v1630, 0.5
        %v1632 = vmul.f32 %v1630, 0.70710677
        %v1633 = verf.f32.pop %v1632
        %v1634 = vadd.f32 %v1633, 1.0
        %v1635 = vmul.f32 %v1631, %v1634
        %v1636 = vld [vmem:[#allocation23] sm:$0x1]
        %v1637 = vld [vmem:[#allocation25] sm:$0x1]
        %v1638 = vsel %vm958, %v1635, 0.0
        %1639 = vadd.xlane.f32.xlu0 %v1638
        %v1640 = vpop.xlane.xlu0 %1639
        %v1641 = vmul.f32 %v1640, %v1362
        %v1642 = vsub.f32 %v1635, %v1641
        %v1643 = vmul.f32 %v1642, %v1642
        %v1644 = vsel %vm958, %v1643, 0.0
        %1645 = vadd.xlane.f32.xlu0 %v1644
        %v1646 = vpop.xlane.xlu0 %1645
        %v1647 = vmul.f32 %v1646, %v1362
        %v1648 = vadd.f32 %v1647, 1e-05
        %v1649 = vrsqrt.pop %v1648
        %v1650 = vmul.f32 %v1642, %v1649
        %v1652 = vlaneseq
        %v1653 = vshrl.u32 %v1652, 7
        %v1654 = vsub.s32 0, %v1653
        %v1655 = vrot.slane %v1636, %v1654
        %v1657 = vmul.f32 %v1650, %v1655
        %v1659 = vlaneseq
        %v1660 = vshrl.u32 %v1659, 7
        %v1661 = vsub.s32 0, %v1660
        %v1662 = vrot.slane %v1637, %v1661
        %v1664 = vadd.f32 %v1657, %v1662
        %v1665 = vld [vmem:[%s17] sm:$0xff]
        %v1666 = vld [vmem:[%s17 + $0x8] sm:$0xff]
        %v1667 = vld [vmem:[%s17 + $0x10] sm:$0xff]
        %v1668 = vld [vmem:[%s17 + $0x18] sm:$0xff]
        %v1669 = vld [vmem:[#allocation26] sm:$0x1]
        %v1671 = vlaneseq
        %v1672 = vshrl.u32 %v1671, 7
        %v1673 = vsub.s32 0, %v1672
        %v1674 = vrot.slane %v1669, %v1673
        %v1677 = vsel %vm958, %v1664, 0
        %1679 = vmatprep.subr.mxu0 0.0
        %1680 = vmatpush1.msra.mxu0 0.0
        %1681 = vmatprep.subr.mxu0 0.0
        %1682 = vmatpush1.msra.mxu0 0.0
        %1683 = vmatprep.subr.mxu0 0.0
        %1684 = vmatpush1.msra.mxu0 0.0
        %1685 = vmatprep.subr.mxu0 0.0
        %1686 = vmatpush1.msra.mxu0 0.0
        %1687 = vmatprep.subr.mxu0 0.0
        %1688 = vmatpush1.msra.mxu0 0.0
        %1689 = vmatprep.subr.mxu0 0.0
        %1690 = vmatpush1.msra.mxu0 0.0
        %1691 = vmatprep.subr.mxu0 0.0
        %1692 = vmatpush1.msra.mxu0 0.0
        %1693 = vmatprep.subr.mxu0 0.0
        %1694 = vmatpush1.msra.mxu0 0.0
        %1695 = vmatprep.subr.mxu0 0.0
        %1696 = vmatpush1.msra.mxu0 0.0
        %1697 = vmatprep.subr.mxu0 0.0
        %1698 = vmatpush1.msra.mxu0 0.0
        %1699 = vmatprep.subr.mxu0 0.0
        %1700 = vmatpush1.msra.mxu0 0.0
        %1701 = vmatprep.subr.mxu0 0.0
        %1702 = vmatpush1.msra.mxu0 0.0
        %1703 = vmatprep.subr.mxu0 0.0
        %1704 = vmatpush1.msra.mxu0 %v1668
        %1705 = vmatprep.subr.mxu0 0.0
        %1706 = vmatpush1.msra.mxu0 %v1667
        %1707 = vmatprep.subr.mxu0 0.0
        %1708 = vmatpush1.msra.mxu0 %v1666
        %1709 = vmatprep.subr.mxu0 0.0
        %1710 = vmatpush1.msra.mxu0 %v1665
        %1711 = vmatprep.subr.mxu0 0.0
        %1712 = vmatpush2.msra.mxu0 0.0
        %1713 = vmatprep.subr.mxu0 0.0
        %1714 = vmatpush2.msra.mxu0 0.0
        %1715 = vmatprep.subr.mxu0 0.0
        %1716 = vmatpush2.msra.mxu0 0.0
        %1717 = vmatprep.subr.mxu0 0.0
        %1718 = vmatpush2.msra.mxu0 0.0
        %1719 = vmatprep.subr.mxu0 0.0
        %1720 = vmatpush2.msra.mxu0 0.0
        %1721 = vmatprep.subr.mxu0 0.0
        %1722 = vmatpush2.msra.mxu0 0.0
        %1723 = vmatprep.subr.mxu0 0.0
        %1724 = vmatpush2.msra.mxu0 0.0
        %1725 = vmatprep.subr.mxu0 0.0
        %1726 = vmatpush2.msra.mxu0 0.0
        %1727 = vmatprep.subr.mxu0 0.0
        %1728 = vmatpush2.msra.mxu0 0.0
        %1729 = vmatprep.subr.mxu0 0.0
        %1730 = vmatpush2.msra.mxu0 0.0
        %1731 = vmatprep.subr.mxu0 0.0
        %1732 = vmatpush2.msra.mxu0 0.0
        %1733 = vmatprep.subr.mxu0 0.0
        %1734 = vmatpush2.msra.mxu0 0.0
        %1735 = vmatprep.subr.mxu0 0.0
        %1736 = vmatpush2.msra.mxu0 0.0
        %1737 = vmatprep.subr.mxu0 0.0
        %1738 = vmatpush2.msra.mxu0 0.0
        %1739 = vmatprep.subr.mxu0 0.0
        %1740 = vmatpush2.msra.mxu0 0.0
        %1741 = vmatprep.subr.mxu0 0.0
        %1742 = vmatpush2.msra.mxu0 0.0
        %1743 = vmatprep.mubr.f32.mxu0 0.0
        %1744 = vmatmul.mubr.f32.gmra.mxu0 %v1677
        %v1745 = vpop.f32.mrf.mxu0
        %v1746 = vadd.f32 %v1674, %v1745
        %v1747 = vpop.f32.mrf.mxu0
        %1748 = vdwg.mxu0
        %v1749 = vmul.f32 %v1746, 0.5
        %v1750 = vmul.f32 %v1746, 0.70710677
        %v1751 = verf.f32.pop %v1750
        %v1752 = vadd.f32 %v1751, 1.0
        %v1753 = vmul.f32 %v1749, %v1752
        %v1754 = vld [vmem:[%s19] sm:$0x1]
        %v1755 = vld [vmem:[%s20] sm:$0x1]
        %v1756 = vsel %vm1397, %v1753, 0.0
        %1757 = vadd.xlane.f32.xlu0 %v1756
        %v1758 = vpop.xlane.xlu0 %1757
        %v1759 = vrcp.pop 16.0
        %v1760 = vmul.f32 %v1758, %v1759
        %v1761 = vsub.f32 %v1753, %v1760
        %v1762 = vmul.f32 %v1761, %v1761
        %v1763 = vsel %vm1397, %v1762, 0.0
        %1764 = vadd.xlane.f32.xlu0 %v1763
        %v1765 = vpop.xlane.xlu0 %1764
        %v1766 = vmul.f32 %v1765, %v1759
        %v1767 = vadd.f32 %v1766, 1e-05
        %v1768 = vrsqrt.pop %v1767
        %v1769 = vmul.f32 %v1761, %v1768
        %v1771 = vlaneseq
        %v1772 = vshrl.u32 %v1771, 7
        %v1773 = vsub.s32 0, %v1772
        %v1774 = vrot.slane %v1754, %v1773
        %v1776 = vmul.f32 %v1769, %v1774
        %v1778 = vlaneseq
        %v1779 = vshrl.u32 %v1778, 7
        %v1780 = vsub.s32 0, %v1779
        %v1781 = vrot.slane %v1755, %v1780
        %v1783 = vadd.f32 %v1776, %v1781
        %v1784 = vld [vmem:[%s21] sm:$0xff]
        %v1785 = vld [vmem:[%s21 + $0x8] sm:$0xff]
        %v1786 = vld [vmem:[%s22] sm:$0x1]
        %v1788 = vlaneseq
        %v1789 = vshrl.u32 %v1788, 7
        %v1790 = vsub.s32 0, %v1789
        %v1791 = vrot.slane %v1786, %v1790
        %v1794 = vsel %vm1397, %v1783, 0
        %1796 = vmatprep.subr.mxu0 0.0
        %1797 = vmatpush1.msra.mxu0 0.0
        %1798 = vmatprep.subr.mxu0 0.0
        %1799 = vmatpush1.msra.mxu0 0.0
        %1800 = vmatprep.subr.mxu0 0.0
        %1801 = vmatpush1.msra.mxu0 0.0
        %1802 = vmatprep.subr.mxu0 0.0
        %1803 = vmatpush1.msra.mxu0 0.0
        %1804 = vmatprep.subr.mxu0 0.0
        %1805 = vmatpush1.msra.mxu0 0.0
        %1806 = vmatprep.subr.mxu0 0.0
        %1807 = vmatpush1.msra.mxu0 0.0
        %1808 = vmatprep.subr.mxu0 0.0
        %1809 = vmatpush1.msra.mxu0 0.0
        %1810 = vmatprep.subr.mxu0 0.0
        %1811 = vmatpush1.msra.mxu0 0.0
        %1812 = vmatprep.subr.mxu0 0.0
        %1813 = vmatpush1.msra.mxu0 0.0
        %1814 = vmatprep.subr.mxu0 0.0
        %1815 = vmatpush1.msra.mxu0 0.0
        %1816 = vmatprep.subr.mxu0 0.0
        %1817 = vmatpush1.msra.mxu0 0.0
        %1818 = vmatprep.subr.mxu0 0.0
        %1819 = vmatpush1.msra.mxu0 0.0
        %1820 = vmatprep.subr.mxu0 0.0
        %1821 = vmatpush1.msra.mxu0 0.0
        %1822 = vmatprep.subr.mxu0 0.0
        %1823 = vmatpush1.msra.mxu0 0.0
        %1824 = vmatprep.subr.mxu0 0.0
        %1825 = vmatpush1.msra.mxu0 %v1785
        %1826 = vmatprep.subr.mxu0 0.0
        %1827 = vmatpush1.msra.mxu0 %v1784
        %1828 = vmatprep.subr.mxu0 0.0
        %1829 = vmatpush2.msra.mxu0 0.0
        %1830 = vmatprep.subr.mxu0 0.0
        %1831 = vmatpush2.msra.mxu0 0.0
        %1832 = vmatprep.subr.mxu0 0.0
        %1833 = vmatpush2.msra.mxu0 0.0
        %1834 = vmatprep.subr.mxu0 0.0
        %1835 = vmatpush2.msra.mxu0 0.0
        %1836 = vmatprep.subr.mxu0 0.0
        %1837 = vmatpush2.msra.mxu0 0.0
        %1838 = vmatprep.subr.mxu0 0.0
        %1839 = vmatpush2.msra.mxu0 0.0
        %1840 = vmatprep.subr.mxu0 0.0
        %1841 = vmatpush2.msra.mxu0 0.0
        %1842 = vmatprep.subr.mxu0 0.0
        %1843 = vmatpush2.msra.mxu0 0.0
        %1844 = vmatprep.subr.mxu0 0.0
        %1845 = vmatpush2.msra.mxu0 0.0
        %1846 = vmatprep.subr.mxu0 0.0
        %1847 = vmatpush2.msra.mxu0 0.0
        %1848 = vmatprep.subr.mxu0 0.0
        %1849 = vmatpush2.msra.mxu0 0.0
        %1850 = vmatprep.subr.mxu0 0.0
        %1851 = vmatpush2.msra.mxu0 0.0
        %1852 = vmatprep.subr.mxu0 0.0
        %1853 = vmatpush2.msra.mxu0 0.0
        %1854 = vmatprep.subr.mxu0 0.0
        %1855 = vmatpush2.msra.mxu0 0.0
        %1856 = vmatprep.subr.mxu0 0.0
        %1857 = vmatpush2.msra.mxu0 0.0
        %1858 = vmatprep.subr.mxu0 0.0
        %1859 = vmatpush2.msra.mxu0 0.0
        %1860 = vmatprep.mubr.f32.mxu0 0.0
        %1861 = vmatmul.mubr.f32.gmra.mxu0 %v1794
        %v1862 = vpop.f32.mrf.mxu0
        %v1863 = vadd.f32 %v1791, %v1862
        %v1864 = vpop.f32.mrf.mxu0
        %1865 = vdwg.mxu0
        %1866 = vst.msk [vmem:[%s945] sm:$0xff] %vm1397, %v1863
        %s1867 = sand.u32 %s551, 1
        %s1868 = scalar_lea.sflag [#allocation4], %s1867
        %s1869 = sand.u32 %s551, 1
        %s1870 = smul.addr %s1869, 8
        %s1871 = scalar_lea.vmem [#allocation28], %s1870
        // Predicated region
        $region177: #{tpu_custom_call.1} parent=111 // pred_check
          %p1872 = pneg %p561
        $region178: #{tpu_custom_call.1} parent=111 // pred_check_branch
          %1874 = sbr.rel (%p1872) target = $region180
        $region179: #{tpu_custom_call.1} parent=111 // pred_region
          %s1876 = ssub.s32 128, 128
          %1877 = vsyncadd %s1868, %s1876
          %s1878 = smul.addr %s50, 128
          %s1879 = scalar_lea.hbm %s23, %s1878
          %s1881 = sshll.u32 %s1871, 4
          %s1882 = int_to_ptr.vmem [resolvable:$true] %s1881
          %1884 = dma.vmem_to_hbm [thread:$0]  %s1882, 128, %s1879, %s1868
        $region180: #{tpu_custom_call.1} parent=111 // pred_fallthru
          _
      $region112: #{tpu_custom_call.1} parent=5 // pred_fallthru
        _
      %p1885 = scmp.le.s32.totalorder 2, %s45
      // Predicated region
      $region181: #{tpu_custom_call.1} parent=5 // pred_check
        %p1886 = pneg %p1885
      $region182: #{tpu_custom_call.1} parent=5 // pred_check_branch
        %1888 = sbr.rel (%p1886) target = $region184
      $region183: #{tpu_custom_call.1} parent=5 // pred_region
        %s1889 = ssub.s32 %s45, 2
        // Predicated region
        $region185: #{tpu_custom_call.1} parent=183 // pred_check
          %p1890 = pneg %p567
        $region186: #{tpu_custom_call.1} parent=183 // pred_check_branch
          %1892 = sbr.rel (%p1890) target = $region188
        $region187: #{tpu_custom_call.1} parent=183 // pred_region
          %s1893 = sand.u32 %s552, 1
          %s1894 = scalar_lea.sflag [#allocation4], %s1893
          %s1895 = sand.u32 %s552, 1
          %s1896 = smul.addr %s1895, 8
          %s1897 = scalar_lea.vmem [#allocation28], %s1896
          %1898 = dma.done %s1894, 128
        $region188: #{tpu_custom_call.1} parent=183 // pred_fallthru
          _
      $region184: #{tpu_custom_call.1} parent=5 // pred_fallthru
        _
    $region6: #{tpu_custom_call.1} parent=1 // loop_footer
      %s49 = sadd.s32 1, %s45
    $region7: #{tpu_custom_call.1} parent=1 // loop_footer_branch
      %44 = sbr.rel target = $region3
    $region8: #{tpu_custom_call.1} parent=1 // loop_exit
      _
    %1899 = vsyncpa [#allocation3], 1
    %s1900 = scalar_lea.sflag [#allocation3], 1
    %1901 = vsyncpa %s1900, 1
    %1902 = vsyncpa [#allocation6], 1
    %s1903 = scalar_lea.sflag [#allocation6], 1
    %1904 = vsyncpa %s1903, 1
    %1905 = vsyncpa [#allocation9], 1
    %1906 = vsyncpa [#allocation12], 1
    %1907 = vsyncpa [#allocation15], 1
    %1908 = vsyncpa [#allocation18], 1
    %1909 = vsyncpa [#allocation21], 1
    %1910 = vsyncpa [#allocation24], 1
    %1911 = vsyncpa [#allocation27], 1
    %1912 = vsyncpa [#allocation4], 1
    %s1913 = scalar_lea.sflag [#allocation4], 1
    %1914 = vsyncpa %s1913, 1

</llo_original>
